<compile_context>
chip_gen: v6e
topology: v6e:2x2x1
jax: 0.10.0
libtpu: 0.0.40
codegen_flags: <defaults>
</compile_context>

<pallas_src>
from collections import namedtuple
import math

import jax
import jax.numpy as jnp
from jax.experimental import pallas as pl
from jax.experimental.pallas import tpu as pltpu

decoder_output = namedtuple(
    'output', 'operations_logits, arguments_logits, operations_ids, arguments_ids')

NEG_FILL = -99999.0


def make_forward(cfg):
    op_list = list(cfg['op_list'])
    const_list = list(cfg['const_list'])
    max_op_len = int(cfg['max_op_len'])
    max_argu_len = int(cfg['max_argu_len'])
    eos_id = int(cfg['eos_id'])
    help_one_argu = bool(cfg['help_op_with_one_argu'])
    nb = int(cfg.get('num_batch_blocks', 1))   # >1: split batch across TensorCores (v7x)
    none_idx = const_list.index('none')
    floor_idx = op_list.index('floor')
    cache_base = const_list.index('#0')
    cache_end = const_list.index('#10')
    # '#k' cache slots must be contiguous for the in-kernel (cache_base + step) index math.
    for k in range(cache_end - cache_base + 1):
        assert const_list.index('#' + str(k)) == cache_base + k
    assert max_op_len <= cache_end - cache_base + 1
    assert max_argu_len >= 1

    @jax.jit
    def forward(params, input_mask, input_question_mask, input_number_mask, encoder_outputs):
        f32 = jnp.float32
        B, S, H = encoder_outputs.shape
        OP_LEN = params['op_emb'].shape[0]
        CONST_LEN = params['const_emb'].shape[0]
        NARG = CONST_LEN + S
        LA = max_argu_len
        assert B % nb == 0
        BB = B // nb
        assert nb == 1 or BB % 8 == 0, "batch blocks must satisfy the (8,128) tiling floor"

        enc = encoder_outputs.astype(f32)

        # ------------- hoisted, loop-invariant work (plain XLA, full MXU tiles) -------------
        number_mask = jnp.concatenate(
            [jnp.ones((B, CONST_LEN), f32), input_number_mask.astype(f32)], axis=1)
        q_addmask = (input_question_mask.astype(f32) - 1.0) * (-NEG_FILL)   # 0 / -99999
        i_addmask = (input_mask.astype(f32) - 1.0) * (-NEG_FILL)
        kp_op = jnp.einsum('bsh,hk->bsk', enc, params['op_attn_wk_t'])
        vp_op = jnp.einsum('bsh,hk->bsk', enc, params['op_attn_wv_t'])
        kp_num = jnp.einsum('bsh,hk->bsk', enc, params['num_attn_wk_t'])
        vp_num = jnp.einsum('bsh,hk->bsk', enc, params['num_attn_wv_t'])
        op_emb_t = params['op_emb'].T                      # single source of truth

        # fused GRU weights: [x|h] (B,2H) @ (2H,4H) -> [rz fused | input-n | hidden-n]
        def pack_gru(wi, wh, bi, bh):
            z = jnp.zeros((H, H), f32)
            w = jnp.concatenate([
                jnp.concatenate([wi[:, :2 * H], wi[:, 2 * H:], z], axis=1),
                jnp.concatenate([wh[:, :2 * H], z, wh[:, 2 * H:]], axis=1)], axis=0)
            b = jnp.concatenate(
                [bi[:, :2 * H] + bh[:, :2 * H], bi[:, 2 * H:], bh[:, 2 * H:]], axis=1)
            return w, b

        gop_w, gop_b = pack_gru(params['gru_op_wi'], params['gru_op_wh'],
                                params['gru_op_bi'], params['gru_op_bh'])
        gar_w, gar_b = pack_gru(params['gru_argu_wi'], params['gru_argu_wh'],
                                params['gru_argu_bi'], params['gru_argu_bh'])

        # block-diagonal packing of pred_op_emb_to_num / op_to_num:
        # [prev_op | o_op_1] @ diag(Wp2n, Wo2n) = [p2n(prev_op) | o2n(o_op_1)]
        zH = jnp.zeros((H, H), f32)
        init_w = jnp.concatenate([
            jnp.concatenate([params['pred_op_emb_to_num_wt'], zH], axis=1),
            jnp.concatenate([zH, params['op_to_num_wt']], axis=1)], axis=0)
        init_b = jnp.concatenate(
            [params['pred_op_emb_to_num_b'], params['op_to_num_b']], axis=1)

        # ---------------------------- the fused decode kernel ----------------------------
        def decode_kernel(
                enc_ref, qmask_ref, imask_ref, nmask_ref,
                kp_op_ref, vp_op_ref, kp_num_ref, vp_num_ref,
                const_emb_ref, go_ref, op_emb_ref, op_emb_t_ref,
                op_wq_ref, num_wq_ref,
                opc_w_ref, opc_b_ref, opc_g_ref, opc_bb_ref,
                gop_w_ref, gop_b_ref,
                opo_w_ref, opo_b_ref,
                init_w_ref, init_b_ref,
                oec_w_ref, oec_b_ref, oec_g_ref, oec_bb_ref,
                numc_w_ref, numc_b_ref, numc_g_ref, numc_bb_ref,
                gar_w_ref, gar_b_ref,
                npo_w_ref, npo_b_ref,
                # outputs (one block per (batch block, op step))
                op_logits_ref, argu_logits_ref,
                # scratch carried across grid steps
                op_h_ref, argu_h_ref, prev_op_ref, argu_emb_ref):
            step = pl.program_id(1)

            @pl.when(step == 0)
            def _init():
                op_h_ref[...] = jnp.zeros_like(op_h_ref)
                argu_h_ref[...] = jnp.zeros_like(argu_h_ref)
                prev_op_ref[...] = jnp.broadcast_to(go_ref[...], (BB, H))
                ce = jnp.broadcast_to(const_emb_ref[...][None, :, :], (BB, CONST_LEN, H))
                argu_emb_ref[...] = jnp.concatenate([ce, enc_ref[...]], axis=1)

            def _linear(x, w_ref, b_ref, relu):
                y = jnp.dot(x, w_ref[...], preferred_element_type=f32) + b_ref[...]
                return jnp.maximum(y, 0.0) if relu else y

            def _linear_ln(x, w_ref, b_ref, g_ref, bb_ref, relu):
                # Linear -> LayerNorm([1,H]) (== LN over hidden dim) -> optional ReLU
                y = jnp.dot(x, w_ref[...], preferred_element_type=f32) + b_ref[...]
                mu = jnp.mean(y, axis=-1, keepdims=True)
                var = jnp.mean(jnp.square(y - mu), axis=-1, keepdims=True)
                y = (y - mu) * jax.lax.rsqrt(var + 1e-5)
                y = y * g_ref[...] + bb_ref[...]
                return jnp.maximum(y, 0.0) if relu else y

            def _gru(x, h, w_ref, b_ref):
                # single (BB,2H)@(2H,4H) matmul: [r|z fused, input-n, hidden-n]
                g = jnp.dot(jnp.concatenate([x, h], axis=-1), w_ref[...],
                            preferred_element_type=f32) + b_ref[...]
                r = jax.nn.sigmoid(g[:, 0:H])
                z = jax.nn.sigmoid(g[:, H:2 * H])
                n = jnp.tanh(g[:, 2 * H:3 * H] + r * g[:, 3 * H:4 * H])
                return (1.0 - z) * n + z * h

            def _attention(q, wq_ref, kp, vp, addmask):
                # q=1 attention: VPU multiply + XLU reductions (no M=1 MXU micro-matmuls)
                qp = jnp.dot(q, wq_ref[...], preferred_element_type=f32)        # (BB,H)
                score = jnp.sum(qp[:, None, :] * kp, axis=-1) + addmask         # (BB,S)
                score = score - jnp.max(score, axis=-1, keepdims=True)
                e = jnp.exp(score)
                attn = e * pl.reciprocal(jnp.sum(e, axis=-1, keepdims=True), approx=True)
                return jnp.sum(attn[:, :, None] * vp, axis=1)                   # (BB,H)

            def _argmax_first(x):
                # first-occurrence argmax over the last dim (matches torch.argmax)
                n = x.shape[-1]
                ids = jax.lax.broadcasted_iota(jnp.int32, x.shape, 1)
                m = jnp.max(x, axis=-1, keepdims=True)
                return jnp.min(jnp.where(x == m, ids, n), axis=-1, keepdims=True)

            prev_op = prev_op_ref[...]
            argu_emb = argu_emb_ref[...]

            # ------------------------------ operator head ------------------------------
            ctx = _attention(prev_op, op_wq_ref, kp_op_ref[...], vp_op_ref[...], qmask_ref[...])
            op_c = _linear_ln(jnp.concatenate([prev_op, ctx], axis=-1),
                              opc_w_ref, opc_b_ref, opc_g_ref, opc_bb_ref, relu=True)
            o_op_1 = _gru(op_c, op_h_ref[...], gop_w_ref, gop_b_ref)
            op_h_ref[...] = o_op_1
            o_op_out = _linear(o_op_1, opo_w_ref, opo_b_ref, relu=True)
            op_logits = jnp.dot(o_op_out, op_emb_t_ref[...], preferred_element_type=f32)
            op_logits_ref[...] = op_logits                                       # (BB, OP_LEN)

            pred_op_ids = _argmax_first(op_logits)                               # (BB,1) int32
            col_op = jax.lax.broadcasted_iota(jnp.int32, (BB, OP_LEN), 1)
            prev_op_new = jnp.dot((col_op == pred_op_ids).astype(f32), op_emb_ref[...],
                                  preferred_element_type=f32)                    # (BB,H)
            prev_op_ref[...] = prev_op_new

            # ------------------------------ argument head ------------------------------
            y_init = _linear(jnp.concatenate([prev_op_new, o_op_1], axis=-1),
                             init_w_ref, init_b_ref, relu=True)                  # (BB,2H)
            input_argu = _linear_ln(y_init, oec_w_ref, oec_b_ref, oec_g_ref, oec_bb_ref,
                                    relu=False)

            col_arg = jax.lax.broadcasted_iota(jnp.int32, (BB, NARG), 1)
            in_cache = (col_arg >= cache_base + step) & (col_arg <= cache_end)
            base_mask = jnp.where(in_cache, 0.0, nmask_ref[...])
            mask_none_only = (col_arg == none_idx).astype(f32)
            one_argu = (pred_op_ids >= floor_idx) & (pred_op_ids != eos_id)      # (BB,1)

            argu_h = argu_h_ref[...]
            out_num = None
            imask_add = imask_ref[...]
            # TODO(synk): switch to lax.fori_loop(..., unroll=True) carrying (input_argu, argu_h)
            #             once max_argu_len grows beyond ~4 (bounds vreg live ranges).
            for num_step in range(LA):
                nctx = _attention(input_argu, num_wq_ref, kp_num_ref[...], vp_num_ref[...],
                                  imask_add)
                num_c = _linear_ln(jnp.concatenate([input_argu, nctx], axis=-1),
                                   numc_w_ref, numc_b_ref, numc_g_ref, numc_bb_ref, relu=True)
                argu_h = _gru(num_c, argu_h, gar_w_ref, gar_b_ref)
                out_num = argu_h
                num_pred = _linear(out_num, npo_w_ref, npo_b_ref, relu=True)
                logits = jnp.sum(num_pred[:, None, :] * argu_emb, axis=-1)       # (BB, NARG)
                this_mask = base_mask
                if help_one_argu and num_step == 1:
                    this_mask = jnp.where(one_argu, mask_none_only, base_mask)
                logits = jnp.where((1.0 - this_mask) != 0.0, NEG_FILL, logits)
                argu_logits_ref[num_step, :, :] = logits                         # per-iter store
                pred_argu_ids = _argmax_first(logits)                            # (BB,1)
                onehot = (col_arg == pred_argu_ids).astype(f32)                  # (BB,NARG)
                input_argu = jnp.sum(onehot[:, :, None] * argu_emb, axis=1)      # (BB,H)

            argu_h_ref[...] = argu_h

            # write out_num into the '#op_step' cache slot: a single-row static-slice store,
            # selected with pl.when (avoids a full argument_embed select + rewrite).
            def _cache_write(t):
                @pl.when(step == t)
                def _():
                    argu_emb_ref[:, cache_base + t:cache_base + t + 1, :] = out_num[:, None, :]

            for t in range(max_op_len):
                _cache_write(t)

        # ------------------------------ pallas_call plumbing ------------------------------
        inputs = (
            enc, q_addmask, i_addmask, number_mask,
            kp_op, vp_op, kp_num, vp_num,
            params['const_emb'], params['go_emb'], params['op_emb'], op_emb_t,
            params['op_attn_wq_t'], params['num_attn_wq_t'],
            params['op_c_combine_wt'], params['op_c_combine_b'],
            params['op_c_ln_g'], params['op_c_ln_b'],
            gop_w, gop_b,
            params['op_pred_output_wt'], params['op_pred_output_b'],
            init_w, init_b,
            params['op_and_emb_comb_wt'], params['op_and_emb_comb_b'],
            params['op_and_emb_ln_g'], params['op_and_emb_ln_b'],
            params['num_c_combine_wt'], params['num_c_combine_b'],
            params['num_c_ln_g'], params['num_c_ln_b'],
            gar_w, gar_b,
            params['num_pred_output_wt'], params['num_pred_output_b'],
        )

        def const_spec(arr):
            nd = arr.ndim
            return pl.BlockSpec(arr.shape, lambda b, i: (0,) * nd)

        bsh_spec = pl.BlockSpec((BB, S, H), lambda b, i: (b, 0, 0))
        bs_spec = pl.BlockSpec((BB, S), lambda b, i: (b, 0))
        bn_spec = pl.BlockSpec((BB, NARG), lambda b, i: (b, 0))

        in_specs = ([bsh_spec, bs_spec, bs_spec, bn_spec,
                     bsh_spec, bsh_spec, bsh_spec, bsh_spec]
                    + [const_spec(x) for x in inputs[8:]])

        out_shapes = (
            jax.ShapeDtypeStruct((max_op_len, B, OP_LEN), f32),
            jax.ShapeDtypeStruct((max_op_len, LA, B, NARG), f32),
        )
        out_specs = [
            pl.BlockSpec((None, BB, OP_LEN), lambda b, i: (i, b, 0)),
            pl.BlockSpec((None, LA, BB, NARG), lambda b, i: (i, 0, b, 0)),
        ]
        scratch = [
            pltpu.VMEM((BB, H), f32),          # op_h
            pltpu.VMEM((BB, H), f32),          # argu_h
            pltpu.VMEM((BB, H), f32),          # prev_op_embed
            pltpu.VMEM((BB, NARG, H), f32),    # argument_embed (with '#k' cache slots)
        ]

        # VMEM budget: double-buffered inputs / output blocks + scratch + slack.
        in_bytes = sum(math.prod(x.shape) * x.dtype.itemsize for x in inputs)
        out_block_bytes = 4 * (BB * OP_LEN + LA * BB * NARG)
        scratch_bytes = 4 * (3 * BB * H + BB * NARG * H)
        vmem_limit = int(min(100 << 20,
                             max(32 << 20,
                                 2 * (in_bytes + out_block_bytes) + scratch_bytes + (4 << 20))))

        op_logits, argu_logits = pl.pallas_call(
            decode_kernel,
            out_shape=out_shapes,
            grid_spec=pltpu.PrefetchScalarGridSpec(
                num_scalar_prefetch=0,
                grid=(nb, max_op_len),
                in_specs=in_specs,
                out_specs=out_specs,
                scratch_shapes=scratch),
            compiler_params=pltpu.CompilerParams(
                dimension_semantics=("parallel", "arbitrary"),
                vmem_limit_bytes=vmem_limit),
        )(*inputs)

        # ids recomputed outside the kernel from the identical logits (kernel outputs stay
        # lane-dense; jnp.argmax has the same first-occurrence tie-breaking as the in-kernel
        # argmax that drives the recurrence, on the same f32 values).
        op_ids = jnp.argmax(op_logits, axis=-1).astype(jnp.int32)        # (Lo, B)
        argu_ids = jnp.argmax(argu_logits, axis=-1).astype(jnp.int32)    # (Lo, LA, B)

        return decoder_output(
            operations_logits=jnp.transpose(op_logits, (1, 0, 2)),       # (B, Lo, op_len)
            arguments_logits=jnp.transpose(argu_logits, (2, 0, 1, 3)),   # (B, Lo, La, Narg)
            operations_ids=jnp.transpose(op_ids, (1, 0)),                # (B, Lo)
            arguments_ids=jnp.transpose(argu_ids, (2, 0, 1)),            # (B, Lo, La)
        )

    return forward


# ----------------------------------- parameters -----------------------------------

def init_params(key, H, op_len, const_len):
    ks = iter(jax.random.split(key, 64))

    def nrm(shape, scale=0.1):
        return (scale * jax.random.normal(next(ks), shape)).astype(jnp.float32)

    p = {}
    p['op_emb'] = nrm((op_len, H), 1.0)
    p['const_emb'] = nrm((const_len, H), 1.0)
    p['go_emb'] = nrm((1, H), 1.0)
    for name in ('op_attn', 'num_attn'):
        for w in ('wq_t', 'wk_t', 'wv_t'):
            p[f'{name}_{w}'] = nrm((H, H))
    for name in ('gru_op', 'gru_argu'):
        # GRU gate weights (r|z|n), pre-transposed: (H, 3H), biases (1, 3H)
        p[f'{name}_wi'] = nrm((H, 3 * H))
        p[f'{name}_wh'] = nrm((H, 3 * H))
        p[f'{name}_bi'] = nrm((1, 3 * H))
        p[f'{name}_bh'] = nrm((1, 3 * H))

    def lin(name, fin):
        p[f'{name}_wt'] = nrm((fin, H))
        p[f'{name}_b'] = nrm((1, H))

    lin('op_c_combine', 2 * H)
    lin('num_c_combine', 2 * H)
    lin('op_pred_output', H)
    lin('num_pred_output', H)
    lin('op_to_num', H)
    lin('pred_op_emb_to_num', H)
    lin('op_and_emb_comb', 2 * H)
    for name in ('op_c_ln', 'num_c_ln', 'op_and_emb_ln'):
        p[f'{name}_g'] = jnp.ones((1, H), jnp.float32)
        p[f'{name}_b'] = jnp.zeros((1, H), jnp.float32)
    return p


# -------------------------------------- main ---------------------------------------

if __name__ == "__main__":
    B, S, H = 2, 8, 32
    op_list = ['EOS', 'add', 'subtract', 'multiply', 'divide', 'floor', 'exp']
    const_list = ['none', 'const_1', 'const_2'] + ['#' + str(i) for i in range(11)]
    cfg = dict(op_list=op_list, const_list=const_list, eos_id=0,
               help_op_with_one_argu=True, max_op_len=3, max_argu_len=2)

    key = jax.random.PRNGKey(0)
    k_enc, k_params = jax.random.split(key)
    encoder_outputs = jax.random.normal(k_enc, (B, S, H), dtype=jnp.float32)
    input_mask = jnp.ones((B, S), jnp.float32).at[1, 6:].set(0.0)
    input_question_mask = jnp.ones((B, S), jnp.float32).at[1, 5:].set(0.0)
    input_number_mask = jnp.zeros((B, S), jnp.float32).at[:, :4].set(1.0)

    params = init_params(k_params, H, len(op_list), len(const_list))

    forward = make_forward(cfg)
    out = forward(params, input_mask, input_question_mask, input_number_mask, encoder_outputs)
    jax.block_until_ready(out)

    assert out.operations_logits.shape == (B, cfg['max_op_len'], len(op_list))
    assert out.arguments_logits.shape == (B, cfg['max_op_len'], cfg['max_argu_len'],
                                          len(const_list) + S)
    assert out.operations_ids.shape == (B, cfg['max_op_len'])
    assert out.arguments_ids.shape == (B, cfg['max_op_len'], cfg['max_argu_len'])
    print("KERNEL_OK")
</pallas_src>

<mosaic_0001>
module attributes {stable_mosaic.version = 11 : i64} {
  func.func @decode_kernel(%arg0: i32, %arg1: i32, %arg2: memref<2x8x32xf32, #tpu.memory_space<vmem>>, %arg3: memref<2x8xf32, #tpu.memory_space<vmem>>, %arg4: memref<2x8xf32, #tpu.memory_space<vmem>>, %arg5: memref<2x22xf32, #tpu.memory_space<vmem>>, %arg6: memref<2x8x32xf32, #tpu.memory_space<vmem>>, %arg7: memref<2x8x32xf32, #tpu.memory_space<vmem>>, %arg8: memref<2x8x32xf32, #tpu.memory_space<vmem>>, %arg9: memref<2x8x32xf32, #tpu.memory_space<vmem>>, %arg10: memref<14x32xf32, #tpu.memory_space<vmem>>, %arg11: memref<1x32xf32, #tpu.memory_space<vmem>>, %arg12: memref<7x32xf32, #tpu.memory_space<vmem>>, %arg13: memref<32x7xf32, #tpu.memory_space<vmem>>, %arg14: memref<32x32xf32, #tpu.memory_space<vmem>>, %arg15: memref<32x32xf32, #tpu.memory_space<vmem>>, %arg16: memref<64x32xf32, #tpu.memory_space<vmem>>, %arg17: memref<1x32xf32, #tpu.memory_space<vmem>>, %arg18: memref<1x32xf32, #tpu.memory_space<vmem>>, %arg19: memref<1x32xf32, #tpu.memory_space<vmem>>, %arg20: memref<64x128xf32, #tpu.memory_space<vmem>>, %arg21: memref<1x128xf32, #tpu.memory_space<vmem>>, %arg22: memref<32x32xf32, #tpu.memory_space<vmem>>, %arg23: memref<1x32xf32, #tpu.memory_space<vmem>>, %arg24: memref<64x64xf32, #tpu.memory_space<vmem>>, %arg25: memref<1x64xf32, #tpu.memory_space<vmem>>, %arg26: memref<64x32xf32, #tpu.memory_space<vmem>>, %arg27: memref<1x32xf32, #tpu.memory_space<vmem>>, %arg28: memref<1x32xf32, #tpu.memory_space<vmem>>, %arg29: memref<1x32xf32, #tpu.memory_space<vmem>>, %arg30: memref<64x32xf32, #tpu.memory_space<vmem>>, %arg31: memref<1x32xf32, #tpu.memory_space<vmem>>, %arg32: memref<1x32xf32, #tpu.memory_space<vmem>>, %arg33: memref<1x32xf32, #tpu.memory_space<vmem>>, %arg34: memref<64x128xf32, #tpu.memory_space<vmem>>, %arg35: memref<1x128xf32, #tpu.memory_space<vmem>>, %arg36: memref<32x32xf32, #tpu.memory_space<vmem>>, %arg37: memref<1x32xf32, #tpu.memory_space<vmem>>, %arg38: memref<1x2x7xf32, #tpu.memory_space<vmem>>, %arg39: memref<1x2x2x22xf32, #tpu.memory_space<vmem>>, %arg40: memref<2x32xf32, #tpu.memory_space<vmem>>, %arg41: memref<2x32xf32, #tpu.memory_space<vmem>>, %arg42: memref<2x32xf32, #tpu.memory_space<vmem>>, %arg43: memref<2x22x32xf32, #tpu.memory_space<vmem>>) attributes {dimension_semantics = [#tpu.dimension_semantics<parallel>, #tpu.dimension_semantics<arbitrary>], iteration_bounds = array<i64: 1, 3>, scalar_prefetch = 0 : i64, scratch_operands = 4 : i64, tpu.core_type = #tpu.core_type<tc>, window_params = [{transform_indices = @transform_0, window_bounds = array<i64: 2, 8, 32>}, {transform_indices = @transform_1, window_bounds = array<i64: 2, 8>}, {transform_indices = @transform_2, window_bounds = array<i64: 2, 8>}, {transform_indices = @transform_3, window_bounds = array<i64: 2, 22>}, {transform_indices = @transform_4, window_bounds = array<i64: 2, 8, 32>}, {transform_indices = @transform_5, window_bounds = array<i64: 2, 8, 32>}, {transform_indices = @transform_6, window_bounds = array<i64: 2, 8, 32>}, {transform_indices = @transform_7, window_bounds = array<i64: 2, 8, 32>}, {pipeline_mode = #tpu.pipeline_mode<synchronous>, transform_indices = @transform_8, window_bounds = array<i64: 14, 32>}, {pipeline_mode = #tpu.pipeline_mode<synchronous>, transform_indices = @transform_9, window_bounds = array<i64: 1, 32>}, {pipeline_mode = #tpu.pipeline_mode<synchronous>, transform_indices = @transform_10, window_bounds = array<i64: 7, 32>}, {pipeline_mode = #tpu.pipeline_mode<synchronous>, transform_indices = @transform_11, window_bounds = array<i64: 32, 7>}, {pipeline_mode = #tpu.pipeline_mode<synchronous>, transform_indices = @transform_12, window_bounds = array<i64: 32, 32>}, {pipeline_mode = #tpu.pipeline_mode<synchronous>, transform_indices = @transform_13, window_bounds = array<i64: 32, 32>}, {pipeline_mode = #tpu.pipeline_mode<synchronous>, transform_indices = @transform_14, window_bounds = array<i64: 64, 32>}, {pipeline_mode = #tpu.pipeline_mode<synchronous>, transform_indices = @transform_15, window_bounds = array<i64: 1, 32>}, {pipeline_mode = #tpu.pipeline_mode<synchronous>, transform_indices = @transform_16, window_bounds = array<i64: 1, 32>}, {pipeline_mode = #tpu.pipeline_mode<synchronous>, transform_indices = @transform_17, window_bounds = array<i64: 1, 32>}, {pipeline_mode = #tpu.pipeline_mode<synchronous>, transform_indices = @transform_18, window_bounds = array<i64: 64, 128>}, {pipeline_mode = #tpu.pipeline_mode<synchronous>, transform_indices = @transform_19, window_bounds = array<i64: 1, 128>}, {pipeline_mode = #tpu.pipeline_mode<synchronous>, transform_indices = @transform_20, window_bounds = array<i64: 32, 32>}, {pipeline_mode = #tpu.pipeline_mode<synchronous>, transform_indices = @transform_21, window_bounds = array<i64: 1, 32>}, {pipeline_mode = #tpu.pipeline_mode<synchronous>, transform_indices = @transform_22, window_bounds = array<i64: 64, 64>}, {pipeline_mode = #tpu.pipeline_mode<synchronous>, transform_indices = @transform_23, window_bounds = array<i64: 1, 64>}, {pipeline_mode = #tpu.pipeline_mode<synchronous>, transform_indices = @transform_24, window_bounds = array<i64: 64, 32>}, {pipeline_mode = #tpu.pipeline_mode<synchronous>, transform_indices = @transform_25, window_bounds = array<i64: 1, 32>}, {pipeline_mode = #tpu.pipeline_mode<synchronous>, transform_indices = @transform_26, window_bounds = array<i64: 1, 32>}, {pipeline_mode = #tpu.pipeline_mode<synchronous>, transform_indices = @transform_27, window_bounds = array<i64: 1, 32>}, {pipeline_mode = #tpu.pipeline_mode<synchronous>, transform_indices = @transform_28, window_bounds = array<i64: 64, 32>}, {pipeline_mode = #tpu.pipeline_mode<synchronous>, transform_indices = @transform_29, window_bounds = array<i64: 1, 32>}, {pipeline_mode = #tpu.pipeline_mode<synchronous>, transform_indices = @transform_30, window_bounds = array<i64: 1, 32>}, {pipeline_mode = #tpu.pipeline_mode<synchronous>, transform_indices = @transform_31, window_bounds = array<i64: 1, 32>}, {pipeline_mode = #tpu.pipeline_mode<synchronous>, transform_indices = @transform_32, window_bounds = array<i64: 64, 128>}, {pipeline_mode = #tpu.pipeline_mode<synchronous>, transform_indices = @transform_33, window_bounds = array<i64: 1, 128>}, {pipeline_mode = #tpu.pipeline_mode<synchronous>, transform_indices = @transform_34, window_bounds = array<i64: 32, 32>}, {pipeline_mode = #tpu.pipeline_mode<synchronous>, transform_indices = @transform_35, window_bounds = array<i64: 1, 32>}, {transform_indices = @transform_36, window_bounds = array<i64: 1, 2, 7>}, {transform_indices = @transform_37, window_bounds = array<i64: 1, 2, 2, 22>}]} {
    %c0_i32 = arith.constant 0 : i32
    %0 = arith.cmpi eq, %arg1, %c0_i32 : i32
    %1 = arith.extui %0 : i1 to i32
    %c0_i32_0 = arith.constant 0 : i32
    %2 = arith.cmpi ne, %1, %c0_i32_0 : i32
    scf.if %2 {
      %cst_202 = arith.constant 0.000000e+00 : f32
      %414 = vector.broadcast %cst_202 : f32 to vector<2x32xf32>
      %c0_203 = arith.constant 0 : index
      %c0_204 = arith.constant 0 : index
      %415 = vector.load %arg40[%c0_203, %c0_204] : memref<2x32xf32, #tpu.memory_space<vmem>>, vector<2x32xf32>
      tpu.vector_store %arg40[%c0_203, %c0_204], %414 {strides = array<i32>} : memref<2x32xf32, #tpu.memory_space<vmem>>, vector<2x32xf32>,
      %cst_205 = arith.constant 0.000000e+00 : f32
      %416 = vector.broadcast %cst_205 : f32 to vector<2x32xf32>
      %c0_206 = arith.constant 0 : index
      %c0_207 = arith.constant 0 : index
      %417 = vector.load %arg41[%c0_206, %c0_207] : memref<2x32xf32, #tpu.memory_space<vmem>>, vector<2x32xf32>
      tpu.vector_store %arg41[%c0_206, %c0_207], %416 {strides = array<i32>} : memref<2x32xf32, #tpu.memory_space<vmem>>, vector<2x32xf32>,
      %c0_208 = arith.constant 0 : index
      %c0_209 = arith.constant 0 : index
      %418 = vector.load %arg11[%c0_208, %c0_209] : memref<1x32xf32, #tpu.memory_space<vmem>>, vector<1x32xf32>
      %419 = vector.shape_cast %418 : vector<1x32xf32> to vector<1x32xf32>
      %420 = vector.broadcast %419 : vector<1x32xf32> to vector<2x32xf32>
      %c0_210 = arith.constant 0 : index
      %c0_211 = arith.constant 0 : index
      %421 = vector.load %arg42[%c0_210, %c0_211] : memref<2x32xf32, #tpu.memory_space<vmem>>, vector<2x32xf32>
      tpu.vector_store %arg42[%c0_210, %c0_211], %420 {strides = array<i32>} : memref<2x32xf32, #tpu.memory_space<vmem>>, vector<2x32xf32>,
      %c0_212 = arith.constant 0 : index
      %c0_213 = arith.constant 0 : index
      %422 = vector.load %arg10[%c0_212, %c0_213] : memref<14x32xf32, #tpu.memory_space<vmem>>, vector<14x32xf32>
      %423 = vector.shape_cast %422 : vector<14x32xf32> to vector<1x14x32xf32>
      %424 = vector.shape_cast %423 : vector<1x14x32xf32> to vector<1x14x32xf32>
      %425 = vector.broadcast %424 : vector<1x14x32xf32> to vector<2x14x32xf32>
      %c0_214 = arith.constant 0 : index
      %c0_215 = arith.constant 0 : index
      %c0_216 = arith.constant 0 : index
      %426 = vector.load %arg2[%c0_214, %c0_215, %c0_216] : memref<2x8x32xf32, #tpu.memory_space<vmem>>, vector<2x8x32xf32>
      %427 = tpu.concatenate %425, %426 in 1 : vector<2x14x32xf32>, vector<2x8x32xf32> -> vector<2x22x32xf32>
      %c0_217 = arith.constant 0 : index
      %c0_218 = arith.constant 0 : index
      %c0_219 = arith.constant 0 : index
      %428 = vector.load %arg43[%c0_217, %c0_218, %c0_219] : memref<2x22x32xf32, #tpu.memory_space<vmem>>, vector<2x22x32xf32>
      tpu.vector_store %arg43[%c0_217, %c0_218, %c0_219], %427 {strides = array<i32>} : memref<2x22x32xf32, #tpu.memory_space<vmem>>, vector<2x22x32xf32>,
    } else {
    }
    %c0 = arith.constant 0 : index
    %c0_1 = arith.constant 0 : index
    %3 = vector.load %arg42[%c0, %c0_1] : memref<2x32xf32, #tpu.memory_space<vmem>>, vector<2x32xf32>
    %c0_2 = arith.constant 0 : index
    %c0_3 = arith.constant 0 : index
    %c0_4 = arith.constant 0 : index
    %4 = vector.load %arg43[%c0_2, %c0_3, %c0_4] : memref<2x22x32xf32, #tpu.memory_space<vmem>>, vector<2x22x32xf32>
    %c0_5 = arith.constant 0 : index
    %c0_6 = arith.constant 0 : index
    %c0_7 = arith.constant 0 : index
    %5 = vector.load %arg6[%c0_5, %c0_6, %c0_7] : memref<2x8x32xf32, #tpu.memory_space<vmem>>, vector<2x8x32xf32>
    %c0_8 = arith.constant 0 : index
    %c0_9 = arith.constant 0 : index
    %c0_10 = arith.constant 0 : index
    %6 = vector.load %arg7[%c0_8, %c0_9, %c0_10] : memref<2x8x32xf32, #tpu.memory_space<vmem>>, vector<2x8x32xf32>
    %c0_11 = arith.constant 0 : index
    %c0_12 = arith.constant 0 : index
    %7 = vector.load %arg3[%c0_11, %c0_12] : memref<2x8xf32, #tpu.memory_space<vmem>>, vector<2x8xf32>
    %c0_13 = arith.constant 0 : index
    %c0_14 = arith.constant 0 : index
    %8 = vector.load %arg14[%c0_13, %c0_14] : memref<32x32xf32, #tpu.memory_space<vmem>>, vector<32x32xf32>
    %cst = arith.constant dense<0.000000e+00> : vector<2x32xf32>
    %9 = tpu.matmul %3, %8, %cst {dimension_numbers = #tpu.dot_dimension_numbers<[1], [0], [0], [1], [0, 0, 1, 1], [], []>} : vector<2x32xf32>, vector<32x32xf32>, vector<2x32xf32> -> vector<2x32xf32>
    %10 = vector.shape_cast %9 : vector<2x32xf32> to vector<2x1x32xf32>
    %11 = vector.broadcast %10 : vector<2x1x32xf32> to vector<2x8x32xf32>
    %12 = arith.mulf %11, %5 : vector<2x8x32xf32>
    %cst_15 = arith.constant dense<0.000000e+00> : vector<2x8xf32>
    %13 = vector.multi_reduction <add>, %12, %cst_15 [2] : vector<2x8x32xf32> to vector<2x8xf32>
    %14 = arith.addf %13, %7 : vector<2x8xf32>
    %cst_16 = arith.constant dense<0xFF800000> : vector<2xf32>
    %15 = vector.multi_reduction <maximumf>, %14, %cst_16 [1] : vector<2x8xf32> to vector<2xf32>
    %16 = vector.shape_cast %15 : vector<2xf32> to vector<2x1xf32>
    %17 = vector.broadcast %16 : vector<2x1xf32> to vector<2x8xf32>
    %18 = arith.subf %14, %17 : vector<2x8xf32>
    %19 = math.exp %18 : vector<2x8xf32>
    %cst_17 = arith.constant dense<0.000000e+00> : vector<2xf32>
    %20 = vector.multi_reduction <add>, %19, %cst_17 [1] : vector<2x8xf32> to vector<2xf32>
    %21 = vector.shape_cast %20 : vector<2xf32> to vector<2x1xf32>
    %22 = tpu.reciprocal %21 {approx = true} : vector<2x1xf32> -> vector<2x1xf32>
    %23 = vector.broadcast %22 : vector<2x1xf32> to vector<2x8xf32>
    %24 = arith.mulf %19, %23 : vector<2x8xf32>
    %25 = vector.shape_cast %24 : vector<2x8xf32> to vector<2x8x1xf32>
    %26 = vector.broadcast %25 : vector<2x8x1xf32> to vector<2x8x32xf32>
    %27 = arith.mulf %26, %6 : vector<2x8x32xf32>
    %cst_18 = arith.constant dense<0.000000e+00> : vector<2x32xf32>
    %28 = vector.multi_reduction <add>, %27, %cst_18 [1] : vector<2x8x32xf32> to vector<2x32xf32>
    %29 = tpu.concatenate %3, %28 in 1 : vector<2x32xf32>, vector<2x32xf32> -> vector<2x64xf32>
    %c0_19 = arith.constant 0 : index
    %c0_20 = arith.constant 0 : index
    %30 = vector.load %arg16[%c0_19, %c0_20] : memref<64x32xf32, #tpu.memory_space<vmem>>, vector<64x32xf32>
    %cst_21 = arith.constant dense<0.000000e+00> : vector<2x32xf32>
    %31 = tpu.matmul %29, %30, %cst_21 {dimension_numbers = #tpu.dot_dimension_numbers<[1], [0], [0], [1], [0, 0, 1, 1], [], []>} : vector<2x64xf32>, vector<64x32xf32>, vector<2x32xf32> -> vector<2x32xf32>
    %c0_22 = arith.constant 0 : index
    %c0_23 = arith.constant 0 : index
    %32 = vector.load %arg17[%c0_22, %c0_23] : memref<1x32xf32, #tpu.memory_space<vmem>>, vector<1x32xf32>
    %33 = vector.broadcast %32 : vector<1x32xf32> to vector<2x32xf32>
    %34 = arith.addf %31, %33 : vector<2x32xf32>
    %cst_24 = arith.constant dense<0.000000e+00> : vector<2xf32>
    %35 = vector.multi_reduction <add>, %34, %cst_24 [1] : vector<2x32xf32> to vector<2xf32>
    %36 = vector.shape_cast %35 : vector<2xf32> to vector<2x1xf32>
    %cst_25 = arith.constant 3.200000e+01 : f32
    %37 = vector.broadcast %cst_25 : f32 to vector<2x1xf32>
    %38 = arith.divf %36, %37 : vector<2x1xf32>
    %39 = vector.broadcast %38 : vector<2x1xf32> to vector<2x32xf32>
    %40 = arith.subf %34, %39 : vector<2x32xf32>
    %41 = arith.mulf %40, %40 : vector<2x32xf32>
    %cst_26 = arith.constant dense<0.000000e+00> : vector<2xf32>
    %42 = vector.multi_reduction <add>, %41, %cst_26 [1] : vector<2x32xf32> to vector<2xf32>
    %43 = vector.shape_cast %42 : vector<2xf32> to vector<2x1xf32>
    %cst_27 = arith.constant 3.200000e+01 : f32
    %44 = vector.broadcast %cst_27 : f32 to vector<2x1xf32>
    %45 = arith.divf %43, %44 : vector<2x1xf32>
    %46 = vector.broadcast %38 : vector<2x1xf32> to vector<2x32xf32>
    %47 = arith.subf %34, %46 : vector<2x32xf32>
    %cst_28 = arith.constant 9.99999974E-6 : f32
    %48 = vector.broadcast %cst_28 : f32 to vector<2x1xf32>
    %49 = arith.addf %45, %48 : vector<2x1xf32>
    %50 = math.rsqrt %49 : vector<2x1xf32>
    %51 = vector.broadcast %50 : vector<2x1xf32> to vector<2x32xf32>
    %52 = arith.mulf %47, %51 : vector<2x32xf32>
    %c0_29 = arith.constant 0 : index
    %c0_30 = arith.constant 0 : index
    %53 = vector.load %arg18[%c0_29, %c0_30] : memref<1x32xf32, #tpu.memory_space<vmem>>, vector<1x32xf32>
    %54 = vector.broadcast %53 : vector<1x32xf32> to vector<2x32xf32>
    %55 = arith.mulf %52, %54 : vector<2x32xf32>
    %c0_31 = arith.constant 0 : index
    %c0_32 = arith.constant 0 : index
    %56 = vector.load %arg19[%c0_31, %c0_32] : memref<1x32xf32, #tpu.memory_space<vmem>>, vector<1x32xf32>
    %57 = vector.broadcast %56 : vector<1x32xf32> to vector<2x32xf32>
    %58 = arith.addf %55, %57 : vector<2x32xf32>
    %cst_33 = arith.constant 0.000000e+00 : f32
    %59 = vector.broadcast %cst_33 : f32 to vector<2x32xf32>
    %60 = arith.maximumf %58, %59 : vector<2x32xf32>
    %c0_34 = arith.constant 0 : index
    %c0_35 = arith.constant 0 : index
    %61 = vector.load %arg40[%c0_34, %c0_35] : memref<2x32xf32, #tpu.memory_space<vmem>>, vector<2x32xf32>
    %62 = tpu.concatenate %60, %61 in 1 : vector<2x32xf32>, vector<2x32xf32> -> vector<2x64xf32>
    %c0_36 = arith.constant 0 : index
    %c0_37 = arith.constant 0 : index
    %63 = vector.load %arg20[%c0_36, %c0_37] : memref<64x128xf32, #tpu.memory_space<vmem>>, vector<64x128xf32>
    %cst_38 = arith.constant dense<0.000000e+00> : vector<2x128xf32>
    %64 = tpu.matmul %62, %63, %cst_38 {dimension_numbers = #tpu.dot_dimension_numbers<[1], [0], [0], [1], [0, 0, 1, 1], [], []>} : vector<2x64xf32>, vector<64x128xf32>, vector<2x128xf32> -> vector<2x128xf32>
    %c0_39 = arith.constant 0 : index
    %c0_40 = arith.constant 0 : index
    %65 = vector.load %arg21[%c0_39, %c0_40] : memref<1x128xf32, #tpu.memory_space<vmem>>, vector<1x128xf32>
    %66 = vector.broadcast %65 : vector<1x128xf32> to vector<2x128xf32>
    %67 = arith.addf %64, %66 : vector<2x128xf32>
    %68 = vector.extract_strided_slice %67 {offsets = [0, 0], sizes = [2, 32], strides = [1, 1]} : vector<2x128xf32> to vector<2x32xf32>
    %69 = arith.negf %68 : vector<2x32xf32>
    %70 = math.exp %69 : vector<2x32xf32>
    %cst_41 = arith.constant 1.000000e+00 : f32
    %71 = vector.broadcast %cst_41 : f32 to vector<2x32xf32>
    %72 = arith.addf %71, %70 : vector<2x32xf32>
    %73 = arith.divf %71, %72 : vector<2x32xf32>
    %74 = vector.extract_strided_slice %67 {offsets = [0, 32], sizes = [2, 32], strides = [1, 1]} : vector<2x128xf32> to vector<2x32xf32>
    %75 = arith.negf %74 : vector<2x32xf32>
    %76 = math.exp %75 : vector<2x32xf32>
    %cst_42 = arith.constant 1.000000e+00 : f32
    %77 = vector.broadcast %cst_42 : f32 to vector<2x32xf32>
    %78 = arith.addf %77, %76 : vector<2x32xf32>
    %79 = arith.divf %77, %78 : vector<2x32xf32>
    %80 = vector.extract_strided_slice %67 {offsets = [0, 64], sizes = [2, 32], strides = [1, 1]} : vector<2x128xf32> to vector<2x32xf32>
    %81 = vector.extract_strided_slice %67 {offsets = [0, 96], sizes = [2, 32], strides = [1, 1]} : vector<2x128xf32> to vector<2x32xf32>
    %82 = arith.mulf %73, %81 : vector<2x32xf32>
    %83 = arith.addf %80, %82 : vector<2x32xf32>
    %84 = math.tanh %83 : vector<2x32xf32>
    %cst_43 = arith.constant 1.000000e+00 : f32
    %85 = vector.broadcast %cst_43 : f32 to vector<2x32xf32>
    %86 = arith.subf %85, %79 : vector<2x32xf32>
    %87 = arith.mulf %86, %84 : vector<2x32xf32>
    %88 = arith.mulf %79, %61 : vector<2x32xf32>
    %89 = arith.addf %87, %88 : vector<2x32xf32>
    %c0_44 = arith.constant 0 : index
    %c0_45 = arith.constant 0 : index
    %90 = vector.load %arg40[%c0_44, %c0_45] : memref<2x32xf32, #tpu.memory_space<vmem>>, vector<2x32xf32>
    tpu.vector_store %arg40[%c0_44, %c0_45], %89 {strides = array<i32>} : memref<2x32xf32, #tpu.memory_space<vmem>>, vector<2x32xf32>,
    %c0_46 = arith.constant 0 : index
    %c0_47 = arith.constant 0 : index
    %91 = vector.load %arg22[%c0_46, %c0_47] : memref<32x32xf32, #tpu.memory_space<vmem>>, vector<32x32xf32>
    %cst_48 = arith.constant dense<0.000000e+00> : vector<2x32xf32>
    %92 = tpu.matmul %89, %91, %cst_48 {dimension_numbers = #tpu.dot_dimension_numbers<[1], [0], [0], [1], [0, 0, 1, 1], [], []>} : vector<2x32xf32>, vector<32x32xf32>, vector<2x32xf32> -> vector<2x32xf32>
    %c0_49 = arith.constant 0 : index
    %c0_50 = arith.constant 0 : index
    %93 = vector.load %arg23[%c0_49, %c0_50] : memref<1x32xf32, #tpu.memory_space<vmem>>, vector<1x32xf32>
    %94 = vector.broadcast %93 : vector<1x32xf32> to vector<2x32xf32>
    %95 = arith.addf %92, %94 : vector<2x32xf32>
    %cst_51 = arith.constant 0.000000e+00 : f32
    %96 = vector.broadcast %cst_51 : f32 to vector<2x32xf32>
    %97 = arith.maximumf %95, %96 : vector<2x32xf32>
    %c0_52 = arith.constant 0 : index
    %c0_53 = arith.constant 0 : index
    %98 = vector.load %arg13[%c0_52, %c0_53] : memref<32x7xf32, #tpu.memory_space<vmem>>, vector<32x7xf32>
    %cst_54 = arith.constant dense<0.000000e+00> : vector<2x7xf32>
    %99 = tpu.matmul %97, %98, %cst_54 {dimension_numbers = #tpu.dot_dimension_numbers<[1], [0], [0], [1], [0, 0, 1, 1], [], []>} : vector<2x32xf32>, vector<32x7xf32>, vector<2x7xf32> -> vector<2x7xf32>
    %c0_55 = arith.constant 0 : index
    %c0_56 = arith.constant 0 : index
    %c0_57 = arith.constant 0 : index
    %100 = vector.load %arg38[%c0_55, %c0_56, %c0_57] : memref<1x2x7xf32, #tpu.memory_space<vmem>>, vector<1x2x7xf32>
    %101 = vector.shape_cast %100 : vector<1x2x7xf32> to vector<2x7xf32>
    %102 = vector.shape_cast %99 : vector<2x7xf32> to vector<1x2x7xf32>
    tpu.vector_store %arg38[%c0_55, %c0_56, %c0_57], %102 {strides = array<i32>} : memref<1x2x7xf32, #tpu.memory_space<vmem>>, vector<1x2x7xf32>,
    %103 = tpu.iota {dimensions = array<i32: 1>} : vector<2x7xi32>
    %cst_58 = arith.constant dense<0xFF800000> : vector<2xf32>
    %104 = vector.multi_reduction <maximumf>, %99, %cst_58 [1] : vector<2x7xf32> to vector<2xf32>
    %105 = vector.shape_cast %104 : vector<2xf32> to vector<2x1xf32>
    %106 = vector.broadcast %105 : vector<2x1xf32> to vector<2x7xf32>
    %107 = arith.cmpf oeq, %99, %106 : vector<2x7xf32>
    %c7_i32 = arith.constant 7 : i32
    %108 = vector.broadcast %c7_i32 : i32 to vector<2x7xi32>
    %109 = arith.select %107, %103, %108 : vector<2x7xi1>, vector<2x7xi32>
    %cst_59 = arith.constant dense<2147483647> : vector<2xi32>
    %110 = vector.multi_reduction <minsi>, %109, %cst_59 [1] : vector<2x7xi32> to vector<2xi32>
    %111 = vector.shape_cast %110 : vector<2xi32> to vector<2x1xi32>
    %112 = tpu.iota {dimensions = array<i32: 1>} : vector<2x7xi32>
    %113 = vector.broadcast %111 : vector<2x1xi32> to vector<2x7xi32>
    %114 = arith.cmpi eq, %112, %113 : vector<2x7xi32>
    %115 = arith.extui %114 : vector<2x7xi1> to vector<2x7xi32>
    %116 = arith.sitofp %115 : vector<2x7xi32> to vector<2x7xf32>
    %c0_60 = arith.constant 0 : index
    %c0_61 = arith.constant 0 : index
    %117 = vector.load %arg12[%c0_60, %c0_61] : memref<7x32xf32, #tpu.memory_space<vmem>>, vector<7x32xf32>
    %cst_62 = arith.constant dense<0.000000e+00> : vector<2x32xf32>
    %118 = tpu.matmul %116, %117, %cst_62 {dimension_numbers = #tpu.dot_dimension_numbers<[1], [0], [0], [1], [0, 0, 1, 1], [], []>} : vector<2x7xf32>, vector<7x32xf32>, vector<2x32xf32> -> vector<2x32xf32>
    %c0_63 = arith.constant 0 : index
    %c0_64 = arith.constant 0 : index
    %119 = vector.load %arg42[%c0_63, %c0_64] : memref<2x32xf32, #tpu.memory_space<vmem>>, vector<2x32xf32>
    tpu.vector_store %arg42[%c0_63, %c0_64], %118 {strides = array<i32>} : memref<2x32xf32, #tpu.memory_space<vmem>>, vector<2x32xf32>,
    %120 = tpu.concatenate %118, %89 in 1 : vector<2x32xf32>, vector<2x32xf32> -> vector<2x64xf32>
    %c0_65 = arith.constant 0 : index
    %c0_66 = arith.constant 0 : index
    %121 = vector.load %arg24[%c0_65, %c0_66] : memref<64x64xf32, #tpu.memory_space<vmem>>, vector<64x64xf32>
    %cst_67 = arith.constant dense<0.000000e+00> : vector<2x64xf32>
    %122 = tpu.matmul %120, %121, %cst_67 {dimension_numbers = #tpu.dot_dimension_numbers<[1], [0], [0], [1], [0, 0, 1, 1], [], []>} : vector<2x64xf32>, vector<64x64xf32>, vector<2x64xf32> -> vector<2x64xf32>
    %c0_68 = arith.constant 0 : index
    %c0_69 = arith.constant 0 : index
    %123 = vector.load %arg25[%c0_68, %c0_69] : memref<1x64xf32, #tpu.memory_space<vmem>>, vector<1x64xf32>
    %124 = vector.broadcast %123 : vector<1x64xf32> to vector<2x64xf32>
    %125 = arith.addf %122, %124 : vector<2x64xf32>
    %cst_70 = arith.constant 0.000000e+00 : f32
    %126 = vector.broadcast %cst_70 : f32 to vector<2x64xf32>
    %127 = arith.maximumf %125, %126 : vector<2x64xf32>
    %c0_71 = arith.constant 0 : index
    %c0_72 = arith.constant 0 : index
    %128 = vector.load %arg26[%c0_71, %c0_72] : memref<64x32xf32, #tpu.memory_space<vmem>>, vector<64x32xf32>
    %cst_73 = arith.constant dense<0.000000e+00> : vector<2x32xf32>
    %129 = tpu.matmul %127, %128, %cst_73 {dimension_numbers = #tpu.dot_dimension_numbers<[1], [0], [0], [1], [0, 0, 1, 1], [], []>} : vector<2x64xf32>, vector<64x32xf32>, vector<2x32xf32> -> vector<2x32xf32>
    %c0_74 = arith.constant 0 : index
    %c0_75 = arith.constant 0 : index
    %130 = vector.load %arg27[%c0_74, %c0_75] : memref<1x32xf32, #tpu.memory_space<vmem>>, vector<1x32xf32>
    %131 = vector.broadcast %130 : vector<1x32xf32> to vector<2x32xf32>
    %132 = arith.addf %129, %131 : vector<2x32xf32>
    %cst_76 = arith.constant dense<0.000000e+00> : vector<2xf32>
    %133 = vector.multi_reduction <add>, %132, %cst_76 [1] : vector<2x32xf32> to vector<2xf32>
    %134 = vector.shape_cast %133 : vector<2xf32> to vector<2x1xf32>
    %cst_77 = arith.constant 3.200000e+01 : f32
    %135 = vector.broadcast %cst_77 : f32 to vector<2x1xf32>
    %136 = arith.divf %134, %135 : vector<2x1xf32>
    %137 = vector.broadcast %136 : vector<2x1xf32> to vector<2x32xf32>
    %138 = arith.subf %132, %137 : vector<2x32xf32>
    %139 = arith.mulf %138, %138 : vector<2x32xf32>
    %cst_78 = arith.constant dense<0.000000e+00> : vector<2xf32>
    %140 = vector.multi_reduction <add>, %139, %cst_78 [1] : vector<2x32xf32> to vector<2xf32>
    %141 = vector.shape_cast %140 : vector<2xf32> to vector<2x1xf32>
    %cst_79 = arith.constant 3.200000e+01 : f32
    %142 = vector.broadcast %cst_79 : f32 to vector<2x1xf32>
    %143 = arith.divf %141, %142 : vector<2x1xf32>
    %144 = vector.broadcast %136 : vector<2x1xf32> to vector<2x32xf32>
    %145 = arith.subf %132, %144 : vector<2x32xf32>
    %cst_80 = arith.constant 9.99999974E-6 : f32
    %146 = vector.broadcast %cst_80 : f32 to vector<2x1xf32>
    %147 = arith.addf %143, %146 : vector<2x1xf32>
    %148 = math.rsqrt %147 : vector<2x1xf32>
    %149 = vector.broadcast %148 : vector<2x1xf32> to vector<2x32xf32>
    %150 = arith.mulf %145, %149 : vector<2x32xf32>
    %c0_81 = arith.constant 0 : index
    %c0_82 = arith.constant 0 : index
    %151 = vector.load %arg28[%c0_81, %c0_82] : memref<1x32xf32, #tpu.memory_space<vmem>>, vector<1x32xf32>
    %152 = vector.broadcast %151 : vector<1x32xf32> to vector<2x32xf32>
    %153 = arith.mulf %150, %152 : vector<2x32xf32>
    %c0_83 = arith.constant 0 : index
    %c0_84 = arith.constant 0 : index
    %154 = vector.load %arg29[%c0_83, %c0_84] : memref<1x32xf32, #tpu.memory_space<vmem>>, vector<1x32xf32>
    %155 = vector.broadcast %154 : vector<1x32xf32> to vector<2x32xf32>
    %156 = arith.addf %153, %155 : vector<2x32xf32>
    %157 = tpu.iota {dimensions = array<i32: 1>} : vector<2x22xi32>
    %c3_i32 = arith.constant 3 : i32
    %158 = arith.addi %c3_i32, %arg1 : i32
    %159 = vector.broadcast %158 : i32 to vector<2x22xi32>
    %160 = arith.cmpi sge, %157, %159 : vector<2x22xi32>
    %c13_i32 = arith.constant 13 : i32
    %161 = vector.broadcast %c13_i32 : i32 to vector<2x22xi32>
    %162 = arith.cmpi sle, %157, %161 : vector<2x22xi32>
    %163 = arith.andi %160, %162 : vector<2x22xi1>
    %c0_85 = arith.constant 0 : index
    %c0_86 = arith.constant 0 : index
    %164 = vector.load %arg5[%c0_85, %c0_86] : memref<2x22xf32, #tpu.memory_space<vmem>>, vector<2x22xf32>
    %cst_87 = arith.constant 0.000000e+00 : f32
    %165 = vector.broadcast %cst_87 : f32 to vector<2x22xf32>
    %166 = arith.select %163, %165, %164 : vector<2x22xi1>, vector<2x22xf32>
    %c0_i32_88 = arith.constant 0 : i32
    %167 = vector.broadcast %c0_i32_88 : i32 to vector<2x22xi32>
    %168 = arith.cmpi eq, %157, %167 : vector<2x22xi32>
    %169 = arith.extui %168 : vector<2x22xi1> to vector<2x22xi32>
    %170 = arith.sitofp %169 : vector<2x22xi32> to vector<2x22xf32>
    %c5_i32 = arith.constant 5 : i32
    %171 = vector.broadcast %c5_i32 : i32 to vector<2x1xi32>
    %172 = arith.cmpi sge, %111, %171 : vector<2x1xi32>
    %c0_i32_89 = arith.constant 0 : i32
    %173 = vector.broadcast %c0_i32_89 : i32 to vector<2x1xi32>
    %174 = arith.cmpi ne, %111, %173 : vector<2x1xi32>
    %175 = arith.andi %172, %174 : vector<2x1xi1>
    %c0_90 = arith.constant 0 : index
    %c0_91 = arith.constant 0 : index
    %176 = vector.load %arg41[%c0_90, %c0_91] : memref<2x32xf32, #tpu.memory_space<vmem>>, vector<2x32xf32>
    %c0_92 = arith.constant 0 : index
    %c0_93 = arith.constant 0 : index
    %177 = vector.load %arg4[%c0_92, %c0_93] : memref<2x8xf32, #tpu.memory_space<vmem>>, vector<2x8xf32>
    %c0_94 = arith.constant 0 : index
    %c0_95 = arith.constant 0 : index
    %c0_96 = arith.constant 0 : index
    %178 = vector.load %arg8[%c0_94, %c0_95, %c0_96] : memref<2x8x32xf32, #tpu.memory_space<vmem>>, vector<2x8x32xf32>
    %c0_97 = arith.constant 0 : index
    %c0_98 = arith.constant 0 : index
    %c0_99 = arith.constant 0 : index
    %179 = vector.load %arg9[%c0_97, %c0_98, %c0_99] : memref<2x8x32xf32, #tpu.memory_space<vmem>>, vector<2x8x32xf32>
    %c0_100 = arith.constant 0 : index
    %c0_101 = arith.constant 0 : index
    %180 = vector.load %arg15[%c0_100, %c0_101] : memref<32x32xf32, #tpu.memory_space<vmem>>, vector<32x32xf32>
    %cst_102 = arith.constant dense<0.000000e+00> : vector<2x32xf32>
    %181 = tpu.matmul %156, %180, %cst_102 {dimension_numbers = #tpu.dot_dimension_numbers<[1], [0], [0], [1], [0, 0, 1, 1], [], []>} : vector<2x32xf32>, vector<32x32xf32>, vector<2x32xf32> -> vector<2x32xf32>
    %182 = vector.shape_cast %181 : vector<2x32xf32> to vector<2x1x32xf32>
    %183 = vector.broadcast %182 : vector<2x1x32xf32> to vector<2x8x32xf32>
    %184 = arith.mulf %183, %178 : vector<2x8x32xf32>
    %cst_103 = arith.constant dense<0.000000e+00> : vector<2x8xf32>
    %185 = vector.multi_reduction <add>, %184, %cst_103 [2] : vector<2x8x32xf32> to vector<2x8xf32>
    %186 = arith.addf %185, %177 : vector<2x8xf32>
    %cst_104 = arith.constant dense<0xFF800000> : vector<2xf32>
    %187 = vector.multi_reduction <maximumf>, %186, %cst_104 [1] : vector<2x8xf32> to vector<2xf32>
    %188 = vector.shape_cast %187 : vector<2xf32> to vector<2x1xf32>
    %189 = vector.broadcast %188 : vector<2x1xf32> to vector<2x8xf32>
    %190 = arith.subf %186, %189 : vector<2x8xf32>
    %191 = math.exp %190 : vector<2x8xf32>
    %cst_105 = arith.constant dense<0.000000e+00> : vector<2xf32>
    %192 = vector.multi_reduction <add>, %191, %cst_105 [1] : vector<2x8xf32> to vector<2xf32>
    %193 = vector.shape_cast %192 : vector<2xf32> to vector<2x1xf32>
    %194 = tpu.reciprocal %193 {approx = true} : vector<2x1xf32> -> vector<2x1xf32>
    %195 = vector.broadcast %194 : vector<2x1xf32> to vector<2x8xf32>
    %196 = arith.mulf %191, %195 : vector<2x8xf32>
    %197 = vector.shape_cast %196 : vector<2x8xf32> to vector<2x8x1xf32>
    %198 = vector.broadcast %197 : vector<2x8x1xf32> to vector<2x8x32xf32>
    %199 = arith.mulf %198, %179 : vector<2x8x32xf32>
    %cst_106 = arith.constant dense<0.000000e+00> : vector<2x32xf32>
    %200 = vector.multi_reduction <add>, %199, %cst_106 [1] : vector<2x8x32xf32> to vector<2x32xf32>
    %201 = tpu.concatenate %156, %200 in 1 : vector<2x32xf32>, vector<2x32xf32> -> vector<2x64xf32>
    %c0_107 = arith.constant 0 : index
    %c0_108 = arith.constant 0 : index
    %202 = vector.load %arg30[%c0_107, %c0_108] : memref<64x32xf32, #tpu.memory_space<vmem>>, vector<64x32xf32>
    %cst_109 = arith.constant dense<0.000000e+00> : vector<2x32xf32>
    %203 = tpu.matmul %201, %202, %cst_109 {dimension_numbers = #tpu.dot_dimension_numbers<[1], [0], [0], [1], [0, 0, 1, 1], [], []>} : vector<2x64xf32>, vector<64x32xf32>, vector<2x32xf32> -> vector<2x32xf32>
    %c0_110 = arith.constant 0 : index
    %c0_111 = arith.constant 0 : index
    %204 = vector.load %arg31[%c0_110, %c0_111] : memref<1x32xf32, #tpu.memory_space<vmem>>, vector<1x32xf32>
    %205 = vector.broadcast %204 : vector<1x32xf32> to vector<2x32xf32>
    %206 = arith.addf %203, %205 : vector<2x32xf32>
    %cst_112 = arith.constant dense<0.000000e+00> : vector<2xf32>
    %207 = vector.multi_reduction <add>, %206, %cst_112 [1] : vector<2x32xf32> to vector<2xf32>
    %208 = vector.shape_cast %207 : vector<2xf32> to vector<2x1xf32>
    %cst_113 = arith.constant 3.200000e+01 : f32
    %209 = vector.broadcast %cst_113 : f32 to vector<2x1xf32>
    %210 = arith.divf %208, %209 : vector<2x1xf32>
    %211 = vector.broadcast %210 : vector<2x1xf32> to vector<2x32xf32>
    %212 = arith.subf %206, %211 : vector<2x32xf32>
    %213 = arith.mulf %212, %212 : vector<2x32xf32>
    %cst_114 = arith.constant dense<0.000000e+00> : vector<2xf32>
    %214 = vector.multi_reduction <add>, %213, %cst_114 [1] : vector<2x32xf32> to vector<2xf32>
    %215 = vector.shape_cast %214 : vector<2xf32> to vector<2x1xf32>
    %cst_115 = arith.constant 3.200000e+01 : f32
    %216 = vector.broadcast %cst_115 : f32 to vector<2x1xf32>
    %217 = arith.divf %215, %216 : vector<2x1xf32>
    %218 = vector.broadcast %210 : vector<2x1xf32> to vector<2x32xf32>
    %219 = arith.subf %206, %218 : vector<2x32xf32>
    %cst_116 = arith.constant 9.99999974E-6 : f32
    %220 = vector.broadcast %cst_116 : f32 to vector<2x1xf32>
    %221 = arith.addf %217, %220 : vector<2x1xf32>
    %222 = math.rsqrt %221 : vector<2x1xf32>
    %223 = vector.broadcast %222 : vector<2x1xf32> to vector<2x32xf32>
    %224 = arith.mulf %219, %223 : vector<2x32xf32>
    %c0_117 = arith.constant 0 : index
    %c0_118 = arith.constant 0 : index
    %225 = vector.load %arg32[%c0_117, %c0_118] : memref<1x32xf32, #tpu.memory_space<vmem>>, vector<1x32xf32>
    %226 = vector.broadcast %225 : vector<1x32xf32> to vector<2x32xf32>
    %227 = arith.mulf %224, %226 : vector<2x32xf32>
    %c0_119 = arith.constant 0 : index
    %c0_120 = arith.constant 0 : index
    %228 = vector.load %arg33[%c0_119, %c0_120] : memref<1x32xf32, #tpu.memory_space<vmem>>, vector<1x32xf32>
    %229 = vector.broadcast %228 : vector<1x32xf32> to vector<2x32xf32>
    %230 = arith.addf %227, %229 : vector<2x32xf32>
    %cst_121 = arith.constant 0.000000e+00 : f32
    %231 = vector.broadcast %cst_121 : f32 to vector<2x32xf32>
    %232 = arith.maximumf %230, %231 : vector<2x32xf32>
    %233 = tpu.concatenate %232, %176 in 1 : vector<2x32xf32>, vector<2x32xf32> -> vector<2x64xf32>
    %c0_122 = arith.constant 0 : index
    %c0_123 = arith.constant 0 : index
    %234 = vector.load %arg34[%c0_122, %c0_123] : memref<64x128xf32, #tpu.memory_space<vmem>>, vector<64x128xf32>
    %cst_124 = arith.constant dense<0.000000e+00> : vector<2x128xf32>
    %235 = tpu.matmul %233, %234, %cst_124 {dimension_numbers = #tpu.dot_dimension_numbers<[1], [0], [0], [1], [0, 0, 1, 1], [], []>} : vector<2x64xf32>, vector<64x128xf32>, vector<2x128xf32> -> vector<2x128xf32>
    %c0_125 = arith.constant 0 : index
    %c0_126 = arith.constant 0 : index
    %236 = vector.load %arg35[%c0_125, %c0_126] : memref<1x128xf32, #tpu.memory_space<vmem>>, vector<1x128xf32>
    %237 = vector.broadcast %236 : vector<1x128xf32> to vector<2x128xf32>
    %238 = arith.addf %235, %237 : vector<2x128xf32>
    %239 = vector.extract_strided_slice %238 {offsets = [0, 0], sizes = [2, 32], strides = [1, 1]} : vector<2x128xf32> to vector<2x32xf32>
    %240 = arith.negf %239 : vector<2x32xf32>
    %241 = math.exp %240 : vector<2x32xf32>
    %cst_127 = arith.constant 1.000000e+00 : f32
    %242 = vector.broadcast %cst_127 : f32 to vector<2x32xf32>
    %243 = arith.addf %242, %241 : vector<2x32xf32>
    %244 = arith.divf %242, %243 : vector<2x32xf32>
    %245 = vector.extract_strided_slice %238 {offsets = [0, 32], sizes = [2, 32], strides = [1, 1]} : vector<2x128xf32> to vector<2x32xf32>
    %246 = arith.negf %245 : vector<2x32xf32>
    %247 = math.exp %246 : vector<2x32xf32>
    %cst_128 = arith.constant 1.000000e+00 : f32
    %248 = vector.broadcast %cst_128 : f32 to vector<2x32xf32>
    %249 = arith.addf %248, %247 : vector<2x32xf32>
    %250 = arith.divf %248, %249 : vector<2x32xf32>
    %251 = vector.extract_strided_slice %238 {offsets = [0, 64], sizes = [2, 32], strides = [1, 1]} : vector<2x128xf32> to vector<2x32xf32>
    %252 = vector.extract_strided_slice %238 {offsets = [0, 96], sizes = [2, 32], strides = [1, 1]} : vector<2x128xf32> to vector<2x32xf32>
    %253 = arith.mulf %244, %252 : vector<2x32xf32>
    %254 = arith.addf %251, %253 : vector<2x32xf32>
    %255 = math.tanh %254 : vector<2x32xf32>
    %cst_129 = arith.constant 1.000000e+00 : f32
    %256 = vector.broadcast %cst_129 : f32 to vector<2x32xf32>
    %257 = arith.subf %256, %250 : vector<2x32xf32>
    %258 = arith.mulf %257, %255 : vector<2x32xf32>
    %259 = arith.mulf %250, %176 : vector<2x32xf32>
    %260 = arith.addf %258, %259 : vector<2x32xf32>
    %c0_130 = arith.constant 0 : index
    %c0_131 = arith.constant 0 : index
    %261 = vector.load %arg36[%c0_130, %c0_131] : memref<32x32xf32, #tpu.memory_space<vmem>>, vector<32x32xf32>
    %cst_132 = arith.constant dense<0.000000e+00> : vector<2x32xf32>
    %262 = tpu.matmul %260, %261, %cst_132 {dimension_numbers = #tpu.dot_dimension_numbers<[1], [0], [0], [1], [0, 0, 1, 1], [], []>} : vector<2x32xf32>, vector<32x32xf32>, vector<2x32xf32> -> vector<2x32xf32>
    %c0_133 = arith.constant 0 : index
    %c0_134 = arith.constant 0 : index
    %263 = vector.load %arg37[%c0_133, %c0_134] : memref<1x32xf32, #tpu.memory_space<vmem>>, vector<1x32xf32>
    %264 = vector.broadcast %263 : vector<1x32xf32> to vector<2x32xf32>
    %265 = arith.addf %262, %264 : vector<2x32xf32>
    %cst_135 = arith.constant 0.000000e+00 : f32
    %266 = vector.broadcast %cst_135 : f32 to vector<2x32xf32>
    %267 = arith.maximumf %265, %266 : vector<2x32xf32>
    %268 = vector.shape_cast %267 : vector<2x32xf32> to vector<2x1x32xf32>
    %269 = vector.broadcast %268 : vector<2x1x32xf32> to vector<2x22x32xf32>
    %270 = arith.mulf %269, %4 : vector<2x22x32xf32>
    %cst_136 = arith.constant dense<0.000000e+00> : vector<2x22xf32>
    %271 = vector.multi_reduction <add>, %270, %cst_136 [2] : vector<2x22x32xf32> to vector<2x22xf32>
    %cst_137 = arith.constant 1.000000e+00 : f32
    %272 = vector.broadcast %cst_137 : f32 to vector<2x22xf32>
    %273 = arith.subf %272, %166 : vector<2x22xf32>
    %cst_138 = arith.constant 0.000000e+00 : f32
    %274 = vector.broadcast %cst_138 : f32 to vector<2x22xf32>
    %275 = arith.cmpf one, %273, %274 : vector<2x22xf32>
    %cst_139 = arith.constant -9.999900e+04 : f32
    %276 = vector.broadcast %cst_139 : f32 to vector<2x22xf32>
    %277 = arith.select %275, %276, %271 : vector<2x22xi1>, vector<2x22xf32>
    %c0_140 = arith.constant 0 : index
    %c0_141 = arith.constant 0 : index
    %c0_142 = arith.constant 0 : index
    %c0_143 = arith.constant 0 : index
    %278 = vector.load %arg39[%c0_140, %c0_141, %c0_142, %c0_143] : memref<1x2x2x22xf32, #tpu.memory_space<vmem>>, vector<1x1x2x22xf32>
    %279 = vector.shape_cast %278 : vector<1x1x2x22xf32> to vector<2x22xf32>
    %280 = vector.shape_cast %277 : vector<2x22xf32> to vector<1x1x2x22xf32>
    tpu.vector_store %arg39[%c0_140, %c0_141, %c0_142, %c0_143], %280 {strides = array<i32>} : memref<1x2x2x22xf32, #tpu.memory_space<vmem>>, vector<1x1x2x22xf32>,
    %281 = tpu.iota {dimensions = array<i32: 1>} : vector<2x22xi32>
    %cst_144 = arith.constant dense<0xFF800000> : vector<2xf32>
    %282 = vector.multi_reduction <maximumf>, %277, %cst_144 [1] : vector<2x22xf32> to vector<2xf32>
    %283 = vector.shape_cast %282 : vector<2xf32> to vector<2x1xf32>
    %284 = vector.broadcast %283 : vector<2x1xf32> to vector<2x22xf32>
    %285 = arith.cmpf oeq, %277, %284 : vector<2x22xf32>
    %c22_i32 = arith.constant 22 : i32
    %286 = vector.broadcast %c22_i32 : i32 to vector<2x22xi32>
    %287 = arith.select %285, %281, %286 : vector<2x22xi1>, vector<2x22xi32>
    %cst_145 = arith.constant dense<2147483647> : vector<2xi32>
    %288 = vector.multi_reduction <minsi>, %287, %cst_145 [1] : vector<2x22xi32> to vector<2xi32>
    %289 = vector.shape_cast %288 : vector<2xi32> to vector<2x1xi32>
    %290 = vector.broadcast %289 : vector<2x1xi32> to vector<2x22xi32>
    %291 = arith.cmpi eq, %157, %290 : vector<2x22xi32>
    %292 = arith.extui %291 : vector<2x22xi1> to vector<2x22xi32>
    %293 = arith.sitofp %292 : vector<2x22xi32> to vector<2x22xf32>
    %294 = vector.shape_cast %293 : vector<2x22xf32> to vector<2x22x1xf32>
    %295 = vector.broadcast %294 : vector<2x22x1xf32> to vector<2x22x32xf32>
    %296 = arith.mulf %295, %4 : vector<2x22x32xf32>
    %cst_146 = arith.constant dense<0.000000e+00> : vector<2x32xf32>
    %297 = vector.multi_reduction <add>, %296, %cst_146 [1] : vector<2x22x32xf32> to vector<2x32xf32>
    %c0_147 = arith.constant 0 : index
    %c0_148 = arith.constant 0 : index
    %c0_149 = arith.constant 0 : index
    %298 = vector.load %arg8[%c0_147, %c0_148, %c0_149] : memref<2x8x32xf32, #tpu.memory_space<vmem>>, vector<2x8x32xf32>
    %c0_150 = arith.constant 0 : index
    %c0_151 = arith.constant 0 : index
    %c0_152 = arith.constant 0 : index
    %299 = vector.load %arg9[%c0_150, %c0_151, %c0_152] : memref<2x8x32xf32, #tpu.memory_space<vmem>>, vector<2x8x32xf32>
    %c0_153 = arith.constant 0 : index
    %c0_154 = arith.constant 0 : index
    %300 = vector.load %arg15[%c0_153, %c0_154] : memref<32x32xf32, #tpu.memory_space<vmem>>, vector<32x32xf32>
    %cst_155 = arith.constant dense<0.000000e+00> : vector<2x32xf32>
    %301 = tpu.matmul %297, %300, %cst_155 {dimension_numbers = #tpu.dot_dimension_numbers<[1], [0], [0], [1], [0, 0, 1, 1], [], []>} : vector<2x32xf32>, vector<32x32xf32>, vector<2x32xf32> -> vector<2x32xf32>
    %302 = vector.shape_cast %301 : vector<2x32xf32> to vector<2x1x32xf32>
    %303 = vector.broadcast %302 : vector<2x1x32xf32> to vector<2x8x32xf32>
    %304 = arith.mulf %303, %298 : vector<2x8x32xf32>
    %cst_156 = arith.constant dense<0.000000e+00> : vector<2x8xf32>
    %305 = vector.multi_reduction <add>, %304, %cst_156 [2] : vector<2x8x32xf32> to vector<2x8xf32>
    %306 = arith.addf %305, %177 : vector<2x8xf32>
    %cst_157 = arith.constant dense<0xFF800000> : vector<2xf32>
    %307 = vector.multi_reduction <maximumf>, %306, %cst_157 [1] : vector<2x8xf32> to vector<2xf32>
    %308 = vector.shape_cast %307 : vector<2xf32> to vector<2x1xf32>
    %309 = vector.broadcast %308 : vector<2x1xf32> to vector<2x8xf32>
    %310 = arith.subf %306, %309 : vector<2x8xf32>
    %311 = math.exp %310 : vector<2x8xf32>
    %cst_158 = arith.constant dense<0.000000e+00> : vector<2xf32>
    %312 = vector.multi_reduction <add>, %311, %cst_158 [1] : vector<2x8xf32> to vector<2xf32>
    %313 = vector.shape_cast %312 : vector<2xf32> to vector<2x1xf32>
    %314 = tpu.reciprocal %313 {approx = true} : vector<2x1xf32> -> vector<2x1xf32>
    %315 = vector.broadcast %314 : vector<2x1xf32> to vector<2x8xf32>
    %316 = arith.mulf %311, %315 : vector<2x8xf32>
    %317 = vector.shape_cast %316 : vector<2x8xf32> to vector<2x8x1xf32>
    %318 = vector.broadcast %317 : vector<2x8x1xf32> to vector<2x8x32xf32>
    %319 = arith.mulf %318, %299 : vector<2x8x32xf32>
    %cst_159 = arith.constant dense<0.000000e+00> : vector<2x32xf32>
    %320 = vector.multi_reduction <add>, %319, %cst_159 [1] : vector<2x8x32xf32> to vector<2x32xf32>
    %321 = tpu.concatenate %297, %320 in 1 : vector<2x32xf32>, vector<2x32xf32> -> vector<2x64xf32>
    %c0_160 = arith.constant 0 : index
    %c0_161 = arith.constant 0 : index
    %322 = vector.load %arg30[%c0_160, %c0_161] : memref<64x32xf32, #tpu.memory_space<vmem>>, vector<64x32xf32>
    %cst_162 = arith.constant dense<0.000000e+00> : vector<2x32xf32>
    %323 = tpu.matmul %321, %322, %cst_162 {dimension_numbers = #tpu.dot_dimension_numbers<[1], [0], [0], [1], [0, 0, 1, 1], [], []>} : vector<2x64xf32>, vector<64x32xf32>, vector<2x32xf32> -> vector<2x32xf32>
    %c0_163 = arith.constant 0 : index
    %c0_164 = arith.constant 0 : index
    %324 = vector.load %arg31[%c0_163, %c0_164] : memref<1x32xf32, #tpu.memory_space<vmem>>, vector<1x32xf32>
    %325 = vector.broadcast %324 : vector<1x32xf32> to vector<2x32xf32>
    %326 = arith.addf %323, %325 : vector<2x32xf32>
    %cst_165 = arith.constant dense<0.000000e+00> : vector<2xf32>
    %327 = vector.multi_reduction <add>, %326, %cst_165 [1] : vector<2x32xf32> to vector<2xf32>
    %328 = vector.shape_cast %327 : vector<2xf32> to vector<2x1xf32>
    %cst_166 = arith.constant 3.200000e+01 : f32
    %329 = vector.broadcast %cst_166 : f32 to vector<2x1xf32>
    %330 = arith.divf %328, %329 : vector<2x1xf32>
    %331 = vector.broadcast %330 : vector<2x1xf32> to vector<2x32xf32>
    %332 = arith.subf %326, %331 : vector<2x32xf32>
    %333 = arith.mulf %332, %332 : vector<2x32xf32>
    %cst_167 = arith.constant dense<0.000000e+00> : vector<2xf32>
    %334 = vector.multi_reduction <add>, %333, %cst_167 [1] : vector<2x32xf32> to vector<2xf32>
    %335 = vector.shape_cast %334 : vector<2xf32> to vector<2x1xf32>
    %cst_168 = arith.constant 3.200000e+01 : f32
    %336 = vector.broadcast %cst_168 : f32 to vector<2x1xf32>
    %337 = arith.divf %335, %336 : vector<2x1xf32>
    %338 = vector.broadcast %330 : vector<2x1xf32> to vector<2x32xf32>
    %339 = arith.subf %326, %338 : vector<2x32xf32>
    %cst_169 = arith.constant 9.99999974E-6 : f32
    %340 = vector.broadcast %cst_169 : f32 to vector<2x1xf32>
    %341 = arith.addf %337, %340 : vector<2x1xf32>
    %342 = math.rsqrt %341 : vector<2x1xf32>
    %343 = vector.broadcast %342 : vector<2x1xf32> to vector<2x32xf32>
    %344 = arith.mulf %339, %343 : vector<2x32xf32>
    %c0_170 = arith.constant 0 : index
    %c0_171 = arith.constant 0 : index
    %345 = vector.load %arg32[%c0_170, %c0_171] : memref<1x32xf32, #tpu.memory_space<vmem>>, vector<1x32xf32>
    %346 = vector.broadcast %345 : vector<1x32xf32> to vector<2x32xf32>
    %347 = arith.mulf %344, %346 : vector<2x32xf32>
    %c0_172 = arith.constant 0 : index
    %c0_173 = arith.constant 0 : index
    %348 = vector.load %arg33[%c0_172, %c0_173] : memref<1x32xf32, #tpu.memory_space<vmem>>, vector<1x32xf32>
    %349 = vector.broadcast %348 : vector<1x32xf32> to vector<2x32xf32>
    %350 = arith.addf %347, %349 : vector<2x32xf32>
    %cst_174 = arith.constant 0.000000e+00 : f32
    %351 = vector.broadcast %cst_174 : f32 to vector<2x32xf32>
    %352 = arith.maximumf %350, %351 : vector<2x32xf32>
    %353 = tpu.concatenate %352, %260 in 1 : vector<2x32xf32>, vector<2x32xf32> -> vector<2x64xf32>
    %c0_175 = arith.constant 0 : index
    %c0_176 = arith.constant 0 : index
    %354 = vector.load %arg34[%c0_175, %c0_176] : memref<64x128xf32, #tpu.memory_space<vmem>>, vector<64x128xf32>
    %cst_177 = arith.constant dense<0.000000e+00> : vector<2x128xf32>
    %355 = tpu.matmul %353, %354, %cst_177 {dimension_numbers = #tpu.dot_dimension_numbers<[1], [0], [0], [1], [0, 0, 1, 1], [], []>} : vector<2x64xf32>, vector<64x128xf32>, vector<2x128xf32> -> vector<2x128xf32>
    %c0_178 = arith.constant 0 : index
    %c0_179 = arith.constant 0 : index
    %356 = vector.load %arg35[%c0_178, %c0_179] : memref<1x128xf32, #tpu.memory_space<vmem>>, vector<1x128xf32>
    %357 = vector.broadcast %356 : vector<1x128xf32> to vector<2x128xf32>
    %358 = arith.addf %355, %357 : vector<2x128xf32>
    %359 = vector.extract_strided_slice %358 {offsets = [0, 0], sizes = [2, 32], strides = [1, 1]} : vector<2x128xf32> to vector<2x32xf32>
    %360 = arith.negf %359 : vector<2x32xf32>
    %361 = math.exp %360 : vector<2x32xf32>
    %cst_180 = arith.constant 1.000000e+00 : f32
    %362 = vector.broadcast %cst_180 : f32 to vector<2x32xf32>
    %363 = arith.addf %362, %361 : vector<2x32xf32>
    %364 = arith.divf %362, %363 : vector<2x32xf32>
    %365 = vector.extract_strided_slice %358 {offsets = [0, 32], sizes = [2, 32], strides = [1, 1]} : vector<2x128xf32> to vector<2x32xf32>
    %366 = arith.negf %365 : vector<2x32xf32>
    %367 = math.exp %366 : vector<2x32xf32>
    %cst_181 = arith.constant 1.000000e+00 : f32
    %368 = vector.broadcast %cst_181 : f32 to vector<2x32xf32>
    %369 = arith.addf %368, %367 : vector<2x32xf32>
    %370 = arith.divf %368, %369 : vector<2x32xf32>
    %371 = vector.extract_strided_slice %358 {offsets = [0, 64], sizes = [2, 32], strides = [1, 1]} : vector<2x128xf32> to vector<2x32xf32>
    %372 = vector.extract_strided_slice %358 {offsets = [0, 96], sizes = [2, 32], strides = [1, 1]} : vector<2x128xf32> to vector<2x32xf32>
    %373 = arith.mulf %364, %372 : vector<2x32xf32>
    %374 = arith.addf %371, %373 : vector<2x32xf32>
    %375 = math.tanh %374 : vector<2x32xf32>
    %cst_182 = arith.constant 1.000000e+00 : f32
    %376 = vector.broadcast %cst_182 : f32 to vector<2x32xf32>
    %377 = arith.subf %376, %370 : vector<2x32xf32>
    %378 = arith.mulf %377, %375 : vector<2x32xf32>
    %379 = arith.mulf %370, %260 : vector<2x32xf32>
    %380 = arith.addf %378, %379 : vector<2x32xf32>
    %c0_183 = arith.constant 0 : index
    %c0_184 = arith.constant 0 : index
    %381 = vector.load %arg36[%c0_183, %c0_184] : memref<32x32xf32, #tpu.memory_space<vmem>>, vector<32x32xf32>
    %cst_185 = arith.constant dense<0.000000e+00> : vector<2x32xf32>
    %382 = tpu.matmul %380, %381, %cst_185 {dimension_numbers = #tpu.dot_dimension_numbers<[1], [0], [0], [1], [0, 0, 1, 1], [], []>} : vector<2x32xf32>, vector<32x32xf32>, vector<2x32xf32> -> vector<2x32xf32>
    %c0_186 = arith.constant 0 : index
    %c0_187 = arith.constant 0 : index
    %383 = vector.load %arg37[%c0_186, %c0_187] : memref<1x32xf32, #tpu.memory_space<vmem>>, vector<1x32xf32>
    %384 = vector.broadcast %383 : vector<1x32xf32> to vector<2x32xf32>
    %385 = arith.addf %382, %384 : vector<2x32xf32>
    %cst_188 = arith.constant 0.000000e+00 : f32
    %386 = vector.broadcast %cst_188 : f32 to vector<2x32xf32>
    %387 = arith.maximumf %385, %386 : vector<2x32xf32>
    %388 = vector.shape_cast %387 : vector<2x32xf32> to vector<2x1x32xf32>
    %389 = vector.broadcast %388 : vector<2x1x32xf32> to vector<2x22x32xf32>
    %390 = arith.mulf %389, %4 : vector<2x22x32xf32>
    %cst_189 = arith.constant dense<0.000000e+00> : vector<2x22xf32>
    %391 = vector.multi_reduction <add>, %390, %cst_189 [2] : vector<2x22x32xf32> to vector<2x22xf32>
    %392 = vector.shape_cast %175 : vector<2x1xi1> to vector<2x1xi1>
    %393 = vector.broadcast %392 : vector<2x1xi1> to vector<2x22xi1>
    %394 = arith.select %393, %170, %166 : vector<2x22xi1>, vector<2x22xf32>
    %cst_190 = arith.constant 1.000000e+00 : f32
    %395 = vector.broadcast %cst_190 : f32 to vector<2x22xf32>
    %396 = arith.subf %395, %394 : vector<2x22xf32>
    %cst_191 = arith.constant 0.000000e+00 : f32
    %397 = vector.broadcast %cst_191 : f32 to vector<2x22xf32>
    %398 = arith.cmpf one, %396, %397 : vector<2x22xf32>
    %cst_192 = arith.constant -9.999900e+04 : f32
    %399 = vector.broadcast %cst_192 : f32 to vector<2x22xf32>
    %400 = arith.select %398, %399, %391 : vector<2x22xi1>, vector<2x22xf32>
    %c0_193 = arith.constant 0 : index
    %c1 = arith.constant 1 : index
    %c0_194 = arith.constant 0 : index
    %c0_195 = arith.constant 0 : index
    %401 = vector.load %arg39[%c0_193, %c1, %c0_194, %c0_195] : memref<1x2x2x22xf32, #tpu.memory_space<vmem>>, vector<1x1x2x22xf32>
    %402 = vector.shape_cast %401 : vector<1x1x2x22xf32> to vector<2x22xf32>
    %403 = vector.shape_cast %400 : vector<2x22xf32> to vector<1x1x2x22xf32>
    tpu.vector_store %arg39[%c0_193, %c1, %c0_194, %c0_195], %403 {strides = array<i32>} : memref<1x2x2x22xf32, #tpu.memory_space<vmem>>, vector<1x1x2x22xf32>,
    %c0_196 = arith.constant 0 : index
    %c0_197 = arith.constant 0 : index
    %404 = vector.load %arg41[%c0_196, %c0_197] : memref<2x32xf32, #tpu.memory_space<vmem>>, vector<2x32xf32>
    tpu.vector_store %arg41[%c0_196, %c0_197], %380 {strides = array<i32>} : memref<2x32xf32, #tpu.memory_space<vmem>>, vector<2x32xf32>,
    %c0_i32_198 = arith.constant 0 : i32
    %405 = arith.cmpi eq, %arg1, %c0_i32_198 : i32
    %406 = arith.extui %405 : i1 to i32
    %c0_i32_199 = arith.constant 0 : i32
    %407 = arith.cmpi ne, %406, %c0_i32_199 : i32
    scf.if %407 {
      %414 = vector.shape_cast %380 : vector<2x32xf32> to vector<2x1x32xf32>
      %c0_202 = arith.constant 0 : index
      %c3 = arith.constant 3 : index
      %c0_203 = arith.constant 0 : index
      %415 = vector.load %arg43[%c0_202, %c3, %c0_203] : memref<2x22x32xf32, #tpu.memory_space<vmem>>, vector<2x1x32xf32>
      tpu.vector_store %arg43[%c0_202, %c3, %c0_203], %414 {strides = array<i32>} : memref<2x22x32xf32, #tpu.memory_space<vmem>>, vector<2x1x32xf32>,
    } else {
    }
    %c1_i32 = arith.constant 1 : i32
    %408 = arith.cmpi eq, %arg1, %c1_i32 : i32
    %409 = arith.extui %408 : i1 to i32
    %c0_i32_200 = arith.constant 0 : i32
    %410 = arith.cmpi ne, %409, %c0_i32_200 : i32
    scf.if %410 {
      %414 = vector.shape_cast %380 : vector<2x32xf32> to vector<2x1x32xf32>
      %c0_202 = arith.constant 0 : index
      %c4 = arith.constant 4 : index
      %c0_203 = arith.constant 0 : index
      %415 = vector.load %arg43[%c0_202, %c4, %c0_203] : memref<2x22x32xf32, #tpu.memory_space<vmem>>, vector<2x1x32xf32>
      tpu.vector_store %arg43[%c0_202, %c4, %c0_203], %414 {strides = array<i32>} : memref<2x22x32xf32, #tpu.memory_space<vmem>>, vector<2x1x32xf32>,
    } else {
    }
    %c2_i32 = arith.constant 2 : i32
    %411 = arith.cmpi eq, %arg1, %c2_i32 : i32
    %412 = arith.extui %411 : i1 to i32
    %c0_i32_201 = arith.constant 0 : i32
    %413 = arith.cmpi ne, %412, %c0_i32_201 : i32
    scf.if %413 {
      %414 = vector.shape_cast %380 : vector<2x32xf32> to vector<2x1x32xf32>
      %c0_202 = arith.constant 0 : index
      %c5 = arith.constant 5 : index
      %c0_203 = arith.constant 0 : index
      %415 = vector.load %arg43[%c0_202, %c5, %c0_203] : memref<2x22x32xf32, #tpu.memory_space<vmem>>, vector<2x1x32xf32>
      tpu.vector_store %arg43[%c0_202, %c5, %c0_203], %414 {strides = array<i32>} : memref<2x22x32xf32, #tpu.memory_space<vmem>>, vector<2x1x32xf32>,
    } else {
    }
    return
  }
  func.func @transform_0(%arg0: i32, %arg1: i32) -> (i32, i32, i32) {
    %c0_i32 = arith.constant 0 : i32
    %c0_i32_0 = arith.constant 0 : i32
    %c0_i32_1 = arith.constant 0 : i32
    return %arg0, %c0_i32, %c0_i32_0 : i32, i32, i32
  }
  func.func @transform_1(%arg0: i32, %arg1: i32) -> (i32, i32) {
    %c0_i32 = arith.constant 0 : i32
    %c0_i32_0 = arith.constant 0 : i32
    return %arg0, %c0_i32 : i32, i32
  }
  func.func @transform_2(%arg0: i32, %arg1: i32) -> (i32, i32) {
    %c0_i32 = arith.constant 0 : i32
    %c0_i32_0 = arith.constant 0 : i32
    return %arg0, %c0_i32 : i32, i32
  }
  func.func @transform_3(%arg0: i32, %arg1: i32) -> (i32, i32) {
    %c0_i32 = arith.constant 0 : i32
    %c0_i32_0 = arith.constant 0 : i32
    return %arg0, %c0_i32 : i32, i32
  }
  func.func @transform_4(%arg0: i32, %arg1: i32) -> (i32, i32, i32) {
    %c0_i32 = arith.constant 0 : i32
    %c0_i32_0 = arith.constant 0 : i32
    %c0_i32_1 = arith.constant 0 : i32
    return %arg0, %c0_i32, %c0_i32_0 : i32, i32, i32
  }
  func.func @transform_5(%arg0: i32, %arg1: i32) -> (i32, i32, i32) {
    %c0_i32 = arith.constant 0 : i32
    %c0_i32_0 = arith.constant 0 : i32
    %c0_i32_1 = arith.constant 0 : i32
    return %arg0, %c0_i32, %c0_i32_0 : i32, i32, i32
  }
  func.func @transform_6(%arg0: i32, %arg1: i32) -> (i32, i32, i32) {
    %c0_i32 = arith.constant 0 : i32
    %c0_i32_0 = arith.constant 0 : i32
    %c0_i32_1 = arith.constant 0 : i32
    return %arg0, %c0_i32, %c0_i32_0 : i32, i32, i32
  }
  func.func @transform_7(%arg0: i32, %arg1: i32) -> (i32, i32, i32) {
    %c0_i32 = arith.constant 0 : i32
    %c0_i32_0 = arith.constant 0 : i32
    %c0_i32_1 = arith.constant 0 : i32
    return %arg0, %c0_i32, %c0_i32_0 : i32, i32, i32
  }
  func.func @transform_8(%arg0: i32, %arg1: i32) -> (i32, i32) {
    %c0_i32 = arith.constant 0 : i32
    %c0_i32_0 = arith.constant 0 : i32
    %c0_i32_1 = arith.constant 0 : i32
    return %c0_i32, %c0_i32_0 : i32, i32
  }
  func.func @transform_9(%arg0: i32, %arg1: i32) -> (i32, i32) {
    %c0_i32 = arith.constant 0 : i32
    %c0_i32_0 = arith.constant 0 : i32
    %c0_i32_1 = arith.constant 0 : i32
    return %c0_i32, %c0_i32_0 : i32, i32
  }
  func.func @transform_10(%arg0: i32, %arg1: i32) -> (i32, i32) {
    %c0_i32 = arith.constant 0 : i32
    %c0_i32_0 = arith.constant 0 : i32
    %c0_i32_1 = arith.constant 0 : i32
    return %c0_i32, %c0_i32_0 : i32, i32
  }
  func.func @transform_11(%arg0: i32, %arg1: i32) -> (i32, i32) {
    %c0_i32 = arith.constant 0 : i32
    %c0_i32_0 = arith.constant 0 : i32
    %c0_i32_1 = arith.constant 0 : i32
    return %c0_i32, %c0_i32_0 : i32, i32
  }
  func.func @transform_12(%arg0: i32, %arg1: i32) -> (i32, i32) {
    %c0_i32 = arith.constant 0 : i32
    %c0_i32_0 = arith.constant 0 : i32
    %c0_i32_1 = arith.constant 0 : i32
    return %c0_i32, %c0_i32_0 : i32, i32
  }
  func.func @transform_13(%arg0: i32, %arg1: i32) -> (i32, i32) {
    %c0_i32 = arith.constant 0 : i32
    %c0_i32_0 = arith.constant 0 : i32
    %c0_i32_1 = arith.constant 0 : i32
    return %c0_i32, %c0_i32_0 : i32, i32
  }
  func.func @transform_14(%arg0: i32, %arg1: i32) -> (i32, i32) {
    %c0_i32 = arith.constant 0 : i32
    %c0_i32_0 = arith.constant 0 : i32
    %c0_i32_1 = arith.constant 0 : i32
    return %c0_i32, %c0_i32_0 : i32, i32
  }
  func.func @transform_15(%arg0: i32, %arg1: i32) -> (i32, i32) {
    %c0_i32 = arith.constant 0 : i32
    %c0_i32_0 = arith.constant 0 : i32
    %c0_i32_1 = arith.constant 0 : i32
    return %c0_i32, %c0_i32_0 : i32, i32
  }
  func.func @transform_16(%arg0: i32, %arg1: i32) -> (i32, i32) {
    %c0_i32 = arith.constant 0 : i32
    %c0_i32_0 = arith.constant 0 : i32
    %c0_i32_1 = arith.constant 0 : i32
    return %c0_i32, %c0_i32_0 : i32, i32
  }
  func.func @transform_17(%arg0: i32, %arg1: i32) -> (i32, i32) {
    %c0_i32 = arith.constant 0 : i32
    %c0_i32_0 = arith.constant 0 : i32
    %c0_i32_1 = arith.constant 0 : i32
    return %c0_i32, %c0_i32_0 : i32, i32
  }
  func.func @transform_18(%arg0: i32, %arg1: i32) -> (i32, i32) {
    %c0_i32 = arith.constant 0 : i32
    %c0_i32_0 = arith.constant 0 : i32
    %c0_i32_1 = arith.constant 0 : i32
    return %c0_i32, %c0_i32_0 : i32, i32
  }
  func.func @transform_19(%arg0: i32, %arg1: i32) -> (i32, i32) {
    %c0_i32 = arith.constant 0 : i32
    %c0_i32_0 = arith.constant 0 : i32
    %c0_i32_1 = arith.constant 0 : i32
    return %c0_i32, %c0_i32_0 : i32, i32
  }
  func.func @transform_20(%arg0: i32, %arg1: i32) -> (i32, i32) {
    %c0_i32 = arith.constant 0 : i32
    %c0_i32_0 = arith.constant 0 : i32
    %c0_i32_1 = arith.constant 0 : i32
    return %c0_i32, %c0_i32_0 : i32, i32
  }
  func.func @transform_21(%arg0: i32, %arg1: i32) -> (i32, i32) {
    %c0_i32 = arith.constant 0 : i32
    %c0_i32_0 = arith.constant 0 : i32
    %c0_i32_1 = arith.constant 0 : i32
    return %c0_i32, %c0_i32_0 : i32, i32
  }
  func.func @transform_22(%arg0: i32, %arg1: i32) -> (i32, i32) {
    %c0_i32 = arith.constant 0 : i32
    %c0_i32_0 = arith.constant 0 : i32
    %c0_i32_1 = arith.constant 0 : i32
    return %c0_i32, %c0_i32_0 : i32, i32
  }
  func.func @transform_23(%arg0: i32, %arg1: i32) -> (i32, i32) {
    %c0_i32 = arith.constant 0 : i32
    %c0_i32_0 = arith.constant 0 : i32
    %c0_i32_1 = arith.constant 0 : i32
    return %c0_i32, %c0_i32_0 : i32, i32
  }
  func.func @transform_24(%arg0: i32, %arg1: i32) -> (i32, i32) {
    %c0_i32 = arith.constant 0 : i32
    %c0_i32_0 = arith.constant 0 : i32
    %c0_i32_1 = arith.constant 0 : i32
    return %c0_i32, %c0_i32_0 : i32, i32
  }
  func.func @transform_25(%arg0: i32, %arg1: i32) -> (i32, i32) {
    %c0_i32 = arith.constant 0 : i32
    %c0_i32_0 = arith.constant 0 : i32
    %c0_i32_1 = arith.constant 0 : i32
    return %c0_i32, %c0_i32_0 : i32, i32
  }
  func.func @transform_26(%arg0: i32, %arg1: i32) -> (i32, i32) {
    %c0_i32 = arith.constant 0 : i32
    %c0_i32_0 = arith.constant 0 : i32
    %c0_i32_1 = arith.constant 0 : i32
    return %c0_i32, %c0_i32_0 : i32, i32
  }
  func.func @transform_27(%arg0: i32, %arg1: i32) -> (i32, i32) {
    %c0_i32 = arith.constant 0 : i32
    %c0_i32_0 = arith.constant 0 : i32
    %c0_i32_1 = arith.constant 0 : i32
    return %c0_i32, %c0_i32_0 : i32, i32
  }
  func.func @transform_28(%arg0: i32, %arg1: i32) -> (i32, i32) {
    %c0_i32 = arith.constant 0 : i32
    %c0_i32_0 = arith.constant 0 : i32
    %c0_i32_1 = arith.constant 0 : i32
    return %c0_i32, %c0_i32_0 : i32, i32
  }
  func.func @transform_29(%arg0: i32, %arg1: i32) -> (i32, i32) {
    %c0_i32 = arith.constant 0 : i32
    %c0_i32_0 = arith.constant 0 : i32
    %c0_i32_1 = arith.constant 0 : i32
    return %c0_i32, %c0_i32_0 : i32, i32
  }
  func.func @transform_30(%arg0: i32, %arg1: i32) -> (i32, i32) {
    %c0_i32 = arith.constant 0 : i32
    %c0_i32_0 = arith.constant 0 : i32
    %c0_i32_1 = arith.constant 0 : i32
    return %c0_i32, %c0_i32_0 : i32, i32
  }
  func.func @transform_31(%arg0: i32, %arg1: i32) -> (i32, i32) {
    %c0_i32 = arith.constant 0 : i32
    %c0_i32_0 = arith.constant 0 : i32
    %c0_i32_1 = arith.constant 0 : i32
    return %c0_i32, %c0_i32_0 : i32, i32
  }
  func.func @transform_32(%arg0: i32, %arg1: i32) -> (i32, i32) {
    %c0_i32 = arith.constant 0 : i32
    %c0_i32_0 = arith.constant 0 : i32
    %c0_i32_1 = arith.constant 0 : i32
    return %c0_i32, %c0_i32_0 : i32, i32
  }
  func.func @transform_33(%arg0: i32, %arg1: i32) -> (i32, i32) {
    %c0_i32 = arith.constant 0 : i32
    %c0_i32_0 = arith.constant 0 : i32
    %c0_i32_1 = arith.constant 0 : i32
    return %c0_i32, %c0_i32_0 : i32, i32
  }
  func.func @transform_34(%arg0: i32, %arg1: i32) -> (i32, i32) {
    %c0_i32 = arith.constant 0 : i32
    %c0_i32_0 = arith.constant 0 : i32
    %c0_i32_1 = arith.constant 0 : i32
    return %c0_i32, %c0_i32_0 : i32, i32
  }
  func.func @transform_35(%arg0: i32, %arg1: i32) -> (i32, i32) {
    %c0_i32 = arith.constant 0 : i32
    %c0_i32_0 = arith.constant 0 : i32
    %c0_i32_1 = arith.constant 0 : i32
    return %c0_i32, %c0_i32_0 : i32, i32
  }
  func.func @transform_36(%arg0: i32, %arg1: i32) -> (i32, i32, i32) {
    %c0_i32 = arith.constant 0 : i32
    %c0_i32_0 = arith.constant 0 : i32
    return %arg1, %arg0, %c0_i32 : i32, i32, i32
  }
  func.func @transform_37(%arg0: i32, %arg1: i32) -> (i32, i32, i32, i32) {
    %c0_i32 = arith.constant 0 : i32
    %c0_i32_0 = arith.constant 0 : i32
    %c0_i32_1 = arith.constant 0 : i32
    return %arg1, %c0_i32, %arg0, %c0_i32_0 : i32, i32, i32, i32
  }
}

</mosaic_0001>

<llo_original>
// kernel: forward.1
$region0: #{forward.1}
  #allocation0 [shape = 'u32[]', space=smem, size = 0x4, offset = 0x4, fixed_abs, tag = 'smem constant byte address 0x4 - core index']
  #allocation1 [shape = 'u32[144,128]{1,0:T(1,128)}', space=vmem, size = 0x12000, scoped, tag = 'internal scratch']
  #allocation2 [shape = 'f32[2,32]{1,0:T(2,128)}', space=vmem, size = 0x400, scoped, tag = 'scratch operand']
  #allocation3 [shape = 'f32[2,32]{1,0:T(2,128)}', space=vmem, size = 0x400, scoped, tag = 'scratch operand']
  #allocation4 [shape = 'f32[2,32]{1,0:T(2,128)}', space=vmem, size = 0x400, scoped, tag = 'scratch operand']
  #allocation5 [shape = 'f32[2,22,32]{2,1,0:T(8,128)}', space=vmem, size = 0x6000, scoped, tag = 'scratch operand']
  %s0 = inlined_call_operand.smem [shape: u32[38], index: -1, kind: input, shape index: {}]
  %s1 = sld [smem:[%s0]]
  %s2 = scalar_lea.smem %s0, 1
  %s3 = sld [smem:[%s2]]
  %s4 = scalar_lea.smem %s0, 2
  %s5 = sld [smem:[%s4]]
  %s6 = scalar_lea.smem %s0, 3
  %s7 = sld [smem:[%s6]]
  %s8 = scalar_lea.smem %s0, 4
  %s9 = sld [smem:[%s8]]
  %s10 = scalar_lea.smem %s0, 5
  %s11 = sld [smem:[%s10]]
  %s12 = scalar_lea.smem %s0, 6
  %s13 = sld [smem:[%s12]]
  %s14 = scalar_lea.smem %s0, 7
  %s15 = sld [smem:[%s14]]
  %s16 = scalar_lea.smem %s0, 8
  %s17 = sld [smem:[%s16]]
  %s18 = scalar_lea.smem %s0, 9
  %s19 = sld [smem:[%s18]]
  %s20 = scalar_lea.smem %s0, 10
  %s21 = sld [smem:[%s20]]
  %s22 = scalar_lea.smem %s0, 11
  %s23 = sld [smem:[%s22]]
  %s24 = scalar_lea.smem %s0, 12
  %s25 = sld [smem:[%s24]]
  %s26 = scalar_lea.smem %s0, 13
  %s27 = sld [smem:[%s26]]
  %s28 = scalar_lea.smem %s0, 14
  %s29 = sld [smem:[%s28]]
  %s30 = scalar_lea.smem %s0, 15
  %s31 = sld [smem:[%s30]]
  %s32 = scalar_lea.smem %s0, 16
  %s33 = sld [smem:[%s32]]
  %s34 = scalar_lea.smem %s0, 17
  %s35 = sld [smem:[%s34]]
  %s36 = scalar_lea.smem %s0, 18
  %s37 = sld [smem:[%s36]]
  %s38 = scalar_lea.smem %s0, 19
  %s39 = sld [smem:[%s38]]
  %s40 = scalar_lea.smem %s0, 20
  %s41 = sld [smem:[%s40]]
  %s42 = scalar_lea.smem %s0, 21
  %s43 = sld [smem:[%s42]]
  %s44 = scalar_lea.smem %s0, 22
  %s45 = sld [smem:[%s44]]
  %s46 = scalar_lea.smem %s0, 23
  %s47 = sld [smem:[%s46]]
  %s48 = scalar_lea.smem %s0, 24
  %s49 = sld [smem:[%s48]]
  %s50 = scalar_lea.smem %s0, 25
  %s51 = sld [smem:[%s50]]
  %s52 = scalar_lea.smem %s0, 26
  %s53 = sld [smem:[%s52]]
  %s54 = scalar_lea.smem %s0, 27
  %s55 = sld [smem:[%s54]]
  %s56 = scalar_lea.smem %s0, 28
  %s57 = sld [smem:[%s56]]
  %s58 = scalar_lea.smem %s0, 29
  %s59 = sld [smem:[%s58]]
  %s60 = scalar_lea.smem %s0, 30
  %s61 = sld [smem:[%s60]]
  %s62 = scalar_lea.smem %s0, 31
  %s63 = sld [smem:[%s62]]
  %s64 = scalar_lea.smem %s0, 32
  %s65 = sld [smem:[%s64]]
  %s66 = scalar_lea.smem %s0, 33
  %s67 = sld [smem:[%s66]]
  %s68 = scalar_lea.smem %s0, 34
  %s69 = sld [smem:[%s68]]
  %s70 = scalar_lea.smem %s0, 35
  %s71 = sld [smem:[%s70]]
  %s72 = scalar_lea.smem %s0, 36
  %s73 = sld [smem:[%s72]]
  %s74 = scalar_lea.smem %s0, 37
  %s75 = sld [smem:[%s74]]
  %76 = xla_tuple %s73, %s75
  %s77 = sld [smem:[#allocation0]]
  $region201: #{forward.1} parent=0
    _
  %s79 = ssub.s32 1, %s77
  %s80 = scalar_select 0, %s79, %s77
  loop: start=0, step=1, limit=5
  $region2: #{forward.1} parent=0 // loop_pre_header
    _
  $region3: #{forward.1} parent=0 // loop_header
    %s82 = sphi 0, %s86
    %p83 = scmp.ge.s32.totalorder %s82, 5
    %s89 = sphi 0, %s101
    %s90 = sphi 0, %s97
    %s91 = sphi 0, %s89
    %s92 = sphi 0, %s90
    %s93 = sphi 0, %s91
    %s94 = sphi 0, %s92
    %s104 = sphi 0, %s106
    %s107 = sphi 0, %s104
    %s108 = sphi 0, %s107
    %s124 = sphi 0, %s108
    %s130 = sphi 0, %s132
    %s133 = sphi 0, %s130
    %s134 = sphi 0, %s133
    %s150 = sphi 0, %s134
    %s156 = sphi 0, %s158
    %s159 = sphi 0, %s156
    %s160 = sphi 0, %s159
    %s176 = sphi 0, %s160
    %s182 = sphi 0, %s184
    %s185 = sphi 0, %s182
    %s186 = sphi 0, %s185
    %s202 = sphi 0, %s186
    %s208 = sphi 0, %s210
    %s211 = sphi 0, %s208
    %s212 = sphi 0, %s211
    %s228 = sphi 0, %s212
    %s234 = sphi 0, %s236
    %s237 = sphi 0, %s234
    %s238 = sphi 0, %s237
    %s254 = sphi 0, %s238
    %s260 = sphi 0, %s262
    %s263 = sphi 0, %s260
    %s264 = sphi 0, %s263
    %s280 = sphi 0, %s264
    %s286 = sphi 0, %s288
    %s289 = sphi 0, %s286
    %s290 = sphi 0, %s289
    %s306 = sphi 0, %s290
    %s310 = sphi 0, %s310
    %s312 = sphi 0, %s310
    %s313 = sphi 0, %s312
    %s327 = sphi 0, %s313
    %s331 = sphi 0, %s331
    %s333 = sphi 0, %s331
    %s334 = sphi 0, %s333
    %s348 = sphi 0, %s334
    %s352 = sphi 0, %s352
    %s354 = sphi 0, %s352
    %s355 = sphi 0, %s354
    %s369 = sphi 0, %s355
    %s373 = sphi 0, %s373
    %s375 = sphi 0, %s373
    %s376 = sphi 0, %s375
    %s390 = sphi 0, %s376
    %s394 = sphi 0, %s394
    %s396 = sphi 0, %s394
    %s397 = sphi 0, %s396
    %s411 = sphi 0, %s397
    %s415 = sphi 0, %s415
    %s417 = sphi 0, %s415
    %s418 = sphi 0, %s417
    %s432 = sphi 0, %s418
    %s436 = sphi 0, %s436
    %s438 = sphi 0, %s436
    %s439 = sphi 0, %s438
    %s453 = sphi 0, %s439
    %s457 = sphi 0, %s457
    %s459 = sphi 0, %s457
    %s460 = sphi 0, %s459
    %s474 = sphi 0, %s460
    %s478 = sphi 0, %s478
    %s480 = sphi 0, %s478
    %s481 = sphi 0, %s480
    %s495 = sphi 0, %s481
    %s499 = sphi 0, %s499
    %s501 = sphi 0, %s499
    %s502 = sphi 0, %s501
    %s516 = sphi 0, %s502
    %s520 = sphi 0, %s520
    %s522 = sphi 0, %s520
    %s523 = sphi 0, %s522
    %s537 = sphi 0, %s523
    %s541 = sphi 0, %s541
    %s543 = sphi 0, %s541
    %s544 = sphi 0, %s543
    %s558 = sphi 0, %s544
    %s562 = sphi 0, %s562
    %s564 = sphi 0, %s562
    %s565 = sphi 0, %s564
    %s579 = sphi 0, %s565
    %s583 = sphi 0, %s583
    %s585 = sphi 0, %s583
    %s586 = sphi 0, %s585
    %s600 = sphi 0, %s586
    %s604 = sphi 0, %s604
    %s606 = sphi 0, %s604
    %s607 = sphi 0, %s606
    %s621 = sphi 0, %s607
    %s625 = sphi 0, %s625
    %s627 = sphi 0, %s625
    %s628 = sphi 0, %s627
    %s642 = sphi 0, %s628
    %s646 = sphi 0, %s646
    %s648 = sphi 0, %s646
    %s649 = sphi 0, %s648
    %s663 = sphi 0, %s649
    %s667 = sphi 0, %s667
    %s669 = sphi 0, %s667
    %s670 = sphi 0, %s669
    %s684 = sphi 0, %s670
    %s688 = sphi 0, %s688
    %s690 = sphi 0, %s688
    %s691 = sphi 0, %s690
    %s705 = sphi 0, %s691
    %s709 = sphi 0, %s709
    %s711 = sphi 0, %s709
    %s712 = sphi 0, %s711
    %s726 = sphi 0, %s712
    %s730 = sphi 0, %s730
    %s732 = sphi 0, %s730
    %s733 = sphi 0, %s732
    %s747 = sphi 0, %s733
    %s751 = sphi 0, %s751
    %s753 = sphi 0, %s751
    %s754 = sphi 0, %s753
    %s768 = sphi 0, %s754
    %s772 = sphi 0, %s772
    %s774 = sphi 0, %s772
    %s775 = sphi 0, %s774
    %s789 = sphi 0, %s775
    %s793 = sphi 0, %s793
    %s795 = sphi 0, %s793
    %s796 = sphi 0, %s795
    %s810 = sphi 0, %s796
    %s814 = sphi 0, %s814
    %s816 = sphi 0, %s814
    %s817 = sphi 0, %s816
    %s831 = sphi 0, %s817
    %s835 = sphi 0, %s835
    %s837 = sphi 0, %s835
    %s838 = sphi 0, %s837
    %s852 = sphi 0, %s838
    %s856 = sphi 0, %s856
    %s858 = sphi 0, %s856
    %s859 = sphi 0, %s858
    %s873 = sphi 0, %s859
    %s877 = sphi 0, %s877
    %s879 = sphi 0, %s877
    %s880 = sphi 0, %s879
    %s894 = sphi 0, %s880
    %s902 = sphi 0, %s904
    %s905 = sphi 0, %s902
    %s906 = sphi 0, %s905
    %s922 = sphi 0, %s906
    %s930 = sphi 0, %s932
    %s933 = sphi 0, %s930
    %s934 = sphi 0, %s933
    %s950 = sphi 0, %s934
  $region4: #{forward.1} parent=0 // loop_header_branch
    %85 = sbr.rel (%p83) target = $region8
  $region5: #{forward.1} parent=0 // loop_body
    %s87 = ssub.s32 %s82, 1
    %s88 = ssub.s32 %s82, 2
    %s95 = sadd.s32 1, %s90
    %p96 = scmp.ge.s32.totalorder %s95, 3
    %s97 = scalar_select %p96, 0, %s95
    %s98 = sadd.s32 1, %s89
    %s99 = scalar_select %p96, %s98, %s89
    %p100 = scmp.ge.s32.totalorder %s99, 1
    %s101 = scalar_select %p100, 0, %s99
    %s102 = ssub.s32 %s89, %s101
    %p103 = scmp.eq.s32.totalorder %s102, 0
    %s105 = sadd.s32 %s104, 1
    %s106 = scalar_select %p103, %s104, %s105
    %p109 = pneg %p103
    %p110 = scmp.eq.s32.totalorder %s82, 2
    %p111 = por %p109, %p110
    %p112 = scmp.ne.s32.totalorder %s104, %s107
    %p113 = scmp.eq.s32.totalorder %s82, 0
    %p114 = por %p112, %p113
    %p115 = scmp.ne.s32.totalorder %s104, %s107
    %p116 = scmp.eq.s32.totalorder %s87, 2
    %p117 = por %p115, %p116
    %p118 = scmp.ne.s32.totalorder %s107, %s108
    %p119 = scmp.eq.s32.totalorder %s87, 0
    %p120 = por %p118, %p119
    %p121 = scmp.ne.s32.totalorder %s107, %s108
    %p122 = scmp.eq.s32.totalorder %s88, 2
    %p123 = por %p121, %p122
    %p125 = scmp.ne.s32.totalorder %s108, %s124
    %p126 = scmp.eq.s32.totalorder %s88, 0
    %p127 = por %p125, %p126
    %s128 = ssub.s32 %s89, %s101
    %p129 = scmp.eq.s32.totalorder %s128, 0
    %s131 = sadd.s32 %s130, 1
    %s132 = scalar_select %p129, %s130, %s131
    %p135 = pneg %p129
    %p136 = scmp.eq.s32.totalorder %s82, 2
    %p137 = por %p135, %p136
    %p138 = scmp.ne.s32.totalorder %s130, %s133
    %p139 = scmp.eq.s32.totalorder %s82, 0
    %p140 = por %p138, %p139
    %p141 = scmp.ne.s32.totalorder %s130, %s133
    %p142 = scmp.eq.s32.totalorder %s87, 2
    %p143 = por %p141, %p142
    %p144 = scmp.ne.s32.totalorder %s133, %s134
    %p145 = scmp.eq.s32.totalorder %s87, 0
    %p146 = por %p144, %p145
    %p147 = scmp.ne.s32.totalorder %s133, %s134
    %p148 = scmp.eq.s32.totalorder %s88, 2
    %p149 = por %p147, %p148
    %p151 = scmp.ne.s32.totalorder %s134, %s150
    %p152 = scmp.eq.s32.totalorder %s88, 0
    %p153 = por %p151, %p152
    %s154 = ssub.s32 %s89, %s101
    %p155 = scmp.eq.s32.totalorder %s154, 0
    %s157 = sadd.s32 %s156, 1
    %s158 = scalar_select %p155, %s156, %s157
    %p161 = pneg %p155
    %p162 = scmp.eq.s32.totalorder %s82, 2
    %p163 = por %p161, %p162
    %p164 = scmp.ne.s32.totalorder %s156, %s159
    %p165 = scmp.eq.s32.totalorder %s82, 0
    %p166 = por %p164, %p165
    %p167 = scmp.ne.s32.totalorder %s156, %s159
    %p168 = scmp.eq.s32.totalorder %s87, 2
    %p169 = por %p167, %p168
    %p170 = scmp.ne.s32.totalorder %s159, %s160
    %p171 = scmp.eq.s32.totalorder %s87, 0
    %p172 = por %p170, %p171
    %p173 = scmp.ne.s32.totalorder %s159, %s160
    %p174 = scmp.eq.s32.totalorder %s88, 2
    %p175 = por %p173, %p174
    %p177 = scmp.ne.s32.totalorder %s160, %s176
    %p178 = scmp.eq.s32.totalorder %s88, 0
    %p179 = por %p177, %p178
    %s180 = ssub.s32 %s89, %s101
    %p181 = scmp.eq.s32.totalorder %s180, 0
    %s183 = sadd.s32 %s182, 1
    %s184 = scalar_select %p181, %s182, %s183
    %p187 = pneg %p181
    %p188 = scmp.eq.s32.totalorder %s82, 2
    %p189 = por %p187, %p188
    %p190 = scmp.ne.s32.totalorder %s182, %s185
    %p191 = scmp.eq.s32.totalorder %s82, 0
    %p192 = por %p190, %p191
    %p193 = scmp.ne.s32.totalorder %s182, %s185
    %p194 = scmp.eq.s32.totalorder %s87, 2
    %p195 = por %p193, %p194
    %p196 = scmp.ne.s32.totalorder %s185, %s186
    %p197 = scmp.eq.s32.totalorder %s87, 0
    %p198 = por %p196, %p197
    %p199 = scmp.ne.s32.totalorder %s185, %s186
    %p200 = scmp.eq.s32.totalorder %s88, 2
    %p201 = por %p199, %p200
    %p203 = scmp.ne.s32.totalorder %s186, %s202
    %p204 = scmp.eq.s32.totalorder %s88, 0
    %p205 = por %p203, %p204
    %s206 = ssub.s32 %s89, %s101
    %p207 = scmp.eq.s32.totalorder %s206, 0
    %s209 = sadd.s32 %s208, 1
    %s210 = scalar_select %p207, %s208, %s209
    %p213 = pneg %p207
    %p214 = scmp.eq.s32.totalorder %s82, 2
    %p215 = por %p213, %p214
    %p216 = scmp.ne.s32.totalorder %s208, %s211
    %p217 = scmp.eq.s32.totalorder %s82, 0
    %p218 = por %p216, %p217
    %p219 = scmp.ne.s32.totalorder %s208, %s211
    %p220 = scmp.eq.s32.totalorder %s87, 2
    %p221 = por %p219, %p220
    %p222 = scmp.ne.s32.totalorder %s211, %s212
    %p223 = scmp.eq.s32.totalorder %s87, 0
    %p224 = por %p222, %p223
    %p225 = scmp.ne.s32.totalorder %s211, %s212
    %p226 = scmp.eq.s32.totalorder %s88, 2
    %p227 = por %p225, %p226
    %p229 = scmp.ne.s32.totalorder %s212, %s228
    %p230 = scmp.eq.s32.totalorder %s88, 0
    %p231 = por %p229, %p230
    %s232 = ssub.s32 %s89, %s101
    %p233 = scmp.eq.s32.totalorder %s232, 0
    %s235 = sadd.s32 %s234, 1
    %s236 = scalar_select %p233, %s234, %s235
    %p239 = pneg %p233
    %p240 = scmp.eq.s32.totalorder %s82, 2
    %p241 = por %p239, %p240
    %p242 = scmp.ne.s32.totalorder %s234, %s237
    %p243 = scmp.eq.s32.totalorder %s82, 0
    %p244 = por %p242, %p243
    %p245 = scmp.ne.s32.totalorder %s234, %s237
    %p246 = scmp.eq.s32.totalorder %s87, 2
    %p247 = por %p245, %p246
    %p248 = scmp.ne.s32.totalorder %s237, %s238
    %p249 = scmp.eq.s32.totalorder %s87, 0
    %p250 = por %p248, %p249
    %p251 = scmp.ne.s32.totalorder %s237, %s238
    %p252 = scmp.eq.s32.totalorder %s88, 2
    %p253 = por %p251, %p252
    %p255 = scmp.ne.s32.totalorder %s238, %s254
    %p256 = scmp.eq.s32.totalorder %s88, 0
    %p257 = por %p255, %p256
    %s258 = ssub.s32 %s89, %s101
    %p259 = scmp.eq.s32.totalorder %s258, 0
    %s261 = sadd.s32 %s260, 1
    %s262 = scalar_select %p259, %s260, %s261
    %p265 = pneg %p259
    %p266 = scmp.eq.s32.totalorder %s82, 2
    %p267 = por %p265, %p266
    %p268 = scmp.ne.s32.totalorder %s260, %s263
    %p269 = scmp.eq.s32.totalorder %s82, 0
    %p270 = por %p268, %p269
    %p271 = scmp.ne.s32.totalorder %s260, %s263
    %p272 = scmp.eq.s32.totalorder %s87, 2
    %p273 = por %p271, %p272
    %p274 = scmp.ne.s32.totalorder %s263, %s264
    %p275 = scmp.eq.s32.totalorder %s87, 0
    %p276 = por %p274, %p275
    %p277 = scmp.ne.s32.totalorder %s263, %s264
    %p278 = scmp.eq.s32.totalorder %s88, 2
    %p279 = por %p277, %p278
    %p281 = scmp.ne.s32.totalorder %s264, %s280
    %p282 = scmp.eq.s32.totalorder %s88, 0
    %p283 = por %p281, %p282
    %s284 = ssub.s32 %s89, %s101
    %p285 = scmp.eq.s32.totalorder %s284, 0
    %s287 = sadd.s32 %s286, 1
    %s288 = scalar_select %p285, %s286, %s287
    %p291 = pneg %p285
    %p292 = scmp.eq.s32.totalorder %s82, 2
    %p293 = por %p291, %p292
    %p294 = scmp.ne.s32.totalorder %s286, %s289
    %p295 = scmp.eq.s32.totalorder %s82, 0
    %p296 = por %p294, %p295
    %p297 = scmp.ne.s32.totalorder %s286, %s289
    %p298 = scmp.eq.s32.totalorder %s87, 2
    %p299 = por %p297, %p298
    %p300 = scmp.ne.s32.totalorder %s289, %s290
    %p301 = scmp.eq.s32.totalorder %s87, 0
    %p302 = por %p300, %p301
    %p303 = scmp.ne.s32.totalorder %s289, %s290
    %p304 = scmp.eq.s32.totalorder %s88, 2
    %p305 = por %p303, %p304
    %p307 = scmp.ne.s32.totalorder %s290, %s306
    %p308 = scmp.eq.s32.totalorder %s88, 0
    %p309 = por %p307, %p308
    %s311 = sadd.s32 %s310, 1
    %p314 = scmp.eq.s32.totalorder %s82, 2
    %p315 = scmp.ne.s32.totalorder %s310, %s312
    %p316 = scmp.eq.s32.totalorder %s82, 0
    %p317 = por %p315, %p316
    %p318 = scmp.ne.s32.totalorder %s310, %s312
    %p319 = scmp.eq.s32.totalorder %s87, 2
    %p320 = por %p318, %p319
    %p321 = scmp.ne.s32.totalorder %s312, %s313
    %p322 = scmp.eq.s32.totalorder %s87, 0
    %p323 = por %p321, %p322
    %p324 = scmp.ne.s32.totalorder %s312, %s313
    %p325 = scmp.eq.s32.totalorder %s88, 2
    %p326 = por %p324, %p325
    %p328 = scmp.ne.s32.totalorder %s313, %s327
    %p329 = scmp.eq.s32.totalorder %s88, 0
    %p330 = por %p328, %p329
    %s332 = sadd.s32 %s331, 1
    %p335 = scmp.eq.s32.totalorder %s82, 2
    %p336 = scmp.ne.s32.totalorder %s331, %s333
    %p337 = scmp.eq.s32.totalorder %s82, 0
    %p338 = por %p336, %p337
    %p339 = scmp.ne.s32.totalorder %s331, %s333
    %p340 = scmp.eq.s32.totalorder %s87, 2
    %p341 = por %p339, %p340
    %p342 = scmp.ne.s32.totalorder %s333, %s334
    %p343 = scmp.eq.s32.totalorder %s87, 0
    %p344 = por %p342, %p343
    %p345 = scmp.ne.s32.totalorder %s333, %s334
    %p346 = scmp.eq.s32.totalorder %s88, 2
    %p347 = por %p345, %p346
    %p349 = scmp.ne.s32.totalorder %s334, %s348
    %p350 = scmp.eq.s32.totalorder %s88, 0
    %p351 = por %p349, %p350
    %s353 = sadd.s32 %s352, 1
    %p356 = scmp.eq.s32.totalorder %s82, 2
    %p357 = scmp.ne.s32.totalorder %s352, %s354
    %p358 = scmp.eq.s32.totalorder %s82, 0
    %p359 = por %p357, %p358
    %p360 = scmp.ne.s32.totalorder %s352, %s354
    %p361 = scmp.eq.s32.totalorder %s87, 2
    %p362 = por %p360, %p361
    %p363 = scmp.ne.s32.totalorder %s354, %s355
    %p364 = scmp.eq.s32.totalorder %s87, 0
    %p365 = por %p363, %p364
    %p366 = scmp.ne.s32.totalorder %s354, %s355
    %p367 = scmp.eq.s32.totalorder %s88, 2
    %p368 = por %p366, %p367
    %p370 = scmp.ne.s32.totalorder %s355, %s369
    %p371 = scmp.eq.s32.totalorder %s88, 0
    %p372 = por %p370, %p371
    %s374 = sadd.s32 %s373, 1
    %p377 = scmp.eq.s32.totalorder %s82, 2
    %p378 = scmp.ne.s32.totalorder %s373, %s375
    %p379 = scmp.eq.s32.totalorder %s82, 0
    %p380 = por %p378, %p379
    %p381 = scmp.ne.s32.totalorder %s373, %s375
    %p382 = scmp.eq.s32.totalorder %s87, 2
    %p383 = por %p381, %p382
    %p384 = scmp.ne.s32.totalorder %s375, %s376
    %p385 = scmp.eq.s32.totalorder %s87, 0
    %p386 = por %p384, %p385
    %p387 = scmp.ne.s32.totalorder %s375, %s376
    %p388 = scmp.eq.s32.totalorder %s88, 2
    %p389 = por %p387, %p388
    %p391 = scmp.ne.s32.totalorder %s376, %s390
    %p392 = scmp.eq.s32.totalorder %s88, 0
    %p393 = por %p391, %p392
    %s395 = sadd.s32 %s394, 1
    %p398 = scmp.eq.s32.totalorder %s82, 2
    %p399 = scmp.ne.s32.totalorder %s394, %s396
    %p400 = scmp.eq.s32.totalorder %s82, 0
    %p401 = por %p399, %p400
    %p402 = scmp.ne.s32.totalorder %s394, %s396
    %p403 = scmp.eq.s32.totalorder %s87, 2
    %p404 = por %p402, %p403
    %p405 = scmp.ne.s32.totalorder %s396, %s397
    %p406 = scmp.eq.s32.totalorder %s87, 0
    %p407 = por %p405, %p406
    %p408 = scmp.ne.s32.totalorder %s396, %s397
    %p409 = scmp.eq.s32.totalorder %s88, 2
    %p410 = por %p408, %p409
    %p412 = scmp.ne.s32.totalorder %s397, %s411
    %p413 = scmp.eq.s32.totalorder %s88, 0
    %p414 = por %p412, %p413
    %s416 = sadd.s32 %s415, 1
    %p419 = scmp.eq.s32.totalorder %s82, 2
    %p420 = scmp.ne.s32.totalorder %s415, %s417
    %p421 = scmp.eq.s32.totalorder %s82, 0
    %p422 = por %p420, %p421
    %p423 = scmp.ne.s32.totalorder %s415, %s417
    %p424 = scmp.eq.s32.totalorder %s87, 2
    %p425 = por %p423, %p424
    %p426 = scmp.ne.s32.totalorder %s417, %s418
    %p427 = scmp.eq.s32.totalorder %s87, 0
    %p428 = por %p426, %p427
    %p429 = scmp.ne.s32.totalorder %s417, %s418
    %p430 = scmp.eq.s32.totalorder %s88, 2
    %p431 = por %p429, %p430
    %p433 = scmp.ne.s32.totalorder %s418, %s432
    %p434 = scmp.eq.s32.totalorder %s88, 0
    %p435 = por %p433, %p434
    %s437 = sadd.s32 %s436, 1
    %p440 = scmp.eq.s32.totalorder %s82, 2
    %p441 = scmp.ne.s32.totalorder %s436, %s438
    %p442 = scmp.eq.s32.totalorder %s82, 0
    %p443 = por %p441, %p442
    %p444 = scmp.ne.s32.totalorder %s436, %s438
    %p445 = scmp.eq.s32.totalorder %s87, 2
    %p446 = por %p444, %p445
    %p447 = scmp.ne.s32.totalorder %s438, %s439
    %p448 = scmp.eq.s32.totalorder %s87, 0
    %p449 = por %p447, %p448
    %p450 = scmp.ne.s32.totalorder %s438, %s439
    %p451 = scmp.eq.s32.totalorder %s88, 2
    %p452 = por %p450, %p451
    %p454 = scmp.ne.s32.totalorder %s439, %s453
    %p455 = scmp.eq.s32.totalorder %s88, 0
    %p456 = por %p454, %p455
    %s458 = sadd.s32 %s457, 1
    %p461 = scmp.eq.s32.totalorder %s82, 2
    %p462 = scmp.ne.s32.totalorder %s457, %s459
    %p463 = scmp.eq.s32.totalorder %s82, 0
    %p464 = por %p462, %p463
    %p465 = scmp.ne.s32.totalorder %s457, %s459
    %p466 = scmp.eq.s32.totalorder %s87, 2
    %p467 = por %p465, %p466
    %p468 = scmp.ne.s32.totalorder %s459, %s460
    %p469 = scmp.eq.s32.totalorder %s87, 0
    %p470 = por %p468, %p469
    %p471 = scmp.ne.s32.totalorder %s459, %s460
    %p472 = scmp.eq.s32.totalorder %s88, 2
    %p473 = por %p471, %p472
    %p475 = scmp.ne.s32.totalorder %s460, %s474
    %p476 = scmp.eq.s32.totalorder %s88, 0
    %p477 = por %p475, %p476
    %s479 = sadd.s32 %s478, 1
    %p482 = scmp.eq.s32.totalorder %s82, 2
    %p483 = scmp.ne.s32.totalorder %s478, %s480
    %p484 = scmp.eq.s32.totalorder %s82, 0
    %p485 = por %p483, %p484
    %p486 = scmp.ne.s32.totalorder %s478, %s480
    %p487 = scmp.eq.s32.totalorder %s87, 2
    %p488 = por %p486, %p487
    %p489 = scmp.ne.s32.totalorder %s480, %s481
    %p490 = scmp.eq.s32.totalorder %s87, 0
    %p491 = por %p489, %p490
    %p492 = scmp.ne.s32.totalorder %s480, %s481
    %p493 = scmp.eq.s32.totalorder %s88, 2
    %p494 = por %p492, %p493
    %p496 = scmp.ne.s32.totalorder %s481, %s495
    %p497 = scmp.eq.s32.totalorder %s88, 0
    %p498 = por %p496, %p497
    %s500 = sadd.s32 %s499, 1
    %p503 = scmp.eq.s32.totalorder %s82, 2
    %p504 = scmp.ne.s32.totalorder %s499, %s501
    %p505 = scmp.eq.s32.totalorder %s82, 0
    %p506 = por %p504, %p505
    %p507 = scmp.ne.s32.totalorder %s499, %s501
    %p508 = scmp.eq.s32.totalorder %s87, 2
    %p509 = por %p507, %p508
    %p510 = scmp.ne.s32.totalorder %s501, %s502
    %p511 = scmp.eq.s32.totalorder %s87, 0
    %p512 = por %p510, %p511
    %p513 = scmp.ne.s32.totalorder %s501, %s502
    %p514 = scmp.eq.s32.totalorder %s88, 2
    %p515 = por %p513, %p514
    %p517 = scmp.ne.s32.totalorder %s502, %s516
    %p518 = scmp.eq.s32.totalorder %s88, 0
    %p519 = por %p517, %p518
    %s521 = sadd.s32 %s520, 1
    %p524 = scmp.eq.s32.totalorder %s82, 2
    %p525 = scmp.ne.s32.totalorder %s520, %s522
    %p526 = scmp.eq.s32.totalorder %s82, 0
    %p527 = por %p525, %p526
    %p528 = scmp.ne.s32.totalorder %s520, %s522
    %p529 = scmp.eq.s32.totalorder %s87, 2
    %p530 = por %p528, %p529
    %p531 = scmp.ne.s32.totalorder %s522, %s523
    %p532 = scmp.eq.s32.totalorder %s87, 0
    %p533 = por %p531, %p532
    %p534 = scmp.ne.s32.totalorder %s522, %s523
    %p535 = scmp.eq.s32.totalorder %s88, 2
    %p536 = por %p534, %p535
    %p538 = scmp.ne.s32.totalorder %s523, %s537
    %p539 = scmp.eq.s32.totalorder %s88, 0
    %p540 = por %p538, %p539
    %s542 = sadd.s32 %s541, 1
    %p545 = scmp.eq.s32.totalorder %s82, 2
    %p546 = scmp.ne.s32.totalorder %s541, %s543
    %p547 = scmp.eq.s32.totalorder %s82, 0
    %p548 = por %p546, %p547
    %p549 = scmp.ne.s32.totalorder %s541, %s543
    %p550 = scmp.eq.s32.totalorder %s87, 2
    %p551 = por %p549, %p550
    %p552 = scmp.ne.s32.totalorder %s543, %s544
    %p553 = scmp.eq.s32.totalorder %s87, 0
    %p554 = por %p552, %p553
    %p555 = scmp.ne.s32.totalorder %s543, %s544
    %p556 = scmp.eq.s32.totalorder %s88, 2
    %p557 = por %p555, %p556
    %p559 = scmp.ne.s32.totalorder %s544, %s558
    %p560 = scmp.eq.s32.totalorder %s88, 0
    %p561 = por %p559, %p560
    %s563 = sadd.s32 %s562, 1
    %p566 = scmp.eq.s32.totalorder %s82, 2
    %p567 = scmp.ne.s32.totalorder %s562, %s564
    %p568 = scmp.eq.s32.totalorder %s82, 0
    %p569 = por %p567, %p568
    %p570 = scmp.ne.s32.totalorder %s562, %s564
    %p571 = scmp.eq.s32.totalorder %s87, 2
    %p572 = por %p570, %p571
    %p573 = scmp.ne.s32.totalorder %s564, %s565
    %p574 = scmp.eq.s32.totalorder %s87, 0
    %p575 = por %p573, %p574
    %p576 = scmp.ne.s32.totalorder %s564, %s565
    %p577 = scmp.eq.s32.totalorder %s88, 2
    %p578 = por %p576, %p577
    %p580 = scmp.ne.s32.totalorder %s565, %s579
    %p581 = scmp.eq.s32.totalorder %s88, 0
    %p582 = por %p580, %p581
    %s584 = sadd.s32 %s583, 1
    %p587 = scmp.eq.s32.totalorder %s82, 2
    %p588 = scmp.ne.s32.totalorder %s583, %s585
    %p589 = scmp.eq.s32.totalorder %s82, 0
    %p590 = por %p588, %p589
    %p591 = scmp.ne.s32.totalorder %s583, %s585
    %p592 = scmp.eq.s32.totalorder %s87, 2
    %p593 = por %p591, %p592
    %p594 = scmp.ne.s32.totalorder %s585, %s586
    %p595 = scmp.eq.s32.totalorder %s87, 0
    %p596 = por %p594, %p595
    %p597 = scmp.ne.s32.totalorder %s585, %s586
    %p598 = scmp.eq.s32.totalorder %s88, 2
    %p599 = por %p597, %p598
    %p601 = scmp.ne.s32.totalorder %s586, %s600
    %p602 = scmp.eq.s32.totalorder %s88, 0
    %p603 = por %p601, %p602
    %s605 = sadd.s32 %s604, 1
    %p608 = scmp.eq.s32.totalorder %s82, 2
    %p609 = scmp.ne.s32.totalorder %s604, %s606
    %p610 = scmp.eq.s32.totalorder %s82, 0
    %p611 = por %p609, %p610
    %p612 = scmp.ne.s32.totalorder %s604, %s606
    %p613 = scmp.eq.s32.totalorder %s87, 2
    %p614 = por %p612, %p613
    %p615 = scmp.ne.s32.totalorder %s606, %s607
    %p616 = scmp.eq.s32.totalorder %s87, 0
    %p617 = por %p615, %p616
    %p618 = scmp.ne.s32.totalorder %s606, %s607
    %p619 = scmp.eq.s32.totalorder %s88, 2
    %p620 = por %p618, %p619
    %p622 = scmp.ne.s32.totalorder %s607, %s621
    %p623 = scmp.eq.s32.totalorder %s88, 0
    %p624 = por %p622, %p623
    %s626 = sadd.s32 %s625, 1
    %p629 = scmp.eq.s32.totalorder %s82, 2
    %p630 = scmp.ne.s32.totalorder %s625, %s627
    %p631 = scmp.eq.s32.totalorder %s82, 0
    %p632 = por %p630, %p631
    %p633 = scmp.ne.s32.totalorder %s625, %s627
    %p634 = scmp.eq.s32.totalorder %s87, 2
    %p635 = por %p633, %p634
    %p636 = scmp.ne.s32.totalorder %s627, %s628
    %p637 = scmp.eq.s32.totalorder %s87, 0
    %p638 = por %p636, %p637
    %p639 = scmp.ne.s32.totalorder %s627, %s628
    %p640 = scmp.eq.s32.totalorder %s88, 2
    %p641 = por %p639, %p640
    %p643 = scmp.ne.s32.totalorder %s628, %s642
    %p644 = scmp.eq.s32.totalorder %s88, 0
    %p645 = por %p643, %p644
    %s647 = sadd.s32 %s646, 1
    %p650 = scmp.eq.s32.totalorder %s82, 2
    %p651 = scmp.ne.s32.totalorder %s646, %s648
    %p652 = scmp.eq.s32.totalorder %s82, 0
    %p653 = por %p651, %p652
    %p654 = scmp.ne.s32.totalorder %s646, %s648
    %p655 = scmp.eq.s32.totalorder %s87, 2
    %p656 = por %p654, %p655
    %p657 = scmp.ne.s32.totalorder %s648, %s649
    %p658 = scmp.eq.s32.totalorder %s87, 0
    %p659 = por %p657, %p658
    %p660 = scmp.ne.s32.totalorder %s648, %s649
    %p661 = scmp.eq.s32.totalorder %s88, 2
    %p662 = por %p660, %p661
    %p664 = scmp.ne.s32.totalorder %s649, %s663
    %p665 = scmp.eq.s32.totalorder %s88, 0
    %p666 = por %p664, %p665
    %s668 = sadd.s32 %s667, 1
    %p671 = scmp.eq.s32.totalorder %s82, 2
    %p672 = scmp.ne.s32.totalorder %s667, %s669
    %p673 = scmp.eq.s32.totalorder %s82, 0
    %p674 = por %p672, %p673
    %p675 = scmp.ne.s32.totalorder %s667, %s669
    %p676 = scmp.eq.s32.totalorder %s87, 2
    %p677 = por %p675, %p676
    %p678 = scmp.ne.s32.totalorder %s669, %s670
    %p679 = scmp.eq.s32.totalorder %s87, 0
    %p680 = por %p678, %p679
    %p681 = scmp.ne.s32.totalorder %s669, %s670
    %p682 = scmp.eq.s32.totalorder %s88, 2
    %p683 = por %p681, %p682
    %p685 = scmp.ne.s32.totalorder %s670, %s684
    %p686 = scmp.eq.s32.totalorder %s88, 0
    %p687 = por %p685, %p686
    %s689 = sadd.s32 %s688, 1
    %p692 = scmp.eq.s32.totalorder %s82, 2
    %p693 = scmp.ne.s32.totalorder %s688, %s690
    %p694 = scmp.eq.s32.totalorder %s82, 0
    %p695 = por %p693, %p694
    %p696 = scmp.ne.s32.totalorder %s688, %s690
    %p697 = scmp.eq.s32.totalorder %s87, 2
    %p698 = por %p696, %p697
    %p699 = scmp.ne.s32.totalorder %s690, %s691
    %p700 = scmp.eq.s32.totalorder %s87, 0
    %p701 = por %p699, %p700
    %p702 = scmp.ne.s32.totalorder %s690, %s691
    %p703 = scmp.eq.s32.totalorder %s88, 2
    %p704 = por %p702, %p703
    %p706 = scmp.ne.s32.totalorder %s691, %s705
    %p707 = scmp.eq.s32.totalorder %s88, 0
    %p708 = por %p706, %p707
    %s710 = sadd.s32 %s709, 1
    %p713 = scmp.eq.s32.totalorder %s82, 2
    %p714 = scmp.ne.s32.totalorder %s709, %s711
    %p715 = scmp.eq.s32.totalorder %s82, 0
    %p716 = por %p714, %p715
    %p717 = scmp.ne.s32.totalorder %s709, %s711
    %p718 = scmp.eq.s32.totalorder %s87, 2
    %p719 = por %p717, %p718
    %p720 = scmp.ne.s32.totalorder %s711, %s712
    %p721 = scmp.eq.s32.totalorder %s87, 0
    %p722 = por %p720, %p721
    %p723 = scmp.ne.s32.totalorder %s711, %s712
    %p724 = scmp.eq.s32.totalorder %s88, 2
    %p725 = por %p723, %p724
    %p727 = scmp.ne.s32.totalorder %s712, %s726
    %p728 = scmp.eq.s32.totalorder %s88, 0
    %p729 = por %p727, %p728
    %s731 = sadd.s32 %s730, 1
    %p734 = scmp.eq.s32.totalorder %s82, 2
    %p735 = scmp.ne.s32.totalorder %s730, %s732
    %p736 = scmp.eq.s32.totalorder %s82, 0
    %p737 = por %p735, %p736
    %p738 = scmp.ne.s32.totalorder %s730, %s732
    %p739 = scmp.eq.s32.totalorder %s87, 2
    %p740 = por %p738, %p739
    %p741 = scmp.ne.s32.totalorder %s732, %s733
    %p742 = scmp.eq.s32.totalorder %s87, 0
    %p743 = por %p741, %p742
    %p744 = scmp.ne.s32.totalorder %s732, %s733
    %p745 = scmp.eq.s32.totalorder %s88, 2
    %p746 = por %p744, %p745
    %p748 = scmp.ne.s32.totalorder %s733, %s747
    %p749 = scmp.eq.s32.totalorder %s88, 0
    %p750 = por %p748, %p749
    %s752 = sadd.s32 %s751, 1
    %p755 = scmp.eq.s32.totalorder %s82, 2
    %p756 = scmp.ne.s32.totalorder %s751, %s753
    %p757 = scmp.eq.s32.totalorder %s82, 0
    %p758 = por %p756, %p757
    %p759 = scmp.ne.s32.totalorder %s751, %s753
    %p760 = scmp.eq.s32.totalorder %s87, 2
    %p761 = por %p759, %p760
    %p762 = scmp.ne.s32.totalorder %s753, %s754
    %p763 = scmp.eq.s32.totalorder %s87, 0
    %p764 = por %p762, %p763
    %p765 = scmp.ne.s32.totalorder %s753, %s754
    %p766 = scmp.eq.s32.totalorder %s88, 2
    %p767 = por %p765, %p766
    %p769 = scmp.ne.s32.totalorder %s754, %s768
    %p770 = scmp.eq.s32.totalorder %s88, 0
    %p771 = por %p769, %p770
    %s773 = sadd.s32 %s772, 1
    %p776 = scmp.eq.s32.totalorder %s82, 2
    %p777 = scmp.ne.s32.totalorder %s772, %s774
    %p778 = scmp.eq.s32.totalorder %s82, 0
    %p779 = por %p777, %p778
    %p780 = scmp.ne.s32.totalorder %s772, %s774
    %p781 = scmp.eq.s32.totalorder %s87, 2
    %p782 = por %p780, %p781
    %p783 = scmp.ne.s32.totalorder %s774, %s775
    %p784 = scmp.eq.s32.totalorder %s87, 0
    %p785 = por %p783, %p784
    %p786 = scmp.ne.s32.totalorder %s774, %s775
    %p787 = scmp.eq.s32.totalorder %s88, 2
    %p788 = por %p786, %p787
    %p790 = scmp.ne.s32.totalorder %s775, %s789
    %p791 = scmp.eq.s32.totalorder %s88, 0
    %p792 = por %p790, %p791
    %s794 = sadd.s32 %s793, 1
    %p797 = scmp.eq.s32.totalorder %s82, 2
    %p798 = scmp.ne.s32.totalorder %s793, %s795
    %p799 = scmp.eq.s32.totalorder %s82, 0
    %p800 = por %p798, %p799
    %p801 = scmp.ne.s32.totalorder %s793, %s795
    %p802 = scmp.eq.s32.totalorder %s87, 2
    %p803 = por %p801, %p802
    %p804 = scmp.ne.s32.totalorder %s795, %s796
    %p805 = scmp.eq.s32.totalorder %s87, 0
    %p806 = por %p804, %p805
    %p807 = scmp.ne.s32.totalorder %s795, %s796
    %p808 = scmp.eq.s32.totalorder %s88, 2
    %p809 = por %p807, %p808
    %p811 = scmp.ne.s32.totalorder %s796, %s810
    %p812 = scmp.eq.s32.totalorder %s88, 0
    %p813 = por %p811, %p812
    %s815 = sadd.s32 %s814, 1
    %p818 = scmp.eq.s32.totalorder %s82, 2
    %p819 = scmp.ne.s32.totalorder %s814, %s816
    %p820 = scmp.eq.s32.totalorder %s82, 0
    %p821 = por %p819, %p820
    %p822 = scmp.ne.s32.totalorder %s814, %s816
    %p823 = scmp.eq.s32.totalorder %s87, 2
    %p824 = por %p822, %p823
    %p825 = scmp.ne.s32.totalorder %s816, %s817
    %p826 = scmp.eq.s32.totalorder %s87, 0
    %p827 = por %p825, %p826
    %p828 = scmp.ne.s32.totalorder %s816, %s817
    %p829 = scmp.eq.s32.totalorder %s88, 2
    %p830 = por %p828, %p829
    %p832 = scmp.ne.s32.totalorder %s817, %s831
    %p833 = scmp.eq.s32.totalorder %s88, 0
    %p834 = por %p832, %p833
    %s836 = sadd.s32 %s835, 1
    %p839 = scmp.eq.s32.totalorder %s82, 2
    %p840 = scmp.ne.s32.totalorder %s835, %s837
    %p841 = scmp.eq.s32.totalorder %s82, 0
    %p842 = por %p840, %p841
    %p843 = scmp.ne.s32.totalorder %s835, %s837
    %p844 = scmp.eq.s32.totalorder %s87, 2
    %p845 = por %p843, %p844
    %p846 = scmp.ne.s32.totalorder %s837, %s838
    %p847 = scmp.eq.s32.totalorder %s87, 0
    %p848 = por %p846, %p847
    %p849 = scmp.ne.s32.totalorder %s837, %s838
    %p850 = scmp.eq.s32.totalorder %s88, 2
    %p851 = por %p849, %p850
    %p853 = scmp.ne.s32.totalorder %s838, %s852
    %p854 = scmp.eq.s32.totalorder %s88, 0
    %p855 = por %p853, %p854
    %s857 = sadd.s32 %s856, 1
    %p860 = scmp.eq.s32.totalorder %s82, 2
    %p861 = scmp.ne.s32.totalorder %s856, %s858
    %p862 = scmp.eq.s32.totalorder %s82, 0
    %p863 = por %p861, %p862
    %p864 = scmp.ne.s32.totalorder %s856, %s858
    %p865 = scmp.eq.s32.totalorder %s87, 2
    %p866 = por %p864, %p865
    %p867 = scmp.ne.s32.totalorder %s858, %s859
    %p868 = scmp.eq.s32.totalorder %s87, 0
    %p869 = por %p867, %p868
    %p870 = scmp.ne.s32.totalorder %s858, %s859
    %p871 = scmp.eq.s32.totalorder %s88, 2
    %p872 = por %p870, %p871
    %p874 = scmp.ne.s32.totalorder %s859, %s873
    %p875 = scmp.eq.s32.totalorder %s88, 0
    %p876 = por %p874, %p875
    %s878 = sadd.s32 %s877, 1
    %p881 = scmp.eq.s32.totalorder %s82, 2
    %p882 = scmp.ne.s32.totalorder %s877, %s879
    %p883 = scmp.eq.s32.totalorder %s82, 0
    %p884 = por %p882, %p883
    %p885 = scmp.ne.s32.totalorder %s877, %s879
    %p886 = scmp.eq.s32.totalorder %s87, 2
    %p887 = por %p885, %p886
    %p888 = scmp.ne.s32.totalorder %s879, %s880
    %p889 = scmp.eq.s32.totalorder %s87, 0
    %p890 = por %p888, %p889
    %p891 = scmp.ne.s32.totalorder %s879, %s880
    %p892 = scmp.eq.s32.totalorder %s88, 2
    %p893 = por %p891, %p892
    %p895 = scmp.ne.s32.totalorder %s880, %s894
    %p896 = scmp.eq.s32.totalorder %s88, 0
    %p897 = por %p895, %p896
    %s898 = ssub.s32 %s90, %s97
    %s899 = ssub.s32 %s89, %s101
    %s900 = sor.u32 %s898, %s899
    %p901 = scmp.eq.s32.totalorder %s900, 0
    %s903 = sadd.s32 %s902, 1
    %s904 = scalar_select %p901, %s902, %s903
    %p907 = pneg %p901
    %p908 = scmp.eq.s32.totalorder %s82, 2
    %p909 = por %p907, %p908
    %p910 = scmp.ne.s32.totalorder %s902, %s905
    %p911 = scmp.eq.s32.totalorder %s82, 0
    %p912 = por %p910, %p911
    %p913 = scmp.ne.s32.totalorder %s902, %s905
    %p914 = scmp.eq.s32.totalorder %s87, 2
    %p915 = por %p913, %p914
    %p916 = scmp.ne.s32.totalorder %s905, %s906
    %p917 = scmp.eq.s32.totalorder %s87, 0
    %p918 = por %p916, %p917
    %p919 = scmp.ne.s32.totalorder %s905, %s906
    %p920 = scmp.eq.s32.totalorder %s88, 2
    %p921 = por %p919, %p920
    %p923 = scmp.ne.s32.totalorder %s906, %s922
    %p924 = scmp.eq.s32.totalorder %s88, 0
    %p925 = por %p923, %p924
    %s926 = ssub.s32 %s90, %s97
    %s927 = ssub.s32 %s89, %s101
    %s928 = sor.u32 %s926, %s927
    %p929 = scmp.eq.s32.totalorder %s928, 0
    %s931 = sadd.s32 %s930, 1
    %s932 = scalar_select %p929, %s930, %s931
    %p935 = pneg %p929
    %p936 = scmp.eq.s32.totalorder %s82, 2
    %p937 = por %p935, %p936
    %p938 = scmp.ne.s32.totalorder %s930, %s933
    %p939 = scmp.eq.s32.totalorder %s82, 0
    %p940 = por %p938, %p939
    %p941 = scmp.ne.s32.totalorder %s930, %s933
    %p942 = scmp.eq.s32.totalorder %s87, 2
    %p943 = por %p941, %p942
    %p944 = scmp.ne.s32.totalorder %s933, %s934
    %p945 = scmp.eq.s32.totalorder %s87, 0
    %p946 = por %p944, %p945
    %p947 = scmp.ne.s32.totalorder %s933, %s934
    %p948 = scmp.eq.s32.totalorder %s88, 2
    %p949 = por %p947, %p948
    %p951 = scmp.ne.s32.totalorder %s934, %s950
    %p952 = scmp.eq.s32.totalorder %s88, 0
    %p953 = por %p951, %p952
    %p954 = scmp.le.s32.totalorder 1, %s82
    %p955 = scmp.lt.s32.totalorder %s82, 4
    %p956 = pnand %p954, %p955
    %p957 = pneg %p956
    // Predicated region
    $region9: #{forward.1} parent=5 // pred_check
      _
    $region10: #{forward.1} parent=5 // pred_check_branch
      %959 = sbr.rel (%p956) target = $region12
    $region11: #{forward.1} parent=5 // pred_region
      %s960 = ssub.s32 %s82, 1
      // Predicated region
      $region13: #{forward.1} parent=11 // pred_check
        %p961 = pneg %p120
      $region14: #{forward.1} parent=11 // pred_check_branch
        %963 = sbr.rel (%p961) target = $region16
      $region15: #{forward.1} parent=11 // pred_region
        %s964 = smul.u32 2, %s91
        %p965 = scmp.lt.s32.totalorder %s964, 1
        %s966 = scalar_select %p965, %s964, 1
        %s967 = smul.addr %s966, 8
        %s968 = scalar_lea.vmem %s1, %s967
        %s969 = smul.u32 2, %s91
      $region16: #{forward.1} parent=11 // pred_fallthru
        _
      // Predicated region
      $region17: #{forward.1} parent=11 // pred_check
        %p970 = pneg %p146
      $region18: #{forward.1} parent=11 // pred_check_branch
        %972 = sbr.rel (%p970) target = $region20
      $region19: #{forward.1} parent=11 // pred_region
        %p973 = scmp.lt.s32.totalorder %s91, 0
        %s974 = scalar_select %p973, %s91, 0
        %s975 = smul.addr %s974, 2
        %s976 = scalar_lea.vmem %s3, %s975
      $region20: #{forward.1} parent=11 // pred_fallthru
        _
      // Predicated region
      $region21: #{forward.1} parent=11 // pred_check
        %p977 = pneg %p172
      $region22: #{forward.1} parent=11 // pred_check_branch
        %979 = sbr.rel (%p977) target = $region24
      $region23: #{forward.1} parent=11 // pred_region
        %p980 = scmp.lt.s32.totalorder %s91, 0
        %s981 = scalar_select %p980, %s91, 0
        %s982 = smul.addr %s981, 2
        %s983 = scalar_lea.vmem %s5, %s982
      $region24: #{forward.1} parent=11 // pred_fallthru
        _
      // Predicated region
      $region25: #{forward.1} parent=11 // pred_check
        %p984 = pneg %p198
      $region26: #{forward.1} parent=11 // pred_check_branch
        %986 = sbr.rel (%p984) target = $region28
      $region27: #{forward.1} parent=11 // pred_region
        %p987 = scmp.lt.s32.totalorder %s91, 0
        %s988 = scalar_select %p987, %s91, 0
        %s989 = smul.addr %s988, 2
        %s990 = scalar_lea.vmem %s7, %s989
      $region28: #{forward.1} parent=11 // pred_fallthru
        _
      // Predicated region
      $region29: #{forward.1} parent=11 // pred_check
        %p991 = pneg %p224
      $region30: #{forward.1} parent=11 // pred_check_branch
        %993 = sbr.rel (%p991) target = $region32
      $region31: #{forward.1} parent=11 // pred_region
        %s994 = smul.u32 2, %s91
        %p995 = scmp.lt.s32.totalorder %s994, 1
        %s996 = scalar_select %p995, %s994, 1
        %s997 = smul.addr %s996, 8
        %s998 = scalar_lea.vmem %s9, %s997
        %s999 = smul.u32 2, %s91
      $region32: #{forward.1} parent=11 // pred_fallthru
        _
      // Predicated region
      $region33: #{forward.1} parent=11 // pred_check
        %p1000 = pneg %p250
      $region34: #{forward.1} parent=11 // pred_check_branch
        %1002 = sbr.rel (%p1000) target = $region36
      $region35: #{forward.1} parent=11 // pred_region
        %s1003 = smul.u32 2, %s91
        %p1004 = scmp.lt.s32.totalorder %s1003, 1
        %s1005 = scalar_select %p1004, %s1003, 1
        %s1006 = smul.addr %s1005, 8
        %s1007 = scalar_lea.vmem %s11, %s1006
        %s1008 = smul.u32 2, %s91
      $region36: #{forward.1} parent=11 // pred_fallthru
        _
      // Predicated region
      $region37: #{forward.1} parent=11 // pred_check
        %p1009 = pneg %p276
      $region38: #{forward.1} parent=11 // pred_check_branch
        %1011 = sbr.rel (%p1009) target = $region40
      $region39: #{forward.1} parent=11 // pred_region
        %s1012 = smul.u32 2, %s91
        %p1013 = scmp.lt.s32.totalorder %s1012, 1
        %s1014 = scalar_select %p1013, %s1012, 1
        %s1015 = smul.addr %s1014, 8
        %s1016 = scalar_lea.vmem %s13, %s1015
        %s1017 = smul.u32 2, %s91
      $region40: #{forward.1} parent=11 // pred_fallthru
        _
      // Predicated region
      $region41: #{forward.1} parent=11 // pred_check
        %p1018 = pneg %p302
      $region42: #{forward.1} parent=11 // pred_check_branch
        %1020 = sbr.rel (%p1018) target = $region44
      $region43: #{forward.1} parent=11 // pred_region
        %s1021 = smul.u32 2, %s91
        %p1022 = scmp.lt.s32.totalorder %s1021, 1
        %s1023 = scalar_select %p1022, %s1021, 1
        %s1024 = smul.addr %s1023, 8
        %s1025 = scalar_lea.vmem %s15, %s1024
        %s1026 = smul.u32 2, %s91
      $region44: #{forward.1} parent=11 // pred_fallthru
        _
      // Predicated region
      $region45: #{forward.1} parent=11 // pred_check
        %p1027 = pneg %p323
      $region46: #{forward.1} parent=11 // pred_check_branch
        %1029 = sbr.rel (%p1027) target = $region48
      $region47: #{forward.1} parent=11 // pred_region
        _
      $region48: #{forward.1} parent=11 // pred_fallthru
        _
      // Predicated region
      $region49: #{forward.1} parent=11 // pred_check
        %p1030 = pneg %p344
      $region50: #{forward.1} parent=11 // pred_check_branch
        %1032 = sbr.rel (%p1030) target = $region52
      $region51: #{forward.1} parent=11 // pred_region
        _
      $region52: #{forward.1} parent=11 // pred_fallthru
        _
      // Predicated region
      $region53: #{forward.1} parent=11 // pred_check
        %p1033 = pneg %p365
      $region54: #{forward.1} parent=11 // pred_check_branch
        %1035 = sbr.rel (%p1033) target = $region56
      $region55: #{forward.1} parent=11 // pred_region
        _
      $region56: #{forward.1} parent=11 // pred_fallthru
        _
      // Predicated region
      $region57: #{forward.1} parent=11 // pred_check
        %p1036 = pneg %p386
      $region58: #{forward.1} parent=11 // pred_check_branch
        %1038 = sbr.rel (%p1036) target = $region60
      $region59: #{forward.1} parent=11 // pred_region
        _
      $region60: #{forward.1} parent=11 // pred_fallthru
        _
      // Predicated region
      $region61: #{forward.1} parent=11 // pred_check
        %p1039 = pneg %p407
      $region62: #{forward.1} parent=11 // pred_check_branch
        %1041 = sbr.rel (%p1039) target = $region64
      $region63: #{forward.1} parent=11 // pred_region
        _
      $region64: #{forward.1} parent=11 // pred_fallthru
        _
      // Predicated region
      $region65: #{forward.1} parent=11 // pred_check
        %p1042 = pneg %p428
      $region66: #{forward.1} parent=11 // pred_check_branch
        %1044 = sbr.rel (%p1042) target = $region68
      $region67: #{forward.1} parent=11 // pred_region
        _
      $region68: #{forward.1} parent=11 // pred_fallthru
        _
      // Predicated region
      $region69: #{forward.1} parent=11 // pred_check
        %p1045 = pneg %p449
      $region70: #{forward.1} parent=11 // pred_check_branch
        %1047 = sbr.rel (%p1045) target = $region72
      $region71: #{forward.1} parent=11 // pred_region
        _
      $region72: #{forward.1} parent=11 // pred_fallthru
        _
      // Predicated region
      $region73: #{forward.1} parent=11 // pred_check
        %p1048 = pneg %p470
      $region74: #{forward.1} parent=11 // pred_check_branch
        %1050 = sbr.rel (%p1048) target = $region76
      $region75: #{forward.1} parent=11 // pred_region
        _
      $region76: #{forward.1} parent=11 // pred_fallthru
        _
      // Predicated region
      $region77: #{forward.1} parent=11 // pred_check
        %p1051 = pneg %p491
      $region78: #{forward.1} parent=11 // pred_check_branch
        %1053 = sbr.rel (%p1051) target = $region80
      $region79: #{forward.1} parent=11 // pred_region
        _
      $region80: #{forward.1} parent=11 // pred_fallthru
        _
      // Predicated region
      $region81: #{forward.1} parent=11 // pred_check
        %p1054 = pneg %p512
      $region82: #{forward.1} parent=11 // pred_check_branch
        %1056 = sbr.rel (%p1054) target = $region84
      $region83: #{forward.1} parent=11 // pred_region
        _
      $region84: #{forward.1} parent=11 // pred_fallthru
        _
      // Predicated region
      $region85: #{forward.1} parent=11 // pred_check
        %p1057 = pneg %p533
      $region86: #{forward.1} parent=11 // pred_check_branch
        %1059 = sbr.rel (%p1057) target = $region88
      $region87: #{forward.1} parent=11 // pred_region
        _
      $region88: #{forward.1} parent=11 // pred_fallthru
        _
      // Predicated region
      $region89: #{forward.1} parent=11 // pred_check
        %p1060 = pneg %p554
      $region90: #{forward.1} parent=11 // pred_check_branch
        %1062 = sbr.rel (%p1060) target = $region92
      $region91: #{forward.1} parent=11 // pred_region
        _
      $region92: #{forward.1} parent=11 // pred_fallthru
        _
      // Predicated region
      $region93: #{forward.1} parent=11 // pred_check
        %p1063 = pneg %p575
      $region94: #{forward.1} parent=11 // pred_check_branch
        %1065 = sbr.rel (%p1063) target = $region96
      $region95: #{forward.1} parent=11 // pred_region
        _
      $region96: #{forward.1} parent=11 // pred_fallthru
        _
      // Predicated region
      $region97: #{forward.1} parent=11 // pred_check
        %p1066 = pneg %p596
      $region98: #{forward.1} parent=11 // pred_check_branch
        %1068 = sbr.rel (%p1066) target = $region100
      $region99: #{forward.1} parent=11 // pred_region
        _
      $region100: #{forward.1} parent=11 // pred_fallthru
        _
      // Predicated region
      $region101: #{forward.1} parent=11 // pred_check
        %p1069 = pneg %p617
      $region102: #{forward.1} parent=11 // pred_check_branch
        %1071 = sbr.rel (%p1069) target = $region104
      $region103: #{forward.1} parent=11 // pred_region
        _
      $region104: #{forward.1} parent=11 // pred_fallthru
        _
      // Predicated region
      $region105: #{forward.1} parent=11 // pred_check
        %p1072 = pneg %p638
      $region106: #{forward.1} parent=11 // pred_check_branch
        %1074 = sbr.rel (%p1072) target = $region108
      $region107: #{forward.1} parent=11 // pred_region
        _
      $region108: #{forward.1} parent=11 // pred_fallthru
        _
      // Predicated region
      $region109: #{forward.1} parent=11 // pred_check
        %p1075 = pneg %p659
      $region110: #{forward.1} parent=11 // pred_check_branch
        %1077 = sbr.rel (%p1075) target = $region112
      $region111: #{forward.1} parent=11 // pred_region
        _
      $region112: #{forward.1} parent=11 // pred_fallthru
        _
      // Predicated region
      $region113: #{forward.1} parent=11 // pred_check
        %p1078 = pneg %p680
      $region114: #{forward.1} parent=11 // pred_check_branch
        %1080 = sbr.rel (%p1078) target = $region116
      $region115: #{forward.1} parent=11 // pred_region
        _
      $region116: #{forward.1} parent=11 // pred_fallthru
        _
      // Predicated region
      $region117: #{forward.1} parent=11 // pred_check
        %p1081 = pneg %p701
      $region118: #{forward.1} parent=11 // pred_check_branch
        %1083 = sbr.rel (%p1081) target = $region120
      $region119: #{forward.1} parent=11 // pred_region
        _
      $region120: #{forward.1} parent=11 // pred_fallthru
        _
      // Predicated region
      $region121: #{forward.1} parent=11 // pred_check
        %p1084 = pneg %p722
      $region122: #{forward.1} parent=11 // pred_check_branch
        %1086 = sbr.rel (%p1084) target = $region124
      $region123: #{forward.1} parent=11 // pred_region
        _
      $region124: #{forward.1} parent=11 // pred_fallthru
        _
      // Predicated region
      $region125: #{forward.1} parent=11 // pred_check
        %p1087 = pneg %p743
      $region126: #{forward.1} parent=11 // pred_check_branch
        %1089 = sbr.rel (%p1087) target = $region128
      $region127: #{forward.1} parent=11 // pred_region
        _
      $region128: #{forward.1} parent=11 // pred_fallthru
        _
      // Predicated region
      $region129: #{forward.1} parent=11 // pred_check
        %p1090 = pneg %p764
      $region130: #{forward.1} parent=11 // pred_check_branch
        %1092 = sbr.rel (%p1090) target = $region132
      $region131: #{forward.1} parent=11 // pred_region
        _
      $region132: #{forward.1} parent=11 // pred_fallthru
        _
      // Predicated region
      $region133: #{forward.1} parent=11 // pred_check
        %p1093 = pneg %p785
      $region134: #{forward.1} parent=11 // pred_check_branch
        %1095 = sbr.rel (%p1093) target = $region136
      $region135: #{forward.1} parent=11 // pred_region
        _
      $region136: #{forward.1} parent=11 // pred_fallthru
        _
      // Predicated region
      $region137: #{forward.1} parent=11 // pred_check
        %p1096 = pneg %p806
      $region138: #{forward.1} parent=11 // pred_check_branch
        %1098 = sbr.rel (%p1096) target = $region140
      $region139: #{forward.1} parent=11 // pred_region
        _
      $region140: #{forward.1} parent=11 // pred_fallthru
        _
      // Predicated region
      $region141: #{forward.1} parent=11 // pred_check
        %p1099 = pneg %p827
      $region142: #{forward.1} parent=11 // pred_check_branch
        %1101 = sbr.rel (%p1099) target = $region144
      $region143: #{forward.1} parent=11 // pred_region
        _
      $region144: #{forward.1} parent=11 // pred_fallthru
        _
      // Predicated region
      $region145: #{forward.1} parent=11 // pred_check
        %p1102 = pneg %p848
      $region146: #{forward.1} parent=11 // pred_check_branch
        %1104 = sbr.rel (%p1102) target = $region148
      $region147: #{forward.1} parent=11 // pred_region
        _
      $region148: #{forward.1} parent=11 // pred_fallthru
        _
      // Predicated region
      $region149: #{forward.1} parent=11 // pred_check
        %p1105 = pneg %p869
      $region150: #{forward.1} parent=11 // pred_check_branch
        %1107 = sbr.rel (%p1105) target = $region152
      $region151: #{forward.1} parent=11 // pred_region
        _
      $region152: #{forward.1} parent=11 // pred_fallthru
        _
      // Predicated region
      $region153: #{forward.1} parent=11 // pred_check
        %p1108 = pneg %p890
      $region154: #{forward.1} parent=11 // pred_check_branch
        %1110 = sbr.rel (%p1108) target = $region156
      $region155: #{forward.1} parent=11 // pred_region
        _
      $region156: #{forward.1} parent=11 // pred_fallthru
        _
    $region12: #{forward.1} parent=5 // pred_fallthru
      _
    %p1111 = scmp.lt.s32.totalorder %s82, 3
    // Predicated region
    $region157: #{forward.1} parent=5 // pred_check
      %p1112 = pneg %p1111
    $region158: #{forward.1} parent=5 // pred_check_branch
      %1114 = sbr.rel (%p1112) target = $region160
    $region159: #{forward.1} parent=5 // pred_region
      _
    $region160: #{forward.1} parent=5 // pred_fallthru
      _
    %p1115 = scmp.le.s32.totalorder 1, %s82
    %p1116 = scmp.lt.s32.totalorder %s82, 4
    %p1117 = pnand %p1115, %p1116
    %p1118 = pneg %p1117
    // Predicated region
    $region161: #{forward.1} parent=5 // pred_check
      _
    $region162: #{forward.1} parent=5 // pred_check_branch
      %1120 = sbr.rel (%p1117) target = $region164
    $region163: #{forward.1} parent=5 // pred_region
      %s1121 = ssub.s32 %s82, 1
      %s1122 = smul.u32 2, %s91
      %p1123 = scmp.lt.s32.totalorder %s1122, 1
      %s1124 = scalar_select %p1123, %s1122, 1
      %s1125 = smul.addr %s1124, 8
      %s1126 = scalar_lea.vmem %s1, %s1125
      %p1127 = pneg %p120
      %p1128 = pneg %p117
      %p1129 = scmp.lt.s32.totalorder %s91, 0
      %s1130 = scalar_select %p1129, %s91, 0
      %s1131 = smul.addr %s1130, 2
      %s1132 = scalar_lea.vmem %s3, %s1131
      %p1133 = pneg %p146
      %p1134 = pneg %p143
      %p1135 = scmp.lt.s32.totalorder %s91, 0
      %s1136 = scalar_select %p1135, %s91, 0
      %s1137 = smul.addr %s1136, 2
      %s1138 = scalar_lea.vmem %s5, %s1137
      %p1139 = pneg %p172
      %p1140 = pneg %p169
      %p1141 = scmp.lt.s32.totalorder %s91, 0
      %s1142 = scalar_select %p1141, %s91, 0
      %s1143 = smul.addr %s1142, 2
      %s1144 = scalar_lea.vmem %s7, %s1143
      %p1145 = pneg %p198
      %p1146 = pneg %p195
      %s1147 = smul.u32 2, %s91
      %p1148 = scmp.lt.s32.totalorder %s1147, 1
      %s1149 = scalar_select %p1148, %s1147, 1
      %s1150 = smul.addr %s1149, 8
      %s1151 = scalar_lea.vmem %s9, %s1150
      %p1152 = pneg %p224
      %p1153 = pneg %p221
      %s1154 = smul.u32 2, %s91
      %p1155 = scmp.lt.s32.totalorder %s1154, 1
      %s1156 = scalar_select %p1155, %s1154, 1
      %s1157 = smul.addr %s1156, 8
      %s1158 = scalar_lea.vmem %s11, %s1157
      %p1159 = pneg %p250
      %p1160 = pneg %p247
      %s1161 = smul.u32 2, %s91
      %p1162 = scmp.lt.s32.totalorder %s1161, 1
      %s1163 = scalar_select %p1162, %s1161, 1
      %s1164 = smul.addr %s1163, 8
      %s1165 = scalar_lea.vmem %s13, %s1164
      %p1166 = pneg %p276
      %p1167 = pneg %p273
      %s1168 = smul.u32 2, %s91
      %p1169 = scmp.lt.s32.totalorder %s1168, 1
      %s1170 = scalar_select %p1169, %s1168, 1
      %s1171 = smul.addr %s1170, 8
      %s1172 = scalar_lea.vmem %s15, %s1171
      %p1173 = pneg %p302
      %p1174 = pneg %p299
      %p1175 = pneg %p323
      %p1176 = pneg %p320
      %p1177 = pneg %p344
      %p1178 = pneg %p341
      %p1179 = pneg %p365
      %p1180 = pneg %p362
      %p1181 = pneg %p386
      %p1182 = pneg %p383
      %p1183 = pneg %p407
      %p1184 = pneg %p404
      %p1185 = pneg %p428
      %p1186 = pneg %p425
      %p1187 = pneg %p449
      %p1188 = pneg %p446
      %p1189 = pneg %p470
      %p1190 = pneg %p467
      %p1191 = pneg %p491
      %p1192 = pneg %p488
      %p1193 = pneg %p512
      %p1194 = pneg %p509
      %p1195 = pneg %p533
      %p1196 = pneg %p530
      %p1197 = pneg %p554
      %p1198 = pneg %p551
      %p1199 = pneg %p575
      %p1200 = pneg %p572
      %p1201 = pneg %p596
      %p1202 = pneg %p593
      %p1203 = pneg %p617
      %p1204 = pneg %p614
      %p1205 = pneg %p638
      %p1206 = pneg %p635
      %p1207 = pneg %p659
      %p1208 = pneg %p656
      %p1209 = pneg %p680
      %p1210 = pneg %p677
      %p1211 = pneg %p701
      %p1212 = pneg %p698
      %p1213 = pneg %p722
      %p1214 = pneg %p719
      %p1215 = pneg %p743
      %p1216 = pneg %p740
      %p1217 = pneg %p764
      %p1218 = pneg %p761
      %p1219 = pneg %p785
      %p1220 = pneg %p782
      %p1221 = pneg %p806
      %p1222 = pneg %p803
      %p1223 = pneg %p827
      %p1224 = pneg %p824
      %p1225 = pneg %p848
      %p1226 = pneg %p845
      %p1227 = pneg %p869
      %p1228 = pneg %p866
      %p1229 = pneg %p890
      %p1230 = pneg %p887
      %p1231 = pneg %p918
      %p1232 = pneg %p915
      %p1233 = scmp.lt.s32.totalorder %s92, 2
      %s1234 = scalar_select %p1233, %s92, 2
      %p1235 = scmp.lt.s32.totalorder %s91, 0
      %s1236 = scalar_select %p1235, %s91, 0
      %s1237 = sadd.s32 %s1236, %s1234
      %s1238 = smul.addr %s1237, 2
      %s1239 = scalar_lea.vmem %s73, %s1238
      %p1240 = pneg %p946
      %p1241 = pneg %p943
      %p1242 = scmp.lt.s32.totalorder %s92, 2
      %s1243 = scalar_select %p1242, %s92, 2
      %p1244 = scmp.lt.s32.totalorder %s91, 0
      %s1245 = scalar_select %p1244, %s91, 0
      %s1246 = smul.addr %s1243, 2
      %s1247 = sadd.s32 %s1245, %s1246
      %s1248 = smul.addr %s1247, 2
      %s1249 = scalar_lea.vmem %s75, %s1248
      %s1250 = smul.u32 2, %s91
      %p1251 = scmp.lt.s32.totalorder %s1250, 1
      %s1252 = scalar_select %p1251, %s1250, 1
      %s1253 = smul.addr %s1252, 8
      %s1254 = scalar_lea.vmem %s1, %s1253
      %s1255 = smul.u32 2, %s91
      %p1256 = scmp.lt.s32.totalorder %s91, 0
      %s1257 = scalar_select %p1256, %s91, 0
      %s1258 = smul.addr %s1257, 2
      %s1259 = scalar_lea.vmem %s3, %s1258
      %p1260 = scmp.lt.s32.totalorder %s91, 0
      %s1261 = scalar_select %p1260, %s91, 0
      %s1262 = smul.addr %s1261, 2
      %s1263 = scalar_lea.vmem %s5, %s1262
      %p1264 = scmp.lt.s32.totalorder %s91, 0
      %s1265 = scalar_select %p1264, %s91, 0
      %s1266 = smul.addr %s1265, 2
      %s1267 = scalar_lea.vmem %s7, %s1266
      %s1268 = smul.u32 2, %s91
      %p1269 = scmp.lt.s32.totalorder %s1268, 1
      %s1270 = scalar_select %p1269, %s1268, 1
      %s1271 = smul.addr %s1270, 8
      %s1272 = scalar_lea.vmem %s9, %s1271
      %s1273 = smul.u32 2, %s91
      %s1274 = smul.u32 2, %s91
      %p1275 = scmp.lt.s32.totalorder %s1274, 1
      %s1276 = scalar_select %p1275, %s1274, 1
      %s1277 = smul.addr %s1276, 8
      %s1278 = scalar_lea.vmem %s11, %s1277
      %s1279 = smul.u32 2, %s91
      %s1280 = smul.u32 2, %s91
      %p1281 = scmp.lt.s32.totalorder %s1280, 1
      %s1282 = scalar_select %p1281, %s1280, 1
      %s1283 = smul.addr %s1282, 8
      %s1284 = scalar_lea.vmem %s13, %s1283
      %s1285 = smul.u32 2, %s91
      %s1286 = smul.u32 2, %s91
      %p1287 = scmp.lt.s32.totalorder %s1286, 1
      %s1288 = scalar_select %p1287, %s1286, 1
      %s1289 = smul.addr %s1288, 8
      %s1290 = scalar_lea.vmem %s15, %s1289
      %s1291 = smul.u32 2, %s91
      %p1292 = scmp.lt.s32.totalorder %s92, 2
      %s1293 = scalar_select %p1292, %s92, 2
      %p1294 = scmp.lt.s32.totalorder %s91, 0
      %s1295 = scalar_select %p1294, %s91, 0
      %s1296 = sadd.s32 %s1295, %s1293
      %s1297 = smul.addr %s1296, 2
      %s1298 = scalar_lea.vmem %s73, %s1297
      %p1299 = scmp.lt.s32.totalorder %s92, 2
      %s1300 = scalar_select %p1299, %s92, 2
      %p1301 = scmp.lt.s32.totalorder %s91, 0
      %s1302 = scalar_select %p1301, %s91, 0
      %s1303 = smul.addr %s1300, 2
      %s1304 = sadd.s32 %s1302, %s1303
      %s1305 = smul.addr %s1304, 2
      %s1306 = scalar_lea.vmem %s75, %s1305
      %p1307 = scmp.eq.s32.totalorder %s92, 0
      // Predicated region
      $region165: #{forward.1} parent=163 // pred_check
        %p1308 = pneg %p1307
      $region166: #{forward.1} parent=163 // pred_check_branch
        %1310 = sbr.rel (%p1308) target = $region168
      $region167: #{forward.1} parent=163 // pred_region
        %vm1311 = vcmask 254976
        %1312 = vst.msk [vmem:[#allocation2] sm:$0x3] %vm1311, 0.0
        %1313 = vst.msk [vmem:[#allocation3] sm:$0x3] %vm1311, 0.0
        %v1314 = vld [vmem:[%s19] sm:$0x1]
        %v1316 = vlaneseq
        %v1317 = vshrl.u32 %v1316, 7
        %v1318 = vsub.s32 0, %v1317
        %v1319 = vrot.slane %v1314, %v1318
        %1321 = vst.msk [vmem:[#allocation4] sm:$0x3] %vm1311, %v1319
        %v1322 = vld [vmem:[%s17] sm:$0xff]
        %v1323 = vld [vmem:[%s17 + $0x8] sm:$0x3f]
        %v1324 = vld [vmem:[%s1254] sm:$0xff]
        %v1325 = vld [vmem:[%s1254 + $0x8] sm:$0xff]
        %v1328 = vrot.slane %v1324, 2
        %v1329 = vrot.slane %v1325, 2
        %vm1332 = vcmask 1045504
        %v1333 = vsel %vm1332, %v1323, %v1328
        %v1334 = vsel %vm1332, %v1323, %v1329
        %vm1335 = vcmask 261120
        %1336 = vst.msk [vmem:[#allocation5] sm:$0xff] %vm1335, %v1322
        %1337 = vst.msk [vmem:[#allocation5 + $0x8] sm:$0xff] %vm1335, %v1333
        %vm1338 = vcmask 259072
        %1339 = vst.msk [vmem:[#allocation5 + $0x10] sm:$0x3f] %vm1338, %v1328
        %1340 = vst.msk [vmem:[#allocation5 + $0x18] sm:$0xff] %vm1335, %v1322
        %1341 = vst.msk [vmem:[#allocation5 + $0x20] sm:$0xff] %vm1335, %v1334
        %1342 = vst.msk [vmem:[#allocation5 + $0x28] sm:$0x3f] %vm1338, %v1329
      $region168: #{forward.1} parent=163 // pred_fallthru
        _
      %v1343 = vld [vmem:[#allocation4] sm:$0x3]
      %v1344 = vld [vmem:[#allocation5] sm:$0xff]
      %v1345 = vld [vmem:[#allocation5 + $0x8] sm:$0xff]
      %v1346 = vld [vmem:[#allocation5 + $0x10] sm:$0x3f]
      %v1347 = vld [vmem:[#allocation5 + $0x18] sm:$0xff]
      %v1348 = vld [vmem:[#allocation5 + $0x20] sm:$0xff]
      %v1349 = vld [vmem:[#allocation5 + $0x28] sm:$0x3f]
      %v1350 = vld [vmem:[%s1272] sm:$0xff]
      %v1351 = vld [vmem:[%s1272 + $0x8] sm:$0xff]
      %v1352 = vld [vmem:[%s1278] sm:$0xff]
      %v1353 = vld [vmem:[%s1278 + $0x8] sm:$0xff]
      %v1354 = vld [vmem:[%s1259] sm:$0x3]
      %v1355 = vld [vmem:[%s25] sm:$0xff]
      %v1356 = vld [vmem:[%s25 + $0x8] sm:$0xff]
      %v1357 = vld [vmem:[%s25 + $0x10] sm:$0xff]
      %v1358 = vld [vmem:[%s25 + $0x18] sm:$0xff]
      %vm1359 = vcmask 261120
      %v1361 = vsel %vm1359, %v1343, 0
      %1363 = vmatprep.subr.mxu0 0.0
      %1364 = vmatpush1.msra.mxu0 0.0
      %1365 = vmatprep.subr.mxu0 0.0
      %1366 = vmatpush1.msra.mxu0 0.0
      %1367 = vmatprep.subr.mxu0 0.0
      %1368 = vmatpush1.msra.mxu0 0.0
      %1369 = vmatprep.subr.mxu0 0.0
      %1370 = vmatpush1.msra.mxu0 0.0
      %1371 = vmatprep.subr.mxu0 0.0
      %1372 = vmatpush1.msra.mxu0 0.0
      %1373 = vmatprep.subr.mxu0 0.0
      %1374 = vmatpush1.msra.mxu0 0.0
      %1375 = vmatprep.subr.mxu0 0.0
      %1376 = vmatpush1.msra.mxu0 0.0
      %1377 = vmatprep.subr.mxu0 0.0
      %1378 = vmatpush1.msra.mxu0 0.0
      %1379 = vmatprep.subr.mxu0 0.0
      %1380 = vmatpush1.msra.mxu0 0.0
      %1381 = vmatprep.subr.mxu0 0.0
      %1382 = vmatpush1.msra.mxu0 0.0
      %1383 = vmatprep.subr.mxu0 0.0
      %1384 = vmatpush1.msra.mxu0 0.0
      %1385 = vmatprep.subr.mxu0 0.0
      %1386 = vmatpush1.msra.mxu0 0.0
      %1387 = vmatprep.subr.mxu0 0.0
      %1388 = vmatpush1.msra.mxu0 %v1358
      %1389 = vmatprep.subr.mxu0 0.0
      %1390 = vmatpush1.msra.mxu0 %v1357
      %1391 = vmatprep.subr.mxu0 0.0
      %1392 = vmatpush1.msra.mxu0 %v1356
      %1393 = vmatprep.subr.mxu0 0.0
      %1394 = vmatpush1.msra.mxu0 %v1355
      %1395 = vmatprep.subr.mxu0 0.0
      %1396 = vmatpush2.msra.mxu0 0.0
      %1397 = vmatprep.subr.mxu0 0.0
      %1398 = vmatpush2.msra.mxu0 0.0
      %1399 = vmatprep.subr.mxu0 0.0
      %1400 = vmatpush2.msra.mxu0 0.0
      %1401 = vmatprep.subr.mxu0 0.0
      %1402 = vmatpush2.msra.mxu0 0.0
      %1403 = vmatprep.subr.mxu0 0.0
      %1404 = vmatpush2.msra.mxu0 0.0
      %1405 = vmatprep.subr.mxu0 0.0
      %1406 = vmatpush2.msra.mxu0 0.0
      %1407 = vmatprep.subr.mxu0 0.0
      %1408 = vmatpush2.msra.mxu0 0.0
      %1409 = vmatprep.subr.mxu0 0.0
      %1410 = vmatpush2.msra.mxu0 0.0
      %1411 = vmatprep.subr.mxu0 0.0
      %1412 = vmatpush2.msra.mxu0 0.0
      %1413 = vmatprep.subr.mxu0 0.0
      %1414 = vmatpush2.msra.mxu0 0.0
      %1415 = vmatprep.subr.mxu0 0.0
      %1416 = vmatpush2.msra.mxu0 0.0
      %1417 = vmatprep.subr.mxu0 0.0
      %1418 = vmatpush2.msra.mxu0 0.0
      %1419 = vmatprep.subr.mxu0 0.0
      %1420 = vmatpush2.msra.mxu0 0.0
      %1421 = vmatprep.subr.mxu0 0.0
      %1422 = vmatpush2.msra.mxu0 0.0
      %1423 = vmatprep.subr.mxu0 0.0
      %1424 = vmatpush2.msra.mxu0 0.0
      %1425 = vmatprep.subr.mxu0 0.0
      %1426 = vmatpush2.msra.mxu0 0.0
      %1427 = vmatprep.mubr.f32.mxu0 0.0
      %1428 = vmatmul.mubr.f32.gmra.mxu0 %v1361
      %v1429 = vpop.f32.mrf.mxu0
      %v1430 = vadd.f32 0.0, %v1429
      %v1431 = vpop.f32.mrf.mxu0
      %1432 = vdwg.mxu0
      %v1435 = vunpack.c.l.s4 1966171168
      %v1436 = vunpack.c.0.s8 %v1435
      %v1437 = vlaneseq
      %v1438 = vshrl.u32 %v1437, 7
      %v1439 = vsub.s32 %v1436, %v1438
      %v1440 = vrot.slane %v1430, %v1439
      %v1441 = vcombine.high %v1440, %v1440
      %v1443 = vunpack.c.l.s4 1966171168
      %v1444 = vunpack.c.0.s8 %v1443
      %v1445 = vlaneseq
      %v1446 = vshrl.u32 %v1445, 7
      %v1447 = vsub.s32 %v1444, %v1446
      %v1448 = vrot.slane %v1440, %v1447
      %v1450 = vunpack.c.l.s4 1966171168
      %v1451 = vunpack.c.0.s8 %v1450
      %v1452 = vlaneseq
      %v1453 = vshrl.u32 %v1452, 7
      %v1454 = vsub.s32 %v1451, %v1453
      %v1455 = vrot.slane %v1441, %v1454
      %v1456 = vlaneseq
      %v1457 = vshrl.u32 %v1456, 7
      %v1458 = vsub.s32 0, %v1457
      %v1459 = vrot.slane %v1448, %v1458
      %v1460 = vlaneseq
      %v1461 = vshrl.u32 %v1460, 7
      %v1462 = vsub.s32 0, %v1461
      %v1463 = vrot.slane %v1455, %v1462
      %v1466 = vmul.f32 %v1459, %v1350
      %v1467 = vmul.f32 %v1463, %v1351
      %v1468 = vsel %vm1359, %v1466, 0.0
      %1469 = vadd.xlane.f32.xlu0 %v1468
      %v1470 = vpop.xlane.xlu0 %1469
      %v1471 = vsel %vm1359, %v1467, 0.0
      %1472 = vadd.xlane.f32.xlu0 %v1471
      %v1473 = vpop.xlane.xlu0 %1472
      %v1475 = vlaneseq
      %v1476 = vshrl.u32 %v1475, 7
      %v1477 = vsub.s32 0, %v1476
      %v1478 = vrot.slane %v1354, %v1477
      %1480 = vbcast.lane.b32.xlu0 %v1478, 256
      %v1481 = vpop.permute.xlu0 %1480
      %v1482 = vlaneseq
      %v1483 = vshrl.u32 %v1482, 7
      %v1484 = vsub.s32 1, %v1483
      %v1485 = vrot.slane %v1354, %v1484
      %1487 = vbcast.lane.b32.xlu0 %v1485, 256
      %v1488 = vpop.permute.xlu0 %1487
      %v1491 = vadd.f32 %v1470, %v1481
      %v1492 = vadd.f32 %v1473, %v1488
      %1495 = vset.pattern.permute.xlu0 0
      %1496 = vperm.xlu0 %1495, %v1491
      %v1497 = vpop.permute.xlu0 %1496
      %1498 = vset.pattern.permute.xlu0 0
      %1499 = vperm.xlu0 %1498, %v1492
      %v1500 = vpop.permute.xlu0 %1499
      %v1501 = vlaneseq
      %v1502 = vand.u32 %v1501, 127
      %v1503 = vlaneseq
      %v1504 = vshrl.u32 %v1503, 7
      %v1505 = vsub.s32 %v1502, %v1504
      %v1506 = vrot.slane %v1497, %v1505
      %v1507 = vlaneseq
      %v1508 = vshrl.u32 %v1507, 7
      %v1509 = vsub.s32 %v1502, %v1508
      %v1510 = vrot.slane %v1500, %v1509
      %vm1511 = vcmask 1041409
      %v1512 = vsel %vm1511, %v1510, %v1506
      %vm1514 = vcmask 58368
      %v1515 = vsel %vm1514, %v1512, -inf
      %1516 = vmax.xlane.f32.xlu0 %v1515
      %v1517 = vpop.xlane.xlu0 %1516
      %v1519 = vlaneseq
      %v1520 = vshrl.u32 %v1519, 7
      %v1521 = vsub.s32 0, %v1520
      %v1522 = vrot.slane %v1517, %v1521
      %v1523 = vlaneseq
      %v1524 = vshrl.u32 %v1523, 7
      %v1525 = vsub.s32 1, %v1524
      %v1526 = vrot.slane %v1517, %v1525
      %v1529 = vsub.f32 %v1491, %v1522
      %v1530 = vsub.f32 %v1492, %v1526
      %v1531 = vmul.f32 %v1529, 1.442695
      %v1532 = vpow.pop %v1531
      %v1533 = vmul.f32 %v1530, 1.442695
      %v1534 = vpow.pop %v1533
      %1537 = vset.pattern.permute.xlu0 0
      %1538 = vperm.xlu0 %1537, %v1532
      %v1539 = vpop.permute.xlu0 %1538
      %1540 = vset.pattern.permute.xlu0 0
      %1541 = vperm.xlu0 %1540, %v1534
      %v1542 = vpop.permute.xlu0 %1541
      %v1543 = vlaneseq
      %v1544 = vshrl.u32 %v1543, 7
      %v1545 = vsub.s32 %v1502, %v1544
      %v1546 = vrot.slane %v1539, %v1545
      %v1547 = vlaneseq
      %v1548 = vshrl.u32 %v1547, 7
      %v1549 = vsub.s32 %v1502, %v1548
      %v1550 = vrot.slane %v1542, %v1549
      %v1551 = vsel %vm1511, %v1550, %v1546
      %v1553 = vsel %vm1514, %v1551, 0.0
      %1554 = vadd.xlane.f32.xlu0 %v1553
      %v1555 = vpop.xlane.xlu0 %1554
      %v1556 = vrcp.pop %v1555
      %v1558 = vlaneseq
      %v1559 = vshrl.u32 %v1558, 7
      %v1560 = vsub.s32 0, %v1559
      %v1561 = vrot.slane %v1556, %v1560
      %v1562 = vlaneseq
      %v1563 = vshrl.u32 %v1562, 7
      %v1564 = vsub.s32 1, %v1563
      %v1565 = vrot.slane %v1556, %v1564
      %v1568 = vmul.f32 %v1532, %v1561
      %v1569 = vmul.f32 %v1534, %v1565
      %1571 = vset.pattern.permute.xlu0 0
      %1572 = vperm.xlu0 %1571, %v1568
      %v1573 = vpop.permute.xlu0 %1572
      %1576 = vset.pattern.permute.xlu0 0
      %1577 = vperm.xlu0 %1576, %v1569
      %v1578 = vpop.permute.xlu0 %1577
      %v1580 = vmul.f32 %v1573, %v1352
      %v1581 = vmul.f32 %v1578, %v1353
      %v1582 = vsel %vm1359, %v1580, 0.0
      %v1583 = vrot.slane %v1582, 4
      %v1584 = vadd.f32 %v1582, %v1583
      %v1585 = vrot.slane %v1584, 2
      %v1586 = vadd.f32 %v1584, %v1585
      %v1587 = vrot.slane %v1586, 1
      %v1588 = vadd.f32 %v1586, %v1587
      %v1589 = vsel %vm1359, %v1581, 0.0
      %v1590 = vrot.slane %v1589, 4
      %v1591 = vadd.f32 %v1589, %v1590
      %v1592 = vrot.slane %v1591, 2
      %v1593 = vadd.f32 %v1591, %v1592
      %v1594 = vrot.slane %v1593, 1
      %v1595 = vadd.f32 %v1593, %v1594
      %v1598 = vsel %vm1511, %v1595, %v1588
      %1599 = vrot.lane.b32.xlu0 %v1598, 32
      %v1600 = vpop.permute.xlu0 %1599
      %v1602 = vsel %vm1359, %v1343, %v1600
      %v1603 = vld [vmem:[%s29] sm:$0xff]
      %v1604 = vld [vmem:[%s29 + $0x8] sm:$0xff]
      %v1605 = vld [vmem:[%s29 + $0x10] sm:$0xff]
      %v1606 = vld [vmem:[%s29 + $0x18] sm:$0xff]
      %v1607 = vld [vmem:[%s29 + $0x20] sm:$0xff]
      %v1608 = vld [vmem:[%s29 + $0x28] sm:$0xff]
      %v1609 = vld [vmem:[%s29 + $0x30] sm:$0xff]
      %v1610 = vld [vmem:[%s29 + $0x38] sm:$0xff]
      %v1611 = vld [vmem:[%s31] sm:$0x1]
      %v1613 = vlaneseq
      %v1614 = vshrl.u32 %v1613, 7
      %v1615 = vsub.s32 0, %v1614
      %v1616 = vrot.slane %v1611, %v1615
      %vm1618 = vcmask 523264
      %v1620 = vsel %vm1618, %v1602, 0
      %1622 = vmatprep.subr.mxu0 0.0
      %1623 = vmatpush1.msra.mxu0 0.0
      %1624 = vmatprep.subr.mxu0 0.0
      %1625 = vmatpush1.msra.mxu0 0.0
      %1626 = vmatprep.subr.mxu0 0.0
      %1627 = vmatpush1.msra.mxu0 0.0
      %1628 = vmatprep.subr.mxu0 0.0
      %1629 = vmatpush1.msra.mxu0 0.0
      %1630 = vmatprep.subr.mxu0 0.0
      %1631 = vmatpush1.msra.mxu0 0.0
      %1632 = vmatprep.subr.mxu0 0.0
      %1633 = vmatpush1.msra.mxu0 0.0
      %1634 = vmatprep.subr.mxu0 0.0
      %1635 = vmatpush1.msra.mxu0 0.0
      %1636 = vmatprep.subr.mxu0 0.0
      %1637 = vmatpush1.msra.mxu0 0.0
      %1638 = vmatprep.subr.mxu0 0.0
      %1639 = vmatpush1.msra.mxu0 %v1610
      %1640 = vmatprep.subr.mxu0 0.0
      %1641 = vmatpush1.msra.mxu0 %v1609
      %1642 = vmatprep.subr.mxu0 0.0
      %1643 = vmatpush1.msra.mxu0 %v1608
      %1644 = vmatprep.subr.mxu0 0.0
      %1645 = vmatpush1.msra.mxu0 %v1607
      %1646 = vmatprep.subr.mxu0 0.0
      %1647 = vmatpush1.msra.mxu0 %v1606
      %1648 = vmatprep.subr.mxu0 0.0
      %1649 = vmatpush1.msra.mxu0 %v1605
      %1650 = vmatprep.subr.mxu0 0.0
      %1651 = vmatpush1.msra.mxu0 %v1604
      %1652 = vmatprep.subr.mxu0 0.0
      %1653 = vmatpush1.msra.mxu0 %v1603
      %1654 = vmatprep.subr.mxu0 0.0
      %1655 = vmatpush2.msra.mxu0 0.0
      %1656 = vmatprep.subr.mxu0 0.0
      %1657 = vmatpush2.msra.mxu0 0.0
      %1658 = vmatprep.subr.mxu0 0.0
      %1659 = vmatpush2.msra.mxu0 0.0
      %1660 = vmatprep.subr.mxu0 0.0
      %1661 = vmatpush2.msra.mxu0 0.0
      %1662 = vmatprep.subr.mxu0 0.0
      %1663 = vmatpush2.msra.mxu0 0.0
      %1664 = vmatprep.subr.mxu0 0.0
      %1665 = vmatpush2.msra.mxu0 0.0
      %1666 = vmatprep.subr.mxu0 0.0
      %1667 = vmatpush2.msra.mxu0 0.0
      %1668 = vmatprep.subr.mxu0 0.0
      %1669 = vmatpush2.msra.mxu0 0.0
      %1670 = vmatprep.subr.mxu0 0.0
      %1671 = vmatpush2.msra.mxu0 0.0
      %1672 = vmatprep.subr.mxu0 0.0
      %1673 = vmatpush2.msra.mxu0 0.0
      %1674 = vmatprep.subr.mxu0 0.0
      %1675 = vmatpush2.msra.mxu0 0.0
      %1676 = vmatprep.subr.mxu0 0.0
      %1677 = vmatpush2.msra.mxu0 0.0
      %1678 = vmatprep.subr.mxu0 0.0
      %1679 = vmatpush2.msra.mxu0 0.0
      %1680 = vmatprep.subr.mxu0 0.0
      %1681 = vmatpush2.msra.mxu0 0.0
      %1682 = vmatprep.subr.mxu0 0.0
      %1683 = vmatpush2.msra.mxu0 0.0
      %1684 = vmatprep.subr.mxu0 0.0
      %1685 = vmatpush2.msra.mxu0 0.0
      %1686 = vmatprep.mubr.f32.mxu0 0.0
      %1687 = vmatmul.mubr.f32.gmra.mxu0 %v1620
      %v1688 = vpop.f32.mrf.mxu0
      %v1689 = vadd.f32 %v1616, %v1688
      %v1690 = vpop.f32.mrf.mxu0
      %1691 = vdwg.mxu0
      %vm1692 = vcmask 254976
      %v1693 = vsel %vm1692, %v1689, 0.0
      %1694 = vadd.xlane.f32.xlu0 %v1693
      %v1695 = vpop.xlane.xlu0 %1694
      %v1696 = vrcp.pop 32.0
      %v1697 = vmul.f32 %v1695, %v1696
      %v1698 = vsub.f32 %v1689, %v1697
      %v1699 = vmul.f32 %v1698, %v1698
      %v1700 = vsel %vm1692, %v1699, 0.0
      %1701 = vadd.xlane.f32.xlu0 %v1700
      %v1702 = vpop.xlane.xlu0 %1701
      %v1703 = vmul.f32 %v1702, %v1696
      %v1704 = vadd.f32 %v1703, 1e-05
      %v1705 = vrsqrt.pop %v1704
      %v1706 = vmul.f32 %v1698, %v1705
      %v1707 = vld [vmem:[%s33] sm:$0x1]
      %v1709 = vlaneseq
      %v1710 = vshrl.u32 %v1709, 7
      %v1711 = vsub.s32 0, %v1710
      %v1712 = vrot.slane %v1707, %v1711
      %v1714 = vmul.f32 %v1706, %v1712
      %v1715 = vld [vmem:[%s35] sm:$0x1]
      %v1717 = vlaneseq
      %v1718 = vshrl.u32 %v1717, 7
      %v1719 = vsub.s32 0, %v1718
      %v1720 = vrot.slane %v1715, %v1719
      %v1722 = vadd.f32 %v1714, %v1720
      %v1723 = vmax.f32 %v1722, 0.0
      %v1724 = vld [vmem:[#allocation2] sm:$0x3]
      %1726 = vrot.lane.b32.xlu0 %v1724, 32
      %v1727 = vpop.permute.xlu0 %1726
      %v1729 = vsel %vm1359, %v1723, %v1727
      %v1730 = vld [vmem:[%s37] sm:$0xff]
      %v1731 = vld [vmem:[%s37 + $0x8] sm:$0xff]
      %v1732 = vld [vmem:[%s37 + $0x10] sm:$0xff]
      %v1733 = vld [vmem:[%s37 + $0x18] sm:$0xff]
      %v1734 = vld [vmem:[%s37 + $0x20] sm:$0xff]
      %v1735 = vld [vmem:[%s37 + $0x28] sm:$0xff]
      %v1736 = vld [vmem:[%s37 + $0x30] sm:$0xff]
      %v1737 = vld [vmem:[%s37 + $0x38] sm:$0xff]
      %v1738 = vld [vmem:[%s39] sm:$0x1]
      %v1740 = vlaneseq
      %v1741 = vshrl.u32 %v1740, 7
      %v1742 = vsub.s32 0, %v1741
      %v1743 = vrot.slane %v1738, %v1742
      %v1746 = vsel %vm1618, %v1729, 0
      %1748 = vmatprep.subr.mxu0 0.0
      %1749 = vmatpush1.msra.mxu0 0.0
      %1750 = vmatprep.subr.mxu0 0.0
      %1751 = vmatpush1.msra.mxu0 0.0
      %1752 = vmatprep.subr.mxu0 0.0
      %1753 = vmatpush1.msra.mxu0 0.0
      %1754 = vmatprep.subr.mxu0 0.0
      %1755 = vmatpush1.msra.mxu0 0.0
      %1756 = vmatprep.subr.mxu0 0.0
      %1757 = vmatpush1.msra.mxu0 0.0
      %1758 = vmatprep.subr.mxu0 0.0
      %1759 = vmatpush1.msra.mxu0 0.0
      %1760 = vmatprep.subr.mxu0 0.0
      %1761 = vmatpush1.msra.mxu0 0.0
      %1762 = vmatprep.subr.mxu0 0.0
      %1763 = vmatpush1.msra.mxu0 0.0
      %1764 = vmatprep.subr.mxu0 0.0
      %1765 = vmatpush1.msra.mxu0 %v1737
      %1766 = vmatprep.subr.mxu0 0.0
      %1767 = vmatpush1.msra.mxu0 %v1736
      %1768 = vmatprep.subr.mxu0 0.0
      %1769 = vmatpush1.msra.mxu0 %v1735
      %1770 = vmatprep.subr.mxu0 0.0
      %1771 = vmatpush1.msra.mxu0 %v1734
      %1772 = vmatprep.subr.mxu0 0.0
      %1773 = vmatpush1.msra.mxu0 %v1733
      %1774 = vmatprep.subr.mxu0 0.0
      %1775 = vmatpush1.msra.mxu0 %v1732
      %1776 = vmatprep.subr.mxu0 0.0
      %1777 = vmatpush1.msra.mxu0 %v1731
      %1778 = vmatprep.subr.mxu0 0.0
      %1779 = vmatpush1.msra.mxu0 %v1730
      %1780 = vmatprep.subr.mxu0 0.0
      %1781 = vmatpush2.msra.mxu0 0.0
      %1782 = vmatprep.subr.mxu0 0.0
      %1783 = vmatpush2.msra.mxu0 0.0
      %1784 = vmatprep.subr.mxu0 0.0
      %1785 = vmatpush2.msra.mxu0 0.0
      %1786 = vmatprep.subr.mxu0 0.0
      %1787 = vmatpush2.msra.mxu0 0.0
      %1788 = vmatprep.subr.mxu0 0.0
      %1789 = vmatpush2.msra.mxu0 0.0
      %1790 = vmatprep.subr.mxu0 0.0
      %1791 = vmatpush2.msra.mxu0 0.0
      %1792 = vmatprep.subr.mxu0 0.0
      %1793 = vmatpush2.msra.mxu0 0.0
      %1794 = vmatprep.subr.mxu0 0.0
      %1795 = vmatpush2.msra.mxu0 0.0
      %1796 = vmatprep.subr.mxu0 0.0
      %1797 = vmatpush2.msra.mxu0 0.0
      %1798 = vmatprep.subr.mxu0 0.0
      %1799 = vmatpush2.msra.mxu0 0.0
      %1800 = vmatprep.subr.mxu0 0.0
      %1801 = vmatpush2.msra.mxu0 0.0
      %1802 = vmatprep.subr.mxu0 0.0
      %1803 = vmatpush2.msra.mxu0 0.0
      %1804 = vmatprep.subr.mxu0 0.0
      %1805 = vmatpush2.msra.mxu0 0.0
      %1806 = vmatprep.subr.mxu0 0.0
      %1807 = vmatpush2.msra.mxu0 0.0
      %1808 = vmatprep.subr.mxu0 0.0
      %1809 = vmatpush2.msra.mxu0 0.0
      %1810 = vmatprep.subr.mxu0 0.0
      %1811 = vmatpush2.msra.mxu0 0.0
      %1812 = vmatprep.mubr.f32.mxu0 0.0
      %1813 = vmatmul.mubr.f32.gmra.mxu0 %v1746
      %v1814 = vpop.f32.mrf.mxu0
      %v1815 = vadd.f32 %v1743, %v1814
      %v1816 = vpop.f32.mrf.mxu0
      %1817 = vdwg.mxu0
      %v1818 = vxor.u32 %v1815, 2147483648
      %v1819 = vmul.f32 %v1818, 1.442695
      %v1820 = vpow.pop %v1819
      %v1821 = vadd.f32 %v1820, 1.0
      %v1822 = vrcp.pop %v1821
      %v1823 = vmul.f32 1.0, %v1822
      %1825 = vrot.lane.b32.xlu0 %v1815, 32
      %v1826 = vpop.permute.xlu0 %1825
      %v1828 = vmul.f32 %v1823, %v1826
      %1830 = vrot.lane.b32.xlu0 %v1828, 64
      %v1831 = vpop.permute.xlu0 %1830
      %v1833 = vadd.f32 %v1815, %v1831
      %v1834 = vtanh.pop %v1833
      %v1835 = vsub.f32 1.0, %v1823
      %1837 = vrot.lane.b32.xlu0 %v1834, 96
      %v1838 = vpop.permute.xlu0 %1837
      %v1840 = vmul.f32 %v1835, %v1838
      %v1841 = vmul.f32 %v1823, %v1727
      %v1842 = vadd.f32 %v1840, %v1841
      %1844 = vrot.lane.b32.xlu0 %v1842, 96
      %v1845 = vpop.permute.xlu0 %1844
      %1847 = vst.msk [vmem:[#allocation2] sm:$0x3] %vm1692, %v1845
      %v1848 = vld [vmem:[%s41] sm:$0xff]
      %v1849 = vld [vmem:[%s41 + $0x8] sm:$0xff]
      %v1850 = vld [vmem:[%s41 + $0x10] sm:$0xff]
      %v1851 = vld [vmem:[%s41 + $0x18] sm:$0xff]
      %v1852 = vld [vmem:[%s43] sm:$0x1]
      %v1854 = vlaneseq
      %v1855 = vshrl.u32 %v1854, 7
      %v1856 = vsub.s32 0, %v1855
      %v1857 = vrot.slane %v1852, %v1856
      %v1859 = vsel %vm1359, %v1845, 0
      %1861 = vmatprep.subr.mxu0 0.0
      %1862 = vmatpush1.msra.mxu0 0.0
      %1863 = vmatprep.subr.mxu0 0.0
      %1864 = vmatpush1.msra.mxu0 0.0
      %1865 = vmatprep.subr.mxu0 0.0
      %1866 = vmatpush1.msra.mxu0 0.0
      %1867 = vmatprep.subr.mxu0 0.0
      %1868 = vmatpush1.msra.mxu0 0.0
      %1869 = vmatprep.subr.mxu0 0.0
      %1870 = vmatpush1.msra.mxu0 0.0
      %1871 = vmatprep.subr.mxu0 0.0
      %1872 = vmatpush1.msra.mxu0 0.0
      %1873 = vmatprep.subr.mxu0 0.0
      %1874 = vmatpush1.msra.mxu0 0.0
      %1875 = vmatprep.subr.mxu0 0.0
      %1876 = vmatpush1.msra.mxu0 0.0
      %1877 = vmatprep.subr.mxu0 0.0
      %1878 = vmatpush1.msra.mxu0 0.0
      %1879 = vmatprep.subr.mxu0 0.0
      %1880 = vmatpush1.msra.mxu0 0.0
      %1881 = vmatprep.subr.mxu0 0.0
      %1882 = vmatpush1.msra.mxu0 0.0
      %1883 = vmatprep.subr.mxu0 0.0
      %1884 = vmatpush1.msra.mxu0 0.0
      %1885 = vmatprep.subr.mxu0 0.0
      %1886 = vmatpush1.msra.mxu0 %v1851
      %1887 = vmatprep.subr.mxu0 0.0
      %1888 = vmatpush1.msra.mxu0 %v1850
      %1889 = vmatprep.subr.mxu0 0.0
      %1890 = vmatpush1.msra.mxu0 %v1849
      %1891 = vmatprep.subr.mxu0 0.0
      %1892 = vmatpush1.msra.mxu0 %v1848
      %1893 = vmatprep.subr.mxu0 0.0
      %1894 = vmatpush2.msra.mxu0 0.0
      %1895 = vmatprep.subr.mxu0 0.0
      %1896 = vmatpush2.msra.mxu0 0.0
      %1897 = vmatprep.subr.mxu0 0.0
      %1898 = vmatpush2.msra.mxu0 0.0
      %1899 = vmatprep.subr.mxu0 0.0
      %1900 = vmatpush2.msra.mxu0 0.0
      %1901 = vmatprep.subr.mxu0 0.0
      %1902 = vmatpush2.msra.mxu0 0.0
      %1903 = vmatprep.subr.mxu0 0.0
      %1904 = vmatpush2.msra.mxu0 0.0
      %1905 = vmatprep.subr.mxu0 0.0
      %1906 = vmatpush2.msra.mxu0 0.0
      %1907 = vmatprep.subr.mxu0 0.0
      %1908 = vmatpush2.msra.mxu0 0.0
      %1909 = vmatprep.subr.mxu0 0.0
      %1910 = vmatpush2.msra.mxu0 0.0
      %1911 = vmatprep.subr.mxu0 0.0
      %1912 = vmatpush2.msra.mxu0 0.0
      %1913 = vmatprep.subr.mxu0 0.0
      %1914 = vmatpush2.msra.mxu0 0.0
      %1915 = vmatprep.subr.mxu0 0.0
      %1916 = vmatpush2.msra.mxu0 0.0
      %1917 = vmatprep.subr.mxu0 0.0
      %1918 = vmatpush2.msra.mxu0 0.0
      %1919 = vmatprep.subr.mxu0 0.0
      %1920 = vmatpush2.msra.mxu0 0.0
      %1921 = vmatprep.subr.mxu0 0.0
      %1922 = vmatpush2.msra.mxu0 0.0
      %1923 = vmatprep.subr.mxu0 0.0
      %1924 = vmatpush2.msra.mxu0 0.0
      %1925 = vmatprep.mubr.f32.mxu0 0.0
      %1926 = vmatmul.mubr.f32.gmra.mxu0 %v1859
      %v1927 = vpop.f32.mrf.mxu0
      %v1928 = vadd.f32 %v1857, %v1927
      %v1929 = vpop.f32.mrf.mxu0
      %1930 = vdwg.mxu0
      %v1931 = vmax.f32 %v1928, 0.0
      %v1932 = vld [vmem:[%s23] sm:$0xff]
      %v1933 = vld [vmem:[%s23 + $0x8] sm:$0xff]
      %v1934 = vld [vmem:[%s23 + $0x10] sm:$0xff]
      %v1935 = vld [vmem:[%s23 + $0x18] sm:$0xff]
      %v1937 = vsel %vm1359, %v1931, 0
      %1939 = vmatprep.subr.mxu0 0.0
      %1940 = vmatpush1.msra.mxu0 0.0
      %1941 = vmatprep.subr.mxu0 0.0
      %1942 = vmatpush1.msra.mxu0 0.0
      %1943 = vmatprep.subr.mxu0 0.0
      %1944 = vmatpush1.msra.mxu0 0.0
      %1945 = vmatprep.subr.mxu0 0.0
      %1946 = vmatpush1.msra.mxu0 0.0
      %1947 = vmatprep.subr.mxu0 0.0
      %1948 = vmatpush1.msra.mxu0 0.0
      %1949 = vmatprep.subr.mxu0 0.0
      %1950 = vmatpush1.msra.mxu0 0.0
      %1951 = vmatprep.subr.mxu0 0.0
      %1952 = vmatpush1.msra.mxu0 0.0
      %1953 = vmatprep.subr.mxu0 0.0
      %1954 = vmatpush1.msra.mxu0 0.0
      %1955 = vmatprep.subr.mxu0 0.0
      %1956 = vmatpush1.msra.mxu0 0.0
      %1957 = vmatprep.subr.mxu0 0.0
      %1958 = vmatpush1.msra.mxu0 0.0
      %1959 = vmatprep.subr.mxu0 0.0
      %1960 = vmatpush1.msra.mxu0 0.0
      %1961 = vmatprep.subr.mxu0 0.0
      %1962 = vmatpush1.msra.mxu0 0.0
      %1963 = vmatprep.subr.mxu0 0.0
      %1964 = vmatpush1.msra.mxu0 %v1935
      %1965 = vmatprep.subr.mxu0 0.0
      %1966 = vmatpush1.msra.mxu0 %v1934
      %1967 = vmatprep.subr.mxu0 0.0
      %1968 = vmatpush1.msra.mxu0 %v1933
      %1969 = vmatprep.subr.mxu0 0.0
      %1970 = vmatpush1.msra.mxu0 %v1932
      %1971 = vmatprep.subr.mxu0 0.0
      %1972 = vmatpush2.msra.mxu0 0.0
      %1973 = vmatprep.subr.mxu0 0.0
      %1974 = vmatpush2.msra.mxu0 0.0
      %1975 = vmatprep.subr.mxu0 0.0
      %1976 = vmatpush2.msra.mxu0 0.0
      %1977 = vmatprep.subr.mxu0 0.0
      %1978 = vmatpush2.msra.mxu0 0.0
      %1979 = vmatprep.subr.mxu0 0.0
      %1980 = vmatpush2.msra.mxu0 0.0
      %1981 = vmatprep.subr.mxu0 0.0
      %1982 = vmatpush2.msra.mxu0 0.0
      %1983 = vmatprep.subr.mxu0 0.0
      %1984 = vmatpush2.msra.mxu0 0.0
      %1985 = vmatprep.subr.mxu0 0.0
      %1986 = vmatpush2.msra.mxu0 0.0
      %1987 = vmatprep.subr.mxu0 0.0
      %1988 = vmatpush2.msra.mxu0 0.0
      %1989 = vmatprep.subr.mxu0 0.0
      %1990 = vmatpush2.msra.mxu0 0.0
      %1991 = vmatprep.subr.mxu0 0.0
      %1992 = vmatpush2.msra.mxu0 0.0
      %1993 = vmatprep.subr.mxu0 0.0
      %1994 = vmatpush2.msra.mxu0 0.0
      %1995 = vmatprep.subr.mxu0 0.0
      %1996 = vmatpush2.msra.mxu0 0.0
      %1997 = vmatprep.subr.mxu0 0.0
      %1998 = vmatpush2.msra.mxu0 0.0
      %1999 = vmatprep.subr.mxu0 0.0
      %2000 = vmatpush2.msra.mxu0 0.0
      %2001 = vmatprep.subr.mxu0 0.0
      %2002 = vmatpush2.msra.mxu0 0.0
      %2003 = vmatprep.mubr.f32.mxu0 0.0
      %2004 = vmatmul.mubr.f32.gmra.mxu0 %v1937
      %v2005 = vpop.f32.mrf.mxu0
      %v2006 = vadd.f32 0.0, %v2005
      %v2007 = vpop.f32.mrf.mxu0
      %2008 = vdwg.mxu0
      %vm2009 = vcmask 50176
      %2010 = vst.msk [vmem:[%s1298] sm:$0x3] %vm2009, %v2006
      %v2011 = vsel %vm2009, %v2006, -inf
      %2012 = vmax.xlane.f32.xlu0 %v2011
      %v2013 = vpop.xlane.xlu0 %2012
      %vm2014 = vcmp.eq.f32.partialorder %v2006, %v2013
      %v2015 = vsel %vm2014, %v1502, 7
      %v2016 = vsel %vm2009, %v2015, 2147483647
      %v2017 = vand.u32 %v2016, 65535
      %v2018 = vshra.s32 %v2016, 16
      %v2019 = vcvt.s32.f32 %v2017
      %v2020 = vcvt.s32.f32 %v2018
      %2021 = vmin.xlane.f32.xlu0 %v2020
      %v2022 = vpop.xlane.xlu0 %2021
      %vm2023 = vcmp.eq.f32.partialorder %v2020, %v2022
      %v2024 = vsel %vm2023, %v2019, inf
      %2025 = vmin.xlane.f32.xlu0 %v2024
      %v2026 = vpop.xlane.xlu0 %2025
      %v2027 = vcvt.f32.s32 %v2026
      %v2028 = vcvt.f32.s32 %v2022
      %v2029 = vshll.u32 %v2028, 16
      %v2030 = vadd.s32 %v2029, %v2027
      %vm2031 = vcmp.eq.s32.totalorder %v1502, %v2030
      %v2032 = vsel %vm2031, 1, 0
      %v2033 = vcvt.s32.f32 %v2032
      %v2034 = vld [vmem:[%s21] sm:$0x7f]
      %vm2035 = vcmask 56320
      %v2037 = vsel %vm2035, %v2033, 0
      %vm2039 = vcmask 1046528
      %v2041 = vsel %vm2039, %v2034, 0
      %2043 = vmatprep.subr.mxu0 0.0
      %2044 = vmatpush1.msra.mxu0 0.0
      %2045 = vmatprep.subr.mxu0 0.0
      %2046 = vmatpush1.msra.mxu0 0.0
      %2047 = vmatprep.subr.mxu0 0.0
      %2048 = vmatpush1.msra.mxu0 0.0
      %2049 = vmatprep.subr.mxu0 0.0
      %2050 = vmatpush1.msra.mxu0 0.0
      %2051 = vmatprep.subr.mxu0 0.0
      %2052 = vmatpush1.msra.mxu0 0.0
      %2053 = vmatprep.subr.mxu0 0.0
      %2054 = vmatpush1.msra.mxu0 0.0
      %2055 = vmatprep.subr.mxu0 0.0
      %2056 = vmatpush1.msra.mxu0 0.0
      %2057 = vmatprep.subr.mxu0 0.0
      %2058 = vmatpush1.msra.mxu0 0.0
      %2059 = vmatprep.subr.mxu0 0.0
      %2060 = vmatpush1.msra.mxu0 0.0
      %2061 = vmatprep.subr.mxu0 0.0
      %2062 = vmatpush1.msra.mxu0 0.0
      %2063 = vmatprep.subr.mxu0 0.0
      %2064 = vmatpush1.msra.mxu0 0.0
      %2065 = vmatprep.subr.mxu0 0.0
      %2066 = vmatpush1.msra.mxu0 0.0
      %2067 = vmatprep.subr.mxu0 0.0
      %2068 = vmatpush1.msra.mxu0 0.0
      %2069 = vmatprep.subr.mxu0 0.0
      %2070 = vmatpush1.msra.mxu0 0.0
      %2071 = vmatprep.subr.mxu0 0.0
      %2072 = vmatpush1.msra.mxu0 0.0
      %2073 = vmatprep.subr.mxu0 0.0
      %2074 = vmatpush1.msra.mxu0 %v2041
      %2075 = vmatprep.subr.mxu0 0.0
      %2076 = vmatpush2.msra.mxu0 0.0
      %2077 = vmatprep.subr.mxu0 0.0
      %2078 = vmatpush2.msra.mxu0 0.0
      %2079 = vmatprep.subr.mxu0 0.0
      %2080 = vmatpush2.msra.mxu0 0.0
      %2081 = vmatprep.subr.mxu0 0.0
      %2082 = vmatpush2.msra.mxu0 0.0
      %2083 = vmatprep.subr.mxu0 0.0
      %2084 = vmatpush2.msra.mxu0 0.0
      %2085 = vmatprep.subr.mxu0 0.0
      %2086 = vmatpush2.msra.mxu0 0.0
      %2087 = vmatprep.subr.mxu0 0.0
      %2088 = vmatpush2.msra.mxu0 0.0
      %2089 = vmatprep.subr.mxu0 0.0
      %2090 = vmatpush2.msra.mxu0 0.0
      %2091 = vmatprep.subr.mxu0 0.0
      %2092 = vmatpush2.msra.mxu0 0.0
      %2093 = vmatprep.subr.mxu0 0.0
      %2094 = vmatpush2.msra.mxu0 0.0
      %2095 = vmatprep.subr.mxu0 0.0
      %2096 = vmatpush2.msra.mxu0 0.0
      %2097 = vmatprep.subr.mxu0 0.0
      %2098 = vmatpush2.msra.mxu0 0.0
      %2099 = vmatprep.subr.mxu0 0.0
      %2100 = vmatpush2.msra.mxu0 0.0
      %2101 = vmatprep.subr.mxu0 0.0
      %2102 = vmatpush2.msra.mxu0 0.0
      %2103 = vmatprep.subr.mxu0 0.0
      %2104 = vmatpush2.msra.mxu0 0.0
      %2105 = vmatprep.subr.mxu0 0.0
      %2106 = vmatpush2.msra.mxu0 0.0
      %2107 = vmatprep.mubr.f32.mxu0 0.0
      %2108 = vmatmul.mubr.f32.gmra.mxu0 %v2037
      %v2109 = vpop.f32.mrf.mxu0
      %v2110 = vadd.f32 0.0, %v2109
      %v2111 = vpop.f32.mrf.mxu0
      %2112 = vdwg.mxu0
      %2113 = vst.msk [vmem:[#allocation4] sm:$0x3] %vm1692, %v2110
      %v2114 = vsel %vm1359, %v2110, %v1842
      %v2115 = vld [vmem:[%s45] sm:$0xff]
      %v2116 = vld [vmem:[%s45 + $0x8] sm:$0xff]
      %v2117 = vld [vmem:[%s45 + $0x10] sm:$0xff]
      %v2118 = vld [vmem:[%s45 + $0x18] sm:$0xff]
      %v2119 = vld [vmem:[%s45 + $0x20] sm:$0xff]
      %v2120 = vld [vmem:[%s45 + $0x28] sm:$0xff]
      %v2121 = vld [vmem:[%s45 + $0x30] sm:$0xff]
      %v2122 = vld [vmem:[%s45 + $0x38] sm:$0xff]
      %v2123 = vld [vmem:[%s47] sm:$0x1]
      %v2125 = vlaneseq
      %v2126 = vshrl.u32 %v2125, 7
      %v2127 = vsub.s32 0, %v2126
      %v2128 = vrot.slane %v2123, %v2127
      %v2131 = vsel %vm1618, %v2114, 0
      %2133 = vmatprep.subr.mxu0 0.0
      %2134 = vmatpush1.msra.mxu0 0.0
      %2135 = vmatprep.subr.mxu0 0.0
      %2136 = vmatpush1.msra.mxu0 0.0
      %2137 = vmatprep.subr.mxu0 0.0
      %2138 = vmatpush1.msra.mxu0 0.0
      %2139 = vmatprep.subr.mxu0 0.0
      %2140 = vmatpush1.msra.mxu0 0.0
      %2141 = vmatprep.subr.mxu0 0.0
      %2142 = vmatpush1.msra.mxu0 0.0
      %2143 = vmatprep.subr.mxu0 0.0
      %2144 = vmatpush1.msra.mxu0 0.0
      %2145 = vmatprep.subr.mxu0 0.0
      %2146 = vmatpush1.msra.mxu0 0.0
      %2147 = vmatprep.subr.mxu0 0.0
      %2148 = vmatpush1.msra.mxu0 0.0
      %2149 = vmatprep.subr.mxu0 0.0
      %2150 = vmatpush1.msra.mxu0 %v2122
      %2151 = vmatprep.subr.mxu0 0.0
      %2152 = vmatpush1.msra.mxu0 %v2121
      %2153 = vmatprep.subr.mxu0 0.0
      %2154 = vmatpush1.msra.mxu0 %v2120
      %2155 = vmatprep.subr.mxu0 0.0
      %2156 = vmatpush1.msra.mxu0 %v2119
      %2157 = vmatprep.subr.mxu0 0.0
      %2158 = vmatpush1.msra.mxu0 %v2118
      %2159 = vmatprep.subr.mxu0 0.0
      %2160 = vmatpush1.msra.mxu0 %v2117
      %2161 = vmatprep.subr.mxu0 0.0
      %2162 = vmatpush1.msra.mxu0 %v2116
      %2163 = vmatprep.subr.mxu0 0.0
      %2164 = vmatpush1.msra.mxu0 %v2115
      %2165 = vmatprep.subr.mxu0 0.0
      %2166 = vmatpush2.msra.mxu0 0.0
      %2167 = vmatprep.subr.mxu0 0.0
      %2168 = vmatpush2.msra.mxu0 0.0
      %2169 = vmatprep.subr.mxu0 0.0
      %2170 = vmatpush2.msra.mxu0 0.0
      %2171 = vmatprep.subr.mxu0 0.0
      %2172 = vmatpush2.msra.mxu0 0.0
      %2173 = vmatprep.subr.mxu0 0.0
      %2174 = vmatpush2.msra.mxu0 0.0
      %2175 = vmatprep.subr.mxu0 0.0
      %2176 = vmatpush2.msra.mxu0 0.0
      %2177 = vmatprep.subr.mxu0 0.0
      %2178 = vmatpush2.msra.mxu0 0.0
      %2179 = vmatprep.subr.mxu0 0.0
      %2180 = vmatpush2.msra.mxu0 0.0
      %2181 = vmatprep.subr.mxu0 0.0
      %2182 = vmatpush2.msra.mxu0 0.0
      %2183 = vmatprep.subr.mxu0 0.0
      %2184 = vmatpush2.msra.mxu0 0.0
      %2185 = vmatprep.subr.mxu0 0.0
      %2186 = vmatpush2.msra.mxu0 0.0
      %2187 = vmatprep.subr.mxu0 0.0
      %2188 = vmatpush2.msra.mxu0 0.0
      %2189 = vmatprep.subr.mxu0 0.0
      %2190 = vmatpush2.msra.mxu0 0.0
      %2191 = vmatprep.subr.mxu0 0.0
      %2192 = vmatpush2.msra.mxu0 0.0
      %2193 = vmatprep.subr.mxu0 0.0
      %2194 = vmatpush2.msra.mxu0 0.0
      %2195 = vmatprep.subr.mxu0 0.0
      %2196 = vmatpush2.msra.mxu0 0.0
      %2197 = vmatprep.mubr.f32.mxu0 0.0
      %2198 = vmatmul.mubr.f32.gmra.mxu0 %v2131
      %v2199 = vpop.f32.mrf.mxu0
      %v2200 = vadd.f32 %v2128, %v2199
      %v2201 = vpop.f32.mrf.mxu0
      %2202 = vdwg.mxu0
      %v2203 = vmax.f32 %v2200, 0.0
      %v2204 = vld [vmem:[%s49] sm:$0xff]
      %v2205 = vld [vmem:[%s49 + $0x8] sm:$0xff]
      %v2206 = vld [vmem:[%s49 + $0x10] sm:$0xff]
      %v2207 = vld [vmem:[%s49 + $0x18] sm:$0xff]
      %v2208 = vld [vmem:[%s49 + $0x20] sm:$0xff]
      %v2209 = vld [vmem:[%s49 + $0x28] sm:$0xff]
      %v2210 = vld [vmem:[%s49 + $0x30] sm:$0xff]
      %v2211 = vld [vmem:[%s49 + $0x38] sm:$0xff]
      %v2212 = vld [vmem:[%s51] sm:$0x1]
      %v2214 = vlaneseq
      %v2215 = vshrl.u32 %v2214, 7
      %v2216 = vsub.s32 0, %v2215
      %v2217 = vrot.slane %v2212, %v2216
      %v2220 = vsel %vm1618, %v2203, 0
      %2222 = vmatprep.subr.mxu0 0.0
      %2223 = vmatpush1.msra.mxu0 0.0
      %2224 = vmatprep.subr.mxu0 0.0
      %2225 = vmatpush1.msra.mxu0 0.0
      %2226 = vmatprep.subr.mxu0 0.0
      %2227 = vmatpush1.msra.mxu0 0.0
      %2228 = vmatprep.subr.mxu0 0.0
      %2229 = vmatpush1.msra.mxu0 0.0
      %2230 = vmatprep.subr.mxu0 0.0
      %2231 = vmatpush1.msra.mxu0 0.0
      %2232 = vmatprep.subr.mxu0 0.0
      %2233 = vmatpush1.msra.mxu0 0.0
      %2234 = vmatprep.subr.mxu0 0.0
      %2235 = vmatpush1.msra.mxu0 0.0
      %2236 = vmatprep.subr.mxu0 0.0
      %2237 = vmatpush1.msra.mxu0 0.0
      %2238 = vmatprep.subr.mxu0 0.0
      %2239 = vmatpush1.msra.mxu0 %v2211
      %2240 = vmatprep.subr.mxu0 0.0
      %2241 = vmatpush1.msra.mxu0 %v2210
      %2242 = vmatprep.subr.mxu0 0.0
      %2243 = vmatpush1.msra.mxu0 %v2209
      %2244 = vmatprep.subr.mxu0 0.0
      %2245 = vmatpush1.msra.mxu0 %v2208
      %2246 = vmatprep.subr.mxu0 0.0
      %2247 = vmatpush1.msra.mxu0 %v2207
      %2248 = vmatprep.subr.mxu0 0.0
      %2249 = vmatpush1.msra.mxu0 %v2206
      %2250 = vmatprep.subr.mxu0 0.0
      %2251 = vmatpush1.msra.mxu0 %v2205
      %2252 = vmatprep.subr.mxu0 0.0
      %2253 = vmatpush1.msra.mxu0 %v2204
      %2254 = vmatprep.subr.mxu0 0.0
      %2255 = vmatpush2.msra.mxu0 0.0
      %2256 = vmatprep.subr.mxu0 0.0
      %2257 = vmatpush2.msra.mxu0 0.0
      %2258 = vmatprep.subr.mxu0 0.0
      %2259 = vmatpush2.msra.mxu0 0.0
      %2260 = vmatprep.subr.mxu0 0.0
      %2261 = vmatpush2.msra.mxu0 0.0
      %2262 = vmatprep.subr.mxu0 0.0
      %2263 = vmatpush2.msra.mxu0 0.0
      %2264 = vmatprep.subr.mxu0 0.0
      %2265 = vmatpush2.msra.mxu0 0.0
      %2266 = vmatprep.subr.mxu0 0.0
      %2267 = vmatpush2.msra.mxu0 0.0
      %2268 = vmatprep.subr.mxu0 0.0
      %2269 = vmatpush2.msra.mxu0 0.0
      %2270 = vmatprep.subr.mxu0 0.0
      %2271 = vmatpush2.msra.mxu0 0.0
      %2272 = vmatprep.subr.mxu0 0.0
      %2273 = vmatpush2.msra.mxu0 0.0
      %2274 = vmatprep.subr.mxu0 0.0
      %2275 = vmatpush2.msra.mxu0 0.0
      %2276 = vmatprep.subr.mxu0 0.0
      %2277 = vmatpush2.msra.mxu0 0.0
      %2278 = vmatprep.subr.mxu0 0.0
      %2279 = vmatpush2.msra.mxu0 0.0
      %2280 = vmatprep.subr.mxu0 0.0
      %2281 = vmatpush2.msra.mxu0 0.0
      %2282 = vmatprep.subr.mxu0 0.0
      %2283 = vmatpush2.msra.mxu0 0.0
      %2284 = vmatprep.subr.mxu0 0.0
      %2285 = vmatpush2.msra.mxu0 0.0
      %2286 = vmatprep.mubr.f32.mxu0 0.0
      %2287 = vmatmul.mubr.f32.gmra.mxu0 %v2220
      %v2288 = vpop.f32.mrf.mxu0
      %v2289 = vadd.f32 %v2217, %v2288
      %v2290 = vpop.f32.mrf.mxu0
      %2291 = vdwg.mxu0
      %v2292 = vsel %vm1692, %v2289, 0.0
      %2293 = vadd.xlane.f32.xlu0 %v2292
      %v2294 = vpop.xlane.xlu0 %2293
      %v2295 = vmul.f32 %v2294, %v1696
      %v2296 = vsub.f32 %v2289, %v2295
      %v2297 = vmul.f32 %v2296, %v2296
      %v2298 = vsel %vm1692, %v2297, 0.0
      %2299 = vadd.xlane.f32.xlu0 %v2298
      %v2300 = vpop.xlane.xlu0 %2299
      %v2301 = vmul.f32 %v2300, %v1696
      %v2302 = vadd.f32 %v2301, 1e-05
      %v2303 = vrsqrt.pop %v2302
      %v2304 = vmul.f32 %v2296, %v2303
      %v2305 = vld [vmem:[%s53] sm:$0x1]
      %v2307 = vlaneseq
      %v2308 = vshrl.u32 %v2307, 7
      %v2309 = vsub.s32 0, %v2308
      %v2310 = vrot.slane %v2305, %v2309
      %v2312 = vmul.f32 %v2304, %v2310
      %v2313 = vld [vmem:[%s55] sm:$0x1]
      %v2315 = vlaneseq
      %v2316 = vshrl.u32 %v2315, 7
      %v2317 = vsub.s32 0, %v2316
      %v2318 = vrot.slane %v2313, %v2317
      %v2320 = vadd.f32 %v2312, %v2318
      %s2321 = sadd.s32 %s92, 3
      %v2322 = vstv %s2321
      %vm2323 = vcmp.ge.s32.totalorder %v1502, %v2322
      %vm2324 = vcmp.le.s32.totalorder %v1502, 13
      %vm2325 = vmand %vm2323, %vm2324
      %v2326 = vld [vmem:[%s1267] sm:$0x3]
      %v2327 = vsel %vm2325, 0.0, %v2326
      %vm2328 = vcmp.eq.s32.totalorder %v1502, 0
      %v2329 = vsel %vm2328, 1, 0
      %v2330 = vcvt.s32.f32 %v2329
      %vm2331 = vcmp.ge.s32.totalorder %v2030, 5
      %vm2332 = vcmp.ne.s32.totalorder %v2030, 0
      %vm2333 = vmand %vm2331, %vm2332
      %v2334 = vld [vmem:[#allocation3] sm:$0x3]
      %v2335 = vld [vmem:[%s1263] sm:$0x3]
      %v2336 = vld [vmem:[%s1284] sm:$0xff]
      %v2337 = vld [vmem:[%s1284 + $0x8] sm:$0xff]
      %v2338 = vld [vmem:[%s1290] sm:$0xff]
      %v2339 = vld [vmem:[%s1290 + $0x8] sm:$0xff]
      %v2340 = vld [vmem:[%s27] sm:$0xff]
      %v2341 = vld [vmem:[%s27 + $0x8] sm:$0xff]
      %v2342 = vld [vmem:[%s27 + $0x10] sm:$0xff]
      %v2343 = vld [vmem:[%s27 + $0x18] sm:$0xff]
      %v2345 = vsel %vm1359, %v2320, 0
      %2347 = vmatprep.subr.mxu0 0.0
      %2348 = vmatpush1.msra.mxu0 0.0
      %2349 = vmatprep.subr.mxu0 0.0
      %2350 = vmatpush1.msra.mxu0 0.0
      %2351 = vmatprep.subr.mxu0 0.0
      %2352 = vmatpush1.msra.mxu0 0.0
      %2353 = vmatprep.subr.mxu0 0.0
      %2354 = vmatpush1.msra.mxu0 0.0
      %2355 = vmatprep.subr.mxu0 0.0
      %2356 = vmatpush1.msra.mxu0 0.0
      %2357 = vmatprep.subr.mxu0 0.0
      %2358 = vmatpush1.msra.mxu0 0.0
      %2359 = vmatprep.subr.mxu0 0.0
      %2360 = vmatpush1.msra.mxu0 0.0
      %2361 = vmatprep.subr.mxu0 0.0
      %2362 = vmatpush1.msra.mxu0 0.0
      %2363 = vmatprep.subr.mxu0 0.0
      %2364 = vmatpush1.msra.mxu0 0.0
      %2365 = vmatprep.subr.mxu0 0.0
      %2366 = vmatpush1.msra.mxu0 0.0
      %2367 = vmatprep.subr.mxu0 0.0
      %2368 = vmatpush1.msra.mxu0 0.0
      %2369 = vmatprep.subr.mxu0 0.0
      %2370 = vmatpush1.msra.mxu0 0.0
      %2371 = vmatprep.subr.mxu0 0.0
      %2372 = vmatpush1.msra.mxu0 %v2343
      %2373 = vmatprep.subr.mxu0 0.0
      %2374 = vmatpush1.msra.mxu0 %v2342
      %2375 = vmatprep.subr.mxu0 0.0
      %2376 = vmatpush1.msra.mxu0 %v2341
      %2377 = vmatprep.subr.mxu0 0.0
      %2378 = vmatpush1.msra.mxu0 %v2340
      %2379 = vmatprep.subr.mxu0 0.0
      %2380 = vmatpush2.msra.mxu0 0.0
      %2381 = vmatprep.subr.mxu0 0.0
      %2382 = vmatpush2.msra.mxu0 0.0
      %2383 = vmatprep.subr.mxu0 0.0
      %2384 = vmatpush2.msra.mxu0 0.0
      %2385 = vmatprep.subr.mxu0 0.0
      %2386 = vmatpush2.msra.mxu0 0.0
      %2387 = vmatprep.subr.mxu0 0.0
      %2388 = vmatpush2.msra.mxu0 0.0
      %2389 = vmatprep.subr.mxu0 0.0
      %2390 = vmatpush2.msra.mxu0 0.0
      %2391 = vmatprep.subr.mxu0 0.0
      %2392 = vmatpush2.msra.mxu0 0.0
      %2393 = vmatprep.subr.mxu0 0.0
      %2394 = vmatpush2.msra.mxu0 0.0
      %2395 = vmatprep.subr.mxu0 0.0
      %2396 = vmatpush2.msra.mxu0 0.0
      %2397 = vmatprep.subr.mxu0 0.0
      %2398 = vmatpush2.msra.mxu0 0.0
      %2399 = vmatprep.subr.mxu0 0.0
      %2400 = vmatpush2.msra.mxu0 0.0
      %2401 = vmatprep.subr.mxu0 0.0
      %2402 = vmatpush2.msra.mxu0 0.0
      %2403 = vmatprep.subr.mxu0 0.0
      %2404 = vmatpush2.msra.mxu0 0.0
      %2405 = vmatprep.subr.mxu0 0.0
      %2406 = vmatpush2.msra.mxu0 0.0
      %2407 = vmatprep.subr.mxu0 0.0
      %2408 = vmatpush2.msra.mxu0 0.0
      %2409 = vmatprep.subr.mxu0 0.0
      %2410 = vmatpush2.msra.mxu0 0.0
      %2411 = vmatprep.mubr.f32.mxu0 0.0
      %2412 = vmatmul.mubr.f32.gmra.mxu0 %v2345
      %v2413 = vpop.f32.mrf.mxu0
      %v2414 = vadd.f32 0.0, %v2413
      %v2415 = vpop.f32.mrf.mxu0
      %2416 = vdwg.mxu0
      %v2419 = vunpack.c.l.s4 1966171168
      %v2420 = vunpack.c.0.s8 %v2419
      %v2421 = vlaneseq
      %v2422 = vshrl.u32 %v2421, 7
      %v2423 = vsub.s32 %v2420, %v2422
      %v2424 = vrot.slane %v2414, %v2423
      %v2425 = vcombine.high %v2424, %v2424
      %v2427 = vunpack.c.l.s4 1966171168
      %v2428 = vunpack.c.0.s8 %v2427
      %v2429 = vlaneseq
      %v2430 = vshrl.u32 %v2429, 7
      %v2431 = vsub.s32 %v2428, %v2430
      %v2432 = vrot.slane %v2424, %v2431
      %v2434 = vunpack.c.l.s4 1966171168
      %v2435 = vunpack.c.0.s8 %v2434
      %v2436 = vlaneseq
      %v2437 = vshrl.u32 %v2436, 7
      %v2438 = vsub.s32 %v2435, %v2437
      %v2439 = vrot.slane %v2425, %v2438
      %v2440 = vlaneseq
      %v2441 = vshrl.u32 %v2440, 7
      %v2442 = vsub.s32 0, %v2441
      %v2443 = vrot.slane %v2432, %v2442
      %v2444 = vlaneseq
      %v2445 = vshrl.u32 %v2444, 7
      %v2446 = vsub.s32 0, %v2445
      %v2447 = vrot.slane %v2439, %v2446
      %v2450 = vmul.f32 %v2443, %v2336
      %v2451 = vmul.f32 %v2447, %v2337
      %v2452 = vsel %vm1359, %v2450, 0.0
      %2453 = vadd.xlane.f32.xlu0 %v2452
      %v2454 = vpop.xlane.xlu0 %2453
      %v2455 = vsel %vm1359, %v2451, 0.0
      %2456 = vadd.xlane.f32.xlu0 %v2455
      %v2457 = vpop.xlane.xlu0 %2456
      %v2459 = vlaneseq
      %v2460 = vshrl.u32 %v2459, 7
      %v2461 = vsub.s32 0, %v2460
      %v2462 = vrot.slane %v2335, %v2461
      %2464 = vbcast.lane.b32.xlu0 %v2462, 256
      %v2465 = vpop.permute.xlu0 %2464
      %v2466 = vlaneseq
      %v2467 = vshrl.u32 %v2466, 7
      %v2468 = vsub.s32 1, %v2467
      %v2469 = vrot.slane %v2335, %v2468
      %2471 = vbcast.lane.b32.xlu0 %v2469, 256
      %v2472 = vpop.permute.xlu0 %2471
      %v2475 = vadd.f32 %v2454, %v2465
      %v2476 = vadd.f32 %v2457, %v2472
      %2479 = vset.pattern.permute.xlu0 0
      %2480 = vperm.xlu0 %2479, %v2475
      %v2481 = vpop.permute.xlu0 %2480
      %2482 = vset.pattern.permute.xlu0 0
      %2483 = vperm.xlu0 %2482, %v2476
      %v2484 = vpop.permute.xlu0 %2483
      %v2485 = vlaneseq
      %v2486 = vshrl.u32 %v2485, 7
      %v2487 = vsub.s32 %v1502, %v2486
      %v2488 = vrot.slane %v2481, %v2487
      %v2489 = vlaneseq
      %v2490 = vshrl.u32 %v2489, 7
      %v2491 = vsub.s32 %v1502, %v2490
      %v2492 = vrot.slane %v2484, %v2491
      %v2493 = vsel %vm1511, %v2492, %v2488
      %v2495 = vsel %vm1514, %v2493, -inf
      %2496 = vmax.xlane.f32.xlu0 %v2495
      %v2497 = vpop.xlane.xlu0 %2496
      %v2499 = vlaneseq
      %v2500 = vshrl.u32 %v2499, 7
      %v2501 = vsub.s32 0, %v2500
      %v2502 = vrot.slane %v2497, %v2501
      %v2503 = vlaneseq
      %v2504 = vshrl.u32 %v2503, 7
      %v2505 = vsub.s32 1, %v2504
      %v2506 = vrot.slane %v2497, %v2505
      %v2509 = vsub.f32 %v2475, %v2502
      %v2510 = vsub.f32 %v2476, %v2506
      %v2511 = vmul.f32 %v2509, 1.442695
      %v2512 = vpow.pop %v2511
      %v2513 = vmul.f32 %v2510, 1.442695
      %v2514 = vpow.pop %v2513
      %2517 = vset.pattern.permute.xlu0 0
      %2518 = vperm.xlu0 %2517, %v2512
      %v2519 = vpop.permute.xlu0 %2518
      %2520 = vset.pattern.permute.xlu0 0
      %2521 = vperm.xlu0 %2520, %v2514
      %v2522 = vpop.permute.xlu0 %2521
      %v2523 = vlaneseq
      %v2524 = vshrl.u32 %v2523, 7
      %v2525 = vsub.s32 %v1502, %v2524
      %v2526 = vrot.slane %v2519, %v2525
      %v2527 = vlaneseq
      %v2528 = vshrl.u32 %v2527, 7
      %v2529 = vsub.s32 %v1502, %v2528
      %v2530 = vrot.slane %v2522, %v2529
      %v2531 = vsel %vm1511, %v2530, %v2526
      %v2533 = vsel %vm1514, %v2531, 0.0
      %2534 = vadd.xlane.f32.xlu0 %v2533
      %v2535 = vpop.xlane.xlu0 %2534
      %v2536 = vrcp.pop %v2535
      %v2538 = vlaneseq
      %v2539 = vshrl.u32 %v2538, 7
      %v2540 = vsub.s32 0, %v2539
      %v2541 = vrot.slane %v2536, %v2540
      %v2542 = vlaneseq
      %v2543 = vshrl.u32 %v2542, 7
      %v2544 = vsub.s32 1, %v2543
      %v2545 = vrot.slane %v2536, %v2544
      %v2548 = vmul.f32 %v2512, %v2541
      %v2549 = vmul.f32 %v2514, %v2545
      %2551 = vset.pattern.permute.xlu0 0
      %2552 = vperm.xlu0 %2551, %v2548
      %v2553 = vpop.permute.xlu0 %2552
      %2556 = vset.pattern.permute.xlu0 0
      %2557 = vperm.xlu0 %2556, %v2549
      %v2558 = vpop.permute.xlu0 %2557
      %v2560 = vmul.f32 %v2553, %v2338
      %v2561 = vmul.f32 %v2558, %v2339
      %v2562 = vsel %vm1359, %v2560, 0.0
      %v2563 = vrot.slane %v2562, 4
      %v2564 = vadd.f32 %v2562, %v2563
      %v2565 = vrot.slane %v2564, 2
      %v2566 = vadd.f32 %v2564, %v2565
      %v2567 = vrot.slane %v2566, 1
      %v2568 = vadd.f32 %v2566, %v2567
      %v2569 = vsel %vm1359, %v2561, 0.0
      %v2570 = vrot.slane %v2569, 4
      %v2571 = vadd.f32 %v2569, %v2570
      %v2572 = vrot.slane %v2571, 2
      %v2573 = vadd.f32 %v2571, %v2572
      %v2574 = vrot.slane %v2573, 1
      %v2575 = vadd.f32 %v2573, %v2574
      %v2578 = vsel %vm1511, %v2575, %v2568
      %2579 = vrot.lane.b32.xlu0 %v2578, 32
      %v2580 = vpop.permute.xlu0 %2579
      %v2582 = vsel %vm1359, %v2320, %v2580
      %v2583 = vld [vmem:[%s57] sm:$0xff]
      %v2584 = vld [vmem:[%s57 + $0x8] sm:$0xff]
      %v2585 = vld [vmem:[%s57 + $0x10] sm:$0xff]
      %v2586 = vld [vmem:[%s57 + $0x18] sm:$0xff]
      %v2587 = vld [vmem:[%s57 + $0x20] sm:$0xff]
      %v2588 = vld [vmem:[%s57 + $0x28] sm:$0xff]
      %v2589 = vld [vmem:[%s57 + $0x30] sm:$0xff]
      %v2590 = vld [vmem:[%s57 + $0x38] sm:$0xff]
      %v2591 = vld [vmem:[%s59] sm:$0x1]
      %v2593 = vlaneseq
      %v2594 = vshrl.u32 %v2593, 7
      %v2595 = vsub.s32 0, %v2594
      %v2596 = vrot.slane %v2591, %v2595
      %v2599 = vsel %vm1618, %v2582, 0
      %2601 = vmatprep.subr.mxu0 0.0
      %2602 = vmatpush1.msra.mxu0 0.0
      %2603 = vmatprep.subr.mxu0 0.0
      %2604 = vmatpush1.msra.mxu0 0.0
      %2605 = vmatprep.subr.mxu0 0.0
      %2606 = vmatpush1.msra.mxu0 0.0
      %2607 = vmatprep.subr.mxu0 0.0
      %2608 = vmatpush1.msra.mxu0 0.0
      %2609 = vmatprep.subr.mxu0 0.0
      %2610 = vmatpush1.msra.mxu0 0.0
      %2611 = vmatprep.subr.mxu0 0.0
      %2612 = vmatpush1.msra.mxu0 0.0
      %2613 = vmatprep.subr.mxu0 0.0
      %2614 = vmatpush1.msra.mxu0 0.0
      %2615 = vmatprep.subr.mxu0 0.0
      %2616 = vmatpush1.msra.mxu0 0.0
      %2617 = vmatprep.subr.mxu0 0.0
      %2618 = vmatpush1.msra.mxu0 %v2590
      %2619 = vmatprep.subr.mxu0 0.0
      %2620 = vmatpush1.msra.mxu0 %v2589
      %2621 = vmatprep.subr.mxu0 0.0
      %2622 = vmatpush1.msra.mxu0 %v2588
      %2623 = vmatprep.subr.mxu0 0.0
      %2624 = vmatpush1.msra.mxu0 %v2587
      %2625 = vmatprep.subr.mxu0 0.0
      %2626 = vmatpush1.msra.mxu0 %v2586
      %2627 = vmatprep.subr.mxu0 0.0
      %2628 = vmatpush1.msra.mxu0 %v2585
      %2629 = vmatprep.subr.mxu0 0.0
      %2630 = vmatpush1.msra.mxu0 %v2584
      %2631 = vmatprep.subr.mxu0 0.0
      %2632 = vmatpush1.msra.mxu0 %v2583
      %2633 = vmatprep.subr.mxu0 0.0
      %2634 = vmatpush2.msra.mxu0 0.0
      %2635 = vmatprep.subr.mxu0 0.0
      %2636 = vmatpush2.msra.mxu0 0.0
      %2637 = vmatprep.subr.mxu0 0.0
      %2638 = vmatpush2.msra.mxu0 0.0
      %2639 = vmatprep.subr.mxu0 0.0
      %2640 = vmatpush2.msra.mxu0 0.0
      %2641 = vmatprep.subr.mxu0 0.0
      %2642 = vmatpush2.msra.mxu0 0.0
      %2643 = vmatprep.subr.mxu0 0.0
      %2644 = vmatpush2.msra.mxu0 0.0
      %2645 = vmatprep.subr.mxu0 0.0
      %2646 = vmatpush2.msra.mxu0 0.0
      %2647 = vmatprep.subr.mxu0 0.0
      %2648 = vmatpush2.msra.mxu0 0.0
      %2649 = vmatprep.subr.mxu0 0.0
      %2650 = vmatpush2.msra.mxu0 0.0
      %2651 = vmatprep.subr.mxu0 0.0
      %2652 = vmatpush2.msra.mxu0 0.0
      %2653 = vmatprep.subr.mxu0 0.0
      %2654 = vmatpush2.msra.mxu0 0.0
      %2655 = vmatprep.subr.mxu0 0.0
      %2656 = vmatpush2.msra.mxu0 0.0
      %2657 = vmatprep.subr.mxu0 0.0
      %2658 = vmatpush2.msra.mxu0 0.0
      %2659 = vmatprep.subr.mxu0 0.0
      %2660 = vmatpush2.msra.mxu0 0.0
      %2661 = vmatprep.subr.mxu0 0.0
      %2662 = vmatpush2.msra.mxu0 0.0
      %2663 = vmatprep.subr.mxu0 0.0
      %2664 = vmatpush2.msra.mxu0 0.0
      %2665 = vmatprep.mubr.f32.mxu0 0.0
      %2666 = vmatmul.mubr.f32.gmra.mxu0 %v2599
      %v2667 = vpop.f32.mrf.mxu0
      %v2668 = vadd.f32 %v2596, %v2667
      %v2669 = vpop.f32.mrf.mxu0
      %2670 = vdwg.mxu0
      %v2671 = vsel %vm1692, %v2668, 0.0
      %2672 = vadd.xlane.f32.xlu0 %v2671
      %v2673 = vpop.xlane.xlu0 %2672
      %v2674 = vmul.f32 %v2673, %v1696
      %v2675 = vsub.f32 %v2668, %v2674
      %v2676 = vmul.f32 %v2675, %v2675
      %v2677 = vsel %vm1692, %v2676, 0.0
      %2678 = vadd.xlane.f32.xlu0 %v2677
      %v2679 = vpop.xlane.xlu0 %2678
      %v2680 = vmul.f32 %v2679, %v1696
      %v2681 = vadd.f32 %v2680, 1e-05
      %v2682 = vrsqrt.pop %v2681
      %v2683 = vmul.f32 %v2675, %v2682
      %v2684 = vld [vmem:[%s61] sm:$0x1]
      %v2686 = vlaneseq
      %v2687 = vshrl.u32 %v2686, 7
      %v2688 = vsub.s32 0, %v2687
      %v2689 = vrot.slane %v2684, %v2688
      %v2691 = vmul.f32 %v2683, %v2689
      %v2692 = vld [vmem:[%s63] sm:$0x1]
      %v2694 = vlaneseq
      %v2695 = vshrl.u32 %v2694, 7
      %v2696 = vsub.s32 0, %v2695
      %v2697 = vrot.slane %v2692, %v2696
      %v2699 = vadd.f32 %v2691, %v2697
      %v2700 = vmax.f32 %v2699, 0.0
      %2702 = vrot.lane.b32.xlu0 %v2334, 32
      %v2703 = vpop.permute.xlu0 %2702
      %v2705 = vsel %vm1359, %v2700, %v2703
      %v2706 = vld [vmem:[%s65] sm:$0xff]
      %v2707 = vld [vmem:[%s65 + $0x8] sm:$0xff]
      %v2708 = vld [vmem:[%s65 + $0x10] sm:$0xff]
      %v2709 = vld [vmem:[%s65 + $0x18] sm:$0xff]
      %v2710 = vld [vmem:[%s65 + $0x20] sm:$0xff]
      %v2711 = vld [vmem:[%s65 + $0x28] sm:$0xff]
      %v2712 = vld [vmem:[%s65 + $0x30] sm:$0xff]
      %v2713 = vld [vmem:[%s65 + $0x38] sm:$0xff]
      %v2714 = vld [vmem:[%s67] sm:$0x1]
      %v2716 = vlaneseq
      %v2717 = vshrl.u32 %v2716, 7
      %v2718 = vsub.s32 0, %v2717
      %v2719 = vrot.slane %v2714, %v2718
      %v2722 = vsel %vm1618, %v2705, 0
      %2724 = vmatprep.subr.mxu0 0.0
      %2725 = vmatpush1.msra.mxu0 0.0
      %2726 = vmatprep.subr.mxu0 0.0
      %2727 = vmatpush1.msra.mxu0 0.0
      %2728 = vmatprep.subr.mxu0 0.0
      %2729 = vmatpush1.msra.mxu0 0.0
      %2730 = vmatprep.subr.mxu0 0.0
      %2731 = vmatpush1.msra.mxu0 0.0
      %2732 = vmatprep.subr.mxu0 0.0
      %2733 = vmatpush1.msra.mxu0 0.0
      %2734 = vmatprep.subr.mxu0 0.0
      %2735 = vmatpush1.msra.mxu0 0.0
      %2736 = vmatprep.subr.mxu0 0.0
      %2737 = vmatpush1.msra.mxu0 0.0
      %2738 = vmatprep.subr.mxu0 0.0
      %2739 = vmatpush1.msra.mxu0 0.0
      %2740 = vmatprep.subr.mxu0 0.0
      %2741 = vmatpush1.msra.mxu0 %v2713
      %2742 = vmatprep.subr.mxu0 0.0
      %2743 = vmatpush1.msra.mxu0 %v2712
      %2744 = vmatprep.subr.mxu0 0.0
      %2745 = vmatpush1.msra.mxu0 %v2711
      %2746 = vmatprep.subr.mxu0 0.0
      %2747 = vmatpush1.msra.mxu0 %v2710
      %2748 = vmatprep.subr.mxu0 0.0
      %2749 = vmatpush1.msra.mxu0 %v2709
      %2750 = vmatprep.subr.mxu0 0.0
      %2751 = vmatpush1.msra.mxu0 %v2708
      %2752 = vmatprep.subr.mxu0 0.0
      %2753 = vmatpush1.msra.mxu0 %v2707
      %2754 = vmatprep.subr.mxu0 0.0
      %2755 = vmatpush1.msra.mxu0 %v2706
      %2756 = vmatprep.subr.mxu0 0.0
      %2757 = vmatpush2.msra.mxu0 0.0
      %2758 = vmatprep.subr.mxu0 0.0
      %2759 = vmatpush2.msra.mxu0 0.0
      %2760 = vmatprep.subr.mxu0 0.0
      %2761 = vmatpush2.msra.mxu0 0.0
      %2762 = vmatprep.subr.mxu0 0.0
      %2763 = vmatpush2.msra.mxu0 0.0
      %2764 = vmatprep.subr.mxu0 0.0
      %2765 = vmatpush2.msra.mxu0 0.0
      %2766 = vmatprep.subr.mxu0 0.0
      %2767 = vmatpush2.msra.mxu0 0.0
      %2768 = vmatprep.subr.mxu0 0.0
      %2769 = vmatpush2.msra.mxu0 0.0
      %2770 = vmatprep.subr.mxu0 0.0
      %2771 = vmatpush2.msra.mxu0 0.0
      %2772 = vmatprep.subr.mxu0 0.0
      %2773 = vmatpush2.msra.mxu0 0.0
      %2774 = vmatprep.subr.mxu0 0.0
      %2775 = vmatpush2.msra.mxu0 0.0
      %2776 = vmatprep.subr.mxu0 0.0
      %2777 = vmatpush2.msra.mxu0 0.0
      %2778 = vmatprep.subr.mxu0 0.0
      %2779 = vmatpush2.msra.mxu0 0.0
      %2780 = vmatprep.subr.mxu0 0.0
      %2781 = vmatpush2.msra.mxu0 0.0
      %2782 = vmatprep.subr.mxu0 0.0
      %2783 = vmatpush2.msra.mxu0 0.0
      %2784 = vmatprep.subr.mxu0 0.0
      %2785 = vmatpush2.msra.mxu0 0.0
      %2786 = vmatprep.subr.mxu0 0.0
      %2787 = vmatpush2.msra.mxu0 0.0
      %2788 = vmatprep.mubr.f32.mxu0 0.0
      %2789 = vmatmul.mubr.f32.gmra.mxu0 %v2722
      %v2790 = vpop.f32.mrf.mxu0
      %v2791 = vadd.f32 %v2719, %v2790
      %v2792 = vpop.f32.mrf.mxu0
      %2793 = vdwg.mxu0
      %v2794 = vxor.u32 %v2791, 2147483648
      %v2795 = vmul.f32 %v2794, 1.442695
      %v2796 = vpow.pop %v2795
      %v2797 = vadd.f32 %v2796, 1.0
      %v2798 = vrcp.pop %v2797
      %v2799 = vmul.f32 1.0, %v2798
      %2801 = vrot.lane.b32.xlu0 %v2791, 32
      %v2802 = vpop.permute.xlu0 %2801
      %v2804 = vmul.f32 %v2799, %v2802
      %2806 = vrot.lane.b32.xlu0 %v2804, 64
      %v2807 = vpop.permute.xlu0 %2806
      %v2809 = vadd.f32 %v2791, %v2807
      %v2810 = vtanh.pop %v2809
      %v2811 = vsub.f32 1.0, %v2799
      %2813 = vrot.lane.b32.xlu0 %v2810, 96
      %v2814 = vpop.permute.xlu0 %2813
      %v2816 = vmul.f32 %v2811, %v2814
      %v2817 = vmul.f32 %v2799, %v2703
      %v2818 = vadd.f32 %v2816, %v2817
      %v2819 = vld [vmem:[%s69] sm:$0xff]
      %v2820 = vld [vmem:[%s69 + $0x8] sm:$0xff]
      %v2821 = vld [vmem:[%s69 + $0x10] sm:$0xff]
      %v2822 = vld [vmem:[%s69 + $0x18] sm:$0xff]
      %v2823 = vld [vmem:[%s71] sm:$0x1]
      %v2825 = vlaneseq
      %v2826 = vshrl.u32 %v2825, 7
      %v2827 = vsub.s32 0, %v2826
      %v2828 = vrot.slane %v2823, %v2827
      %2831 = vrot.lane.b32.xlu0 %v2818, 96
      %v2832 = vpop.permute.xlu0 %2831
      %v2833 = vsel %vm1359, %v2832, 0
      %2835 = vmatprep.subr.mxu0 0.0
      %2836 = vmatpush1.msra.mxu0 0.0
      %2837 = vmatprep.subr.mxu0 0.0
      %2838 = vmatpush1.msra.mxu0 0.0
      %2839 = vmatprep.subr.mxu0 0.0
      %2840 = vmatpush1.msra.mxu0 0.0
      %2841 = vmatprep.subr.mxu0 0.0
      %2842 = vmatpush1.msra.mxu0 0.0
      %2843 = vmatprep.subr.mxu0 0.0
      %2844 = vmatpush1.msra.mxu0 0.0
      %2845 = vmatprep.subr.mxu0 0.0
      %2846 = vmatpush1.msra.mxu0 0.0
      %2847 = vmatprep.subr.mxu0 0.0
      %2848 = vmatpush1.msra.mxu0 0.0
      %2849 = vmatprep.subr.mxu0 0.0
      %2850 = vmatpush1.msra.mxu0 0.0
      %2851 = vmatprep.subr.mxu0 0.0
      %2852 = vmatpush1.msra.mxu0 0.0
      %2853 = vmatprep.subr.mxu0 0.0
      %2854 = vmatpush1.msra.mxu0 0.0
      %2855 = vmatprep.subr.mxu0 0.0
      %2856 = vmatpush1.msra.mxu0 0.0
      %2857 = vmatprep.subr.mxu0 0.0
      %2858 = vmatpush1.msra.mxu0 0.0
      %2859 = vmatprep.subr.mxu0 0.0
      %2860 = vmatpush1.msra.mxu0 %v2822
      %2861 = vmatprep.subr.mxu0 0.0
      %2862 = vmatpush1.msra.mxu0 %v2821
      %2863 = vmatprep.subr.mxu0 0.0
      %2864 = vmatpush1.msra.mxu0 %v2820
      %2865 = vmatprep.subr.mxu0 0.0
      %2866 = vmatpush1.msra.mxu0 %v2819
      %2867 = vmatprep.subr.mxu0 0.0
      %2868 = vmatpush2.msra.mxu0 0.0
      %2869 = vmatprep.subr.mxu0 0.0
      %2870 = vmatpush2.msra.mxu0 0.0
      %2871 = vmatprep.subr.mxu0 0.0
      %2872 = vmatpush2.msra.mxu0 0.0
      %2873 = vmatprep.subr.mxu0 0.0
      %2874 = vmatpush2.msra.mxu0 0.0
      %2875 = vmatprep.subr.mxu0 0.0
      %2876 = vmatpush2.msra.mxu0 0.0
      %2877 = vmatprep.subr.mxu0 0.0
      %2878 = vmatpush2.msra.mxu0 0.0
      %2879 = vmatprep.subr.mxu0 0.0
      %2880 = vmatpush2.msra.mxu0 0.0
      %2881 = vmatprep.subr.mxu0 0.0
      %2882 = vmatpush2.msra.mxu0 0.0
      %2883 = vmatprep.subr.mxu0 0.0
      %2884 = vmatpush2.msra.mxu0 0.0
      %2885 = vmatprep.subr.mxu0 0.0
      %2886 = vmatpush2.msra.mxu0 0.0
      %2887 = vmatprep.subr.mxu0 0.0
      %2888 = vmatpush2.msra.mxu0 0.0
      %2889 = vmatprep.subr.mxu0 0.0
      %2890 = vmatpush2.msra.mxu0 0.0
      %2891 = vmatprep.subr.mxu0 0.0
      %2892 = vmatpush2.msra.mxu0 0.0
      %2893 = vmatprep.subr.mxu0 0.0
      %2894 = vmatpush2.msra.mxu0 0.0
      %2895 = vmatprep.subr.mxu0 0.0
      %2896 = vmatpush2.msra.mxu0 0.0
      %2897 = vmatprep.subr.mxu0 0.0
      %2898 = vmatpush2.msra.mxu0 0.0
      %2899 = vmatprep.mubr.f32.mxu0 0.0
      %2900 = vmatmul.mubr.f32.gmra.mxu0 %v2833
      %v2901 = vpop.f32.mrf.mxu0
      %v2902 = vadd.f32 %v2828, %v2901
      %v2903 = vpop.f32.mrf.mxu0
      %2904 = vdwg.mxu0
      %v2905 = vmax.f32 %v2902, 0.0
      %v2908 = vunpack.c.l.s4 1966171168
      %v2909 = vunpack.c.0.s8 %v2908
      %v2910 = vlaneseq
      %v2911 = vshrl.u32 %v2910, 7
      %v2912 = vsub.s32 %v2909, %v2911
      %v2913 = vrot.slane %v2905, %v2912
      %v2914 = vcombine.high %v2913, %v2913
      %v2916 = vunpack.c.l.s4 1966171168
      %v2917 = vunpack.c.0.s8 %v2916
      %v2918 = vlaneseq
      %v2919 = vshrl.u32 %v2918, 7
      %v2920 = vsub.s32 %v2917, %v2919
      %v2921 = vrot.slane %v2913, %v2920
      %v2923 = vunpack.c.l.s4 1966171168
      %v2924 = vunpack.c.0.s8 %v2923
      %v2925 = vlaneseq
      %v2926 = vshrl.u32 %v2925, 7
      %v2927 = vsub.s32 %v2924, %v2926
      %v2928 = vrot.slane %v2914, %v2927
      %v2929 = vlaneseq
      %v2930 = vshrl.u32 %v2929, 7
      %v2931 = vsub.s32 0, %v2930
      %v2932 = vrot.slane %v2921, %v2931
      %v2933 = vlaneseq
      %v2934 = vshrl.u32 %v2933, 7
      %v2935 = vsub.s32 0, %v2934
      %v2936 = vrot.slane %v2928, %v2935
      %v2939 = vmul.f32 %v2932, %v1344
      %v2940 = vmul.f32 %v2932, %v1345
      %v2941 = vmul.f32 %v2932, %v1346
      %v2942 = vmul.f32 %v2936, %v1347
      %v2943 = vmul.f32 %v2936, %v1348
      %v2944 = vmul.f32 %v2936, %v1349
      %v2945 = vsel %vm1359, %v2939, 0.0
      %2946 = vadd.xlane.f32.xlu0 %v2945
      %v2947 = vpop.xlane.xlu0 %2946
      %v2948 = vsel %vm1359, %v2940, 0.0
      %2949 = vadd.xlane.f32.xlu0 %v2948
      %v2950 = vpop.xlane.xlu0 %2949
      %vm2951 = vcmask 259072
      %v2952 = vsel %vm2951, %v2941, 0.0
      %2953 = vadd.xlane.f32.xlu0 %v2952
      %v2954 = vpop.xlane.xlu0 %2953
      %v2955 = vsel %vm1359, %v2942, 0.0
      %2956 = vadd.xlane.f32.xlu0 %v2955
      %v2957 = vpop.xlane.xlu0 %2956
      %v2958 = vsel %vm1359, %v2943, 0.0
      %2959 = vadd.xlane.f32.xlu0 %v2958
      %v2960 = vpop.xlane.xlu0 %2959
      %v2961 = vsel %vm2951, %v2944, 0.0
      %2962 = vadd.xlane.f32.xlu0 %v2961
      %v2963 = vpop.xlane.xlu0 %2962
      %v2964 = vsub.f32 1.0, %v2327
      %vm2965 = vcmp.ne.f32.partialorder %v2964, 0.0
      %v2972 = vlaneseq
      %v2973 = vshrl.u32 %v2972, 7
      %v2974 = vsub.s32 %v1502, %v2973
      %v2975 = vrot.slane %v2947, %v2974
      %v2976 = vadd.s32 %v1502, 4294967288
      %v2977 = vlaneseq
      %v2978 = vshrl.u32 %v2977, 7
      %v2979 = vsub.s32 %v2976, %v2978
      %v2980 = vrot.slane %v2950, %v2979
      %vm2981 = vcmask 130112
      %v2982 = vsel %vm2981, %v2980, %v2975
      %v2983 = vadd.s32 %v1502, 4294967280
      %v2984 = vlaneseq
      %v2985 = vshrl.u32 %v2984, 7
      %v2986 = vsub.s32 %v2983, %v2985
      %v2987 = vrot.slane %v2954, %v2986
      %vm2988 = vcmask 195712
      %v2989 = vsel %vm2988, %v2987, %v2982
      %v2990 = vlaneseq
      %v2991 = vshrl.u32 %v2990, 7
      %v2992 = vsub.s32 %v1502, %v2991
      %v2993 = vrot.slane %v2957, %v2992
      %v2994 = vlaneseq
      %v2995 = vshrl.u32 %v2994, 7
      %v2996 = vsub.s32 %v2976, %v2995
      %v2997 = vrot.slane %v2960, %v2996
      %v2998 = vsel %vm2981, %v2997, %v2993
      %v2999 = vlaneseq
      %v3000 = vshrl.u32 %v2999, 7
      %v3001 = vsub.s32 %v2983, %v3000
      %v3002 = vrot.slane %v2963, %v3001
      %v3003 = vsel %vm2988, %v3002, %v2998
      %v3004 = vsel %vm1511, %v3003, %v2989
      %v3006 = vsel %vm2965, -99999.0, %v3004
      %vm3007 = vcmask 173056
      %3008 = vst.msk [vmem:[%s1306] sm:$0x3] %vm3007, %v3006
      %v3009 = vsel %vm3007, %v3006, -inf
      %3010 = vmax.xlane.f32.xlu0 %v3009
      %v3011 = vpop.xlane.xlu0 %3010
      %vm3012 = vcmp.eq.f32.partialorder %v3006, %v3011
      %v3013 = vsel %vm3012, %v1502, 22
      %v3014 = vsel %vm3007, %v3013, 2147483647
      %v3015 = vand.u32 %v3014, 65535
      %v3016 = vshra.s32 %v3014, 16
      %v3017 = vcvt.s32.f32 %v3015
      %v3018 = vcvt.s32.f32 %v3016
      %3019 = vmin.xlane.f32.xlu0 %v3018
      %v3020 = vpop.xlane.xlu0 %3019
      %vm3021 = vcmp.eq.f32.partialorder %v3018, %v3020
      %v3022 = vsel %vm3021, %v3017, inf
      %3023 = vmin.xlane.f32.xlu0 %v3022
      %v3024 = vpop.xlane.xlu0 %3023
      %v3025 = vcvt.f32.s32 %v3024
      %v3026 = vcvt.f32.s32 %v3020
      %v3027 = vshll.u32 %v3026, 16
      %v3028 = vadd.s32 %v3027, %v3025
      %vm3029 = vcmp.eq.s32.totalorder %v1502, %v3028
      %v3030 = vsel %vm3029, 1, 0
      %v3031 = vcvt.s32.f32 %v3030
      %v3032 = vlaneseq
      %v3033 = vshrl.u32 %v3032, 7
      %v3034 = vsub.s32 0, %v3033
      %v3035 = vrot.slane %v3031, %v3034
      %3037 = vbcast.lane.b32.xlu0 %v3035, 256
      %v3038 = vpop.permute.xlu0 %3037
      %s3040 = sor.u32 256, 8
      %3041 = vbcast.lane.b32.xlu0 %v3035, %s3040
      %v3042 = vpop.permute.xlu0 %3041
      %s3044 = sor.u32 256, 16
      %3045 = vbcast.lane.b32.xlu0 %v3035, %s3044
      %v3046 = vpop.permute.xlu0 %3045
      %v3047 = vlaneseq
      %v3048 = vshrl.u32 %v3047, 7
      %v3049 = vsub.s32 1, %v3048
      %v3050 = vrot.slane %v3031, %v3049
      %3052 = vbcast.lane.b32.xlu0 %v3050, 256
      %v3053 = vpop.permute.xlu0 %3052
      %s3055 = sor.u32 256, 8
      %3056 = vbcast.lane.b32.xlu0 %v3050, %s3055
      %v3057 = vpop.permute.xlu0 %3056
      %s3059 = sor.u32 256, 16
      %3060 = vbcast.lane.b32.xlu0 %v3050, %s3059
      %v3061 = vpop.permute.xlu0 %3060
      %v3062 = vmul.f32 %v3038, %v1344
      %v3063 = vmul.f32 %v3042, %v1345
      %v3064 = vmul.f32 %v3046, %v1346
      %v3065 = vmul.f32 %v3053, %v1347
      %v3066 = vmul.f32 %v3057, %v1348
      %v3067 = vmul.f32 %v3061, %v1349
      %v3068 = vsel %vm1359, %v3062, 0.0
      %v3069 = vsel %vm1359, %v3063, 0.0
      %v3070 = vadd.f32 %v3068, %v3069
      %v3071 = vsel %vm2951, %v3064, 0.0
      %v3072 = vadd.f32 %v3070, %v3071
      %v3073 = vrot.slane %v3072, 4
      %v3074 = vadd.f32 %v3072, %v3073
      %v3075 = vrot.slane %v3074, 2
      %v3076 = vadd.f32 %v3074, %v3075
      %v3077 = vrot.slane %v3076, 1
      %v3078 = vadd.f32 %v3076, %v3077
      %v3079 = vsel %vm1359, %v3065, 0.0
      %v3080 = vsel %vm1359, %v3066, 0.0
      %v3081 = vadd.f32 %v3079, %v3080
      %v3082 = vsel %vm2951, %v3067, 0.0
      %v3083 = vadd.f32 %v3081, %v3082
      %v3084 = vrot.slane %v3083, 4
      %v3085 = vadd.f32 %v3083, %v3084
      %v3086 = vrot.slane %v3085, 2
      %v3087 = vadd.f32 %v3085, %v3086
      %v3088 = vrot.slane %v3087, 1
      %v3089 = vadd.f32 %v3087, %v3088
      %v3090 = vld [vmem:[%s1284] sm:$0xff]
      %v3091 = vld [vmem:[%s1284 + $0x8] sm:$0xff]
      %v3092 = vld [vmem:[%s1290] sm:$0xff]
      %v3093 = vld [vmem:[%s1290 + $0x8] sm:$0xff]
      %v3094 = vld [vmem:[%s27] sm:$0xff]
      %v3095 = vld [vmem:[%s27 + $0x8] sm:$0xff]
      %v3096 = vld [vmem:[%s27 + $0x10] sm:$0xff]
      %v3097 = vld [vmem:[%s27 + $0x18] sm:$0xff]
      %v3100 = vsel %vm1511, %v3089, %v3078
      %v3101 = vsel %vm1359, %v3100, 0
      %3103 = vmatprep.subr.mxu0 0.0
      %3104 = vmatpush1.msra.mxu0 0.0
      %3105 = vmatprep.subr.mxu0 0.0
      %3106 = vmatpush1.msra.mxu0 0.0
      %3107 = vmatprep.subr.mxu0 0.0
      %3108 = vmatpush1.msra.mxu0 0.0
      %3109 = vmatprep.subr.mxu0 0.0
      %3110 = vmatpush1.msra.mxu0 0.0
      %3111 = vmatprep.subr.mxu0 0.0
      %3112 = vmatpush1.msra.mxu0 0.0
      %3113 = vmatprep.subr.mxu0 0.0
      %3114 = vmatpush1.msra.mxu0 0.0
      %3115 = vmatprep.subr.mxu0 0.0
      %3116 = vmatpush1.msra.mxu0 0.0
      %3117 = vmatprep.subr.mxu0 0.0
      %3118 = vmatpush1.msra.mxu0 0.0
      %3119 = vmatprep.subr.mxu0 0.0
      %3120 = vmatpush1.msra.mxu0 0.0
      %3121 = vmatprep.subr.mxu0 0.0
      %3122 = vmatpush1.msra.mxu0 0.0
      %3123 = vmatprep.subr.mxu0 0.0
      %3124 = vmatpush1.msra.mxu0 0.0
      %3125 = vmatprep.subr.mxu0 0.0
      %3126 = vmatpush1.msra.mxu0 0.0
      %3127 = vmatprep.subr.mxu0 0.0
      %3128 = vmatpush1.msra.mxu0 %v3097
      %3129 = vmatprep.subr.mxu0 0.0
      %3130 = vmatpush1.msra.mxu0 %v3096
      %3131 = vmatprep.subr.mxu0 0.0
      %3132 = vmatpush1.msra.mxu0 %v3095
      %3133 = vmatprep.subr.mxu0 0.0
      %3134 = vmatpush1.msra.mxu0 %v3094
      %3135 = vmatprep.subr.mxu0 0.0
      %3136 = vmatpush2.msra.mxu0 0.0
      %3137 = vmatprep.subr.mxu0 0.0
      %3138 = vmatpush2.msra.mxu0 0.0
      %3139 = vmatprep.subr.mxu0 0.0
      %3140 = vmatpush2.msra.mxu0 0.0
      %3141 = vmatprep.subr.mxu0 0.0
      %3142 = vmatpush2.msra.mxu0 0.0
      %3143 = vmatprep.subr.mxu0 0.0
      %3144 = vmatpush2.msra.mxu0 0.0
      %3145 = vmatprep.subr.mxu0 0.0
      %3146 = vmatpush2.msra.mxu0 0.0
      %3147 = vmatprep.subr.mxu0 0.0
      %3148 = vmatpush2.msra.mxu0 0.0
      %3149 = vmatprep.subr.mxu0 0.0
      %3150 = vmatpush2.msra.mxu0 0.0
      %3151 = vmatprep.subr.mxu0 0.0
      %3152 = vmatpush2.msra.mxu0 0.0
      %3153 = vmatprep.subr.mxu0 0.0
      %3154 = vmatpush2.msra.mxu0 0.0
      %3155 = vmatprep.subr.mxu0 0.0
      %3156 = vmatpush2.msra.mxu0 0.0
      %3157 = vmatprep.subr.mxu0 0.0
      %3158 = vmatpush2.msra.mxu0 0.0
      %3159 = vmatprep.subr.mxu0 0.0
      %3160 = vmatpush2.msra.mxu0 0.0
      %3161 = vmatprep.subr.mxu0 0.0
      %3162 = vmatpush2.msra.mxu0 0.0
      %3163 = vmatprep.subr.mxu0 0.0
      %3164 = vmatpush2.msra.mxu0 0.0
      %3165 = vmatprep.subr.mxu0 0.0
      %3166 = vmatpush2.msra.mxu0 0.0
      %3167 = vmatprep.mubr.f32.mxu0 0.0
      %3168 = vmatmul.mubr.f32.gmra.mxu0 %v3101
      %v3169 = vpop.f32.mrf.mxu0
      %v3170 = vadd.f32 0.0, %v3169
      %v3171 = vpop.f32.mrf.mxu0
      %3172 = vdwg.mxu0
      %v3175 = vunpack.c.l.s4 1966171168
      %v3176 = vunpack.c.0.s8 %v3175
      %v3177 = vlaneseq
      %v3178 = vshrl.u32 %v3177, 7
      %v3179 = vsub.s32 %v3176, %v3178
      %v3180 = vrot.slane %v3170, %v3179
      %v3181 = vcombine.high %v3180, %v3180
      %v3183 = vunpack.c.l.s4 1966171168
      %v3184 = vunpack.c.0.s8 %v3183
      %v3185 = vlaneseq
      %v3186 = vshrl.u32 %v3185, 7
      %v3187 = vsub.s32 %v3184, %v3186
      %v3188 = vrot.slane %v3180, %v3187
      %v3190 = vunpack.c.l.s4 1966171168
      %v3191 = vunpack.c.0.s8 %v3190
      %v3192 = vlaneseq
      %v3193 = vshrl.u32 %v3192, 7
      %v3194 = vsub.s32 %v3191, %v3193
      %v3195 = vrot.slane %v3181, %v3194
      %v3196 = vlaneseq
      %v3197 = vshrl.u32 %v3196, 7
      %v3198 = vsub.s32 0, %v3197
      %v3199 = vrot.slane %v3188, %v3198
      %v3200 = vlaneseq
      %v3201 = vshrl.u32 %v3200, 7
      %v3202 = vsub.s32 0, %v3201
      %v3203 = vrot.slane %v3195, %v3202
      %v3206 = vmul.f32 %v3199, %v3090
      %v3207 = vmul.f32 %v3203, %v3091
      %v3208 = vsel %vm1359, %v3206, 0.0
      %3209 = vadd.xlane.f32.xlu0 %v3208
      %v3210 = vpop.xlane.xlu0 %3209
      %v3211 = vsel %vm1359, %v3207, 0.0
      %3212 = vadd.xlane.f32.xlu0 %v3211
      %v3213 = vpop.xlane.xlu0 %3212
      %v3214 = vadd.f32 %v3210, %v2465
      %v3215 = vadd.f32 %v3213, %v2472
      %3218 = vset.pattern.permute.xlu0 0
      %3219 = vperm.xlu0 %3218, %v3214
      %v3220 = vpop.permute.xlu0 %3219
      %3221 = vset.pattern.permute.xlu0 0
      %3222 = vperm.xlu0 %3221, %v3215
      %v3223 = vpop.permute.xlu0 %3222
      %v3224 = vlaneseq
      %v3225 = vshrl.u32 %v3224, 7
      %v3226 = vsub.s32 %v1502, %v3225
      %v3227 = vrot.slane %v3220, %v3226
      %v3228 = vlaneseq
      %v3229 = vshrl.u32 %v3228, 7
      %v3230 = vsub.s32 %v1502, %v3229
      %v3231 = vrot.slane %v3223, %v3230
      %v3232 = vsel %vm1511, %v3231, %v3227
      %v3234 = vsel %vm1514, %v3232, -inf
      %3235 = vmax.xlane.f32.xlu0 %v3234
      %v3236 = vpop.xlane.xlu0 %3235
      %v3238 = vlaneseq
      %v3239 = vshrl.u32 %v3238, 7
      %v3240 = vsub.s32 0, %v3239
      %v3241 = vrot.slane %v3236, %v3240
      %v3242 = vlaneseq
      %v3243 = vshrl.u32 %v3242, 7
      %v3244 = vsub.s32 1, %v3243
      %v3245 = vrot.slane %v3236, %v3244
      %v3248 = vsub.f32 %v3214, %v3241
      %v3249 = vsub.f32 %v3215, %v3245
      %v3250 = vmul.f32 %v3248, 1.442695
      %v3251 = vpow.pop %v3250
      %v3252 = vmul.f32 %v3249, 1.442695
      %v3253 = vpow.pop %v3252
      %3256 = vset.pattern.permute.xlu0 0
      %3257 = vperm.xlu0 %3256, %v3251
      %v3258 = vpop.permute.xlu0 %3257
      %3259 = vset.pattern.permute.xlu0 0
      %3260 = vperm.xlu0 %3259, %v3253
      %v3261 = vpop.permute.xlu0 %3260
      %v3262 = vlaneseq
      %v3263 = vshrl.u32 %v3262, 7
      %v3264 = vsub.s32 %v1502, %v3263
      %v3265 = vrot.slane %v3258, %v3264
      %v3266 = vlaneseq
      %v3267 = vshrl.u32 %v3266, 7
      %v3268 = vsub.s32 %v1502, %v3267
      %v3269 = vrot.slane %v3261, %v3268
      %v3270 = vsel %vm1511, %v3269, %v3265
      %v3272 = vsel %vm1514, %v3270, 0.0
      %3273 = vadd.xlane.f32.xlu0 %v3272
      %v3274 = vpop.xlane.xlu0 %3273
      %v3275 = vrcp.pop %v3274
      %v3277 = vlaneseq
      %v3278 = vshrl.u32 %v3277, 7
      %v3279 = vsub.s32 0, %v3278
      %v3280 = vrot.slane %v3275, %v3279
      %v3281 = vlaneseq
      %v3282 = vshrl.u32 %v3281, 7
      %v3283 = vsub.s32 1, %v3282
      %v3284 = vrot.slane %v3275, %v3283
      %v3287 = vmul.f32 %v3251, %v3280
      %v3288 = vmul.f32 %v3253, %v3284
      %3290 = vset.pattern.permute.xlu0 0
      %3291 = vperm.xlu0 %3290, %v3287
      %v3292 = vpop.permute.xlu0 %3291
      %3295 = vset.pattern.permute.xlu0 0
      %3296 = vperm.xlu0 %3295, %v3288
      %v3297 = vpop.permute.xlu0 %3296
      %v3299 = vmul.f32 %v3292, %v3092
      %v3300 = vmul.f32 %v3297, %v3093
      %v3301 = vsel %vm1359, %v3299, 0.0
      %v3302 = vrot.slane %v3301, 4
      %v3303 = vadd.f32 %v3301, %v3302
      %v3304 = vrot.slane %v3303, 2
      %v3305 = vadd.f32 %v3303, %v3304
      %v3306 = vrot.slane %v3305, 1
      %v3307 = vadd.f32 %v3305, %v3306
      %v3308 = vsel %vm1359, %v3300, 0.0
      %v3309 = vrot.slane %v3308, 4
      %v3310 = vadd.f32 %v3308, %v3309
      %v3311 = vrot.slane %v3310, 2
      %v3312 = vadd.f32 %v3310, %v3311
      %v3313 = vrot.slane %v3312, 1
      %v3314 = vadd.f32 %v3312, %v3313
      %v3318 = vsel %vm1511, %v3314, %v3307
      %3319 = vrot.lane.b32.xlu0 %v3318, 32
      %v3320 = vpop.permute.xlu0 %3319
      %v3322 = vsel %vm1359, %v3100, %v3320
      %v3323 = vld [vmem:[%s57] sm:$0xff]
      %v3324 = vld [vmem:[%s57 + $0x8] sm:$0xff]
      %v3325 = vld [vmem:[%s57 + $0x10] sm:$0xff]
      %v3326 = vld [vmem:[%s57 + $0x18] sm:$0xff]
      %v3327 = vld [vmem:[%s57 + $0x20] sm:$0xff]
      %v3328 = vld [vmem:[%s57 + $0x28] sm:$0xff]
      %v3329 = vld [vmem:[%s57 + $0x30] sm:$0xff]
      %v3330 = vld [vmem:[%s57 + $0x38] sm:$0xff]
      %v3331 = vld [vmem:[%s59] sm:$0x1]
      %v3333 = vlaneseq
      %v3334 = vshrl.u32 %v3333, 7
      %v3335 = vsub.s32 0, %v3334
      %v3336 = vrot.slane %v3331, %v3335
      %v3339 = vsel %vm1618, %v3322, 0
      %3341 = vmatprep.subr.mxu0 0.0
      %3342 = vmatpush1.msra.mxu0 0.0
      %3343 = vmatprep.subr.mxu0 0.0
      %3344 = vmatpush1.msra.mxu0 0.0
      %3345 = vmatprep.subr.mxu0 0.0
      %3346 = vmatpush1.msra.mxu0 0.0
      %3347 = vmatprep.subr.mxu0 0.0
      %3348 = vmatpush1.msra.mxu0 0.0
      %3349 = vmatprep.subr.mxu0 0.0
      %3350 = vmatpush1.msra.mxu0 0.0
      %3351 = vmatprep.subr.mxu0 0.0
      %3352 = vmatpush1.msra.mxu0 0.0
      %3353 = vmatprep.subr.mxu0 0.0
      %3354 = vmatpush1.msra.mxu0 0.0
      %3355 = vmatprep.subr.mxu0 0.0
      %3356 = vmatpush1.msra.mxu0 0.0
      %3357 = vmatprep.subr.mxu0 0.0
      %3358 = vmatpush1.msra.mxu0 %v3330
      %3359 = vmatprep.subr.mxu0 0.0
      %3360 = vmatpush1.msra.mxu0 %v3329
      %3361 = vmatprep.subr.mxu0 0.0
      %3362 = vmatpush1.msra.mxu0 %v3328
      %3363 = vmatprep.subr.mxu0 0.0
      %3364 = vmatpush1.msra.mxu0 %v3327
      %3365 = vmatprep.subr.mxu0 0.0
      %3366 = vmatpush1.msra.mxu0 %v3326
      %3367 = vmatprep.subr.mxu0 0.0
      %3368 = vmatpush1.msra.mxu0 %v3325
      %3369 = vmatprep.subr.mxu0 0.0
      %3370 = vmatpush1.msra.mxu0 %v3324
      %3371 = vmatprep.subr.mxu0 0.0
      %3372 = vmatpush1.msra.mxu0 %v3323
      %3373 = vmatprep.subr.mxu0 0.0
      %3374 = vmatpush2.msra.mxu0 0.0
      %3375 = vmatprep.subr.mxu0 0.0
      %3376 = vmatpush2.msra.mxu0 0.0
      %3377 = vmatprep.subr.mxu0 0.0
      %3378 = vmatpush2.msra.mxu0 0.0
      %3379 = vmatprep.subr.mxu0 0.0
      %3380 = vmatpush2.msra.mxu0 0.0
      %3381 = vmatprep.subr.mxu0 0.0
      %3382 = vmatpush2.msra.mxu0 0.0
      %3383 = vmatprep.subr.mxu0 0.0
      %3384 = vmatpush2.msra.mxu0 0.0
      %3385 = vmatprep.subr.mxu0 0.0
      %3386 = vmatpush2.msra.mxu0 0.0
      %3387 = vmatprep.subr.mxu0 0.0
      %3388 = vmatpush2.msra.mxu0 0.0
      %3389 = vmatprep.subr.mxu0 0.0
      %3390 = vmatpush2.msra.mxu0 0.0
      %3391 = vmatprep.subr.mxu0 0.0
      %3392 = vmatpush2.msra.mxu0 0.0
      %3393 = vmatprep.subr.mxu0 0.0
      %3394 = vmatpush2.msra.mxu0 0.0
      %3395 = vmatprep.subr.mxu0 0.0
      %3396 = vmatpush2.msra.mxu0 0.0
      %3397 = vmatprep.subr.mxu0 0.0
      %3398 = vmatpush2.msra.mxu0 0.0
      %3399 = vmatprep.subr.mxu0 0.0
      %3400 = vmatpush2.msra.mxu0 0.0
      %3401 = vmatprep.subr.mxu0 0.0
      %3402 = vmatpush2.msra.mxu0 0.0
      %3403 = vmatprep.subr.mxu0 0.0
      %3404 = vmatpush2.msra.mxu0 0.0
      %3405 = vmatprep.mubr.f32.mxu0 0.0
      %3406 = vmatmul.mubr.f32.gmra.mxu0 %v3339
      %v3407 = vpop.f32.mrf.mxu0
      %v3408 = vadd.f32 %v3336, %v3407
      %v3409 = vpop.f32.mrf.mxu0
      %3410 = vdwg.mxu0
      %v3411 = vsel %vm1692, %v3408, 0.0
      %3412 = vadd.xlane.f32.xlu0 %v3411
      %v3413 = vpop.xlane.xlu0 %3412
      %v3414 = vmul.f32 %v3413, %v1696
      %v3415 = vsub.f32 %v3408, %v3414
      %v3416 = vmul.f32 %v3415, %v3415
      %v3417 = vsel %vm1692, %v3416, 0.0
      %3418 = vadd.xlane.f32.xlu0 %v3417
      %v3419 = vpop.xlane.xlu0 %3418
      %v3420 = vmul.f32 %v3419, %v1696
      %v3421 = vadd.f32 %v3420, 1e-05
      %v3422 = vrsqrt.pop %v3421
      %v3423 = vmul.f32 %v3415, %v3422
      %v3424 = vld [vmem:[%s61] sm:$0x1]
      %v3426 = vlaneseq
      %v3427 = vshrl.u32 %v3426, 7
      %v3428 = vsub.s32 0, %v3427
      %v3429 = vrot.slane %v3424, %v3428
      %v3431 = vmul.f32 %v3423, %v3429
      %v3432 = vld [vmem:[%s63] sm:$0x1]
      %v3434 = vlaneseq
      %v3435 = vshrl.u32 %v3434, 7
      %v3436 = vsub.s32 0, %v3435
      %v3437 = vrot.slane %v3432, %v3436
      %v3439 = vadd.f32 %v3431, %v3437
      %v3440 = vmax.f32 %v3439, 0.0
      %v3441 = vsel %vm1359, %v3440, %v2818
      %v3442 = vld [vmem:[%s65] sm:$0xff]
      %v3443 = vld [vmem:[%s65 + $0x8] sm:$0xff]
      %v3444 = vld [vmem:[%s65 + $0x10] sm:$0xff]
      %v3445 = vld [vmem:[%s65 + $0x18] sm:$0xff]
      %v3446 = vld [vmem:[%s65 + $0x20] sm:$0xff]
      %v3447 = vld [vmem:[%s65 + $0x28] sm:$0xff]
      %v3448 = vld [vmem:[%s65 + $0x30] sm:$0xff]
      %v3449 = vld [vmem:[%s65 + $0x38] sm:$0xff]
      %v3450 = vld [vmem:[%s67] sm:$0x1]
      %v3452 = vlaneseq
      %v3453 = vshrl.u32 %v3452, 7
      %v3454 = vsub.s32 0, %v3453
      %v3455 = vrot.slane %v3450, %v3454
      %v3458 = vsel %vm1618, %v3441, 0
      %3460 = vmatprep.subr.mxu0 0.0
      %3461 = vmatpush1.msra.mxu0 0.0
      %3462 = vmatprep.subr.mxu0 0.0
      %3463 = vmatpush1.msra.mxu0 0.0
      %3464 = vmatprep.subr.mxu0 0.0
      %3465 = vmatpush1.msra.mxu0 0.0
      %3466 = vmatprep.subr.mxu0 0.0
      %3467 = vmatpush1.msra.mxu0 0.0
      %3468 = vmatprep.subr.mxu0 0.0
      %3469 = vmatpush1.msra.mxu0 0.0
      %3470 = vmatprep.subr.mxu0 0.0
      %3471 = vmatpush1.msra.mxu0 0.0
      %3472 = vmatprep.subr.mxu0 0.0
      %3473 = vmatpush1.msra.mxu0 0.0
      %3474 = vmatprep.subr.mxu0 0.0
      %3475 = vmatpush1.msra.mxu0 0.0
      %3476 = vmatprep.subr.mxu0 0.0
      %3477 = vmatpush1.msra.mxu0 %v3449
      %3478 = vmatprep.subr.mxu0 0.0
      %3479 = vmatpush1.msra.mxu0 %v3448
      %3480 = vmatprep.subr.mxu0 0.0
      %3481 = vmatpush1.msra.mxu0 %v3447
      %3482 = vmatprep.subr.mxu0 0.0
      %3483 = vmatpush1.msra.mxu0 %v3446
      %3484 = vmatprep.subr.mxu0 0.0
      %3485 = vmatpush1.msra.mxu0 %v3445
      %3486 = vmatprep.subr.mxu0 0.0
      %3487 = vmatpush1.msra.mxu0 %v3444
      %3488 = vmatprep.subr.mxu0 0.0
      %3489 = vmatpush1.msra.mxu0 %v3443
      %3490 = vmatprep.subr.mxu0 0.0
      %3491 = vmatpush1.msra.mxu0 %v3442
      %3492 = vmatprep.subr.mxu0 0.0
      %3493 = vmatpush2.msra.mxu0 0.0
      %3494 = vmatprep.subr.mxu0 0.0
      %3495 = vmatpush2.msra.mxu0 0.0
      %3496 = vmatprep.subr.mxu0 0.0
      %3497 = vmatpush2.msra.mxu0 0.0
      %3498 = vmatprep.subr.mxu0 0.0
      %3499 = vmatpush2.msra.mxu0 0.0
      %3500 = vmatprep.subr.mxu0 0.0
      %3501 = vmatpush2.msra.mxu0 0.0
      %3502 = vmatprep.subr.mxu0 0.0
      %3503 = vmatpush2.msra.mxu0 0.0
      %3504 = vmatprep.subr.mxu0 0.0
      %3505 = vmatpush2.msra.mxu0 0.0
      %3506 = vmatprep.subr.mxu0 0.0
      %3507 = vmatpush2.msra.mxu0 0.0
      %3508 = vmatprep.subr.mxu0 0.0
      %3509 = vmatpush2.msra.mxu0 0.0
      %3510 = vmatprep.subr.mxu0 0.0
      %3511 = vmatpush2.msra.mxu0 0.0
      %3512 = vmatprep.subr.mxu0 0.0
      %3513 = vmatpush2.msra.mxu0 0.0
      %3514 = vmatprep.subr.mxu0 0.0
      %3515 = vmatpush2.msra.mxu0 0.0
      %3516 = vmatprep.subr.mxu0 0.0
      %3517 = vmatpush2.msra.mxu0 0.0
      %3518 = vmatprep.subr.mxu0 0.0
      %3519 = vmatpush2.msra.mxu0 0.0
      %3520 = vmatprep.subr.mxu0 0.0
      %3521 = vmatpush2.msra.mxu0 0.0
      %3522 = vmatprep.subr.mxu0 0.0
      %3523 = vmatpush2.msra.mxu0 0.0
      %3524 = vmatprep.mubr.f32.mxu0 0.0
      %3525 = vmatmul.mubr.f32.gmra.mxu0 %v3458
      %v3526 = vpop.f32.mrf.mxu0
      %v3527 = vadd.f32 %v3455, %v3526
      %v3528 = vpop.f32.mrf.mxu0
      %3529 = vdwg.mxu0
      %v3530 = vxor.u32 %v3527, 2147483648
      %v3531 = vmul.f32 %v3530, 1.442695
      %v3532 = vpow.pop %v3531
      %v3533 = vadd.f32 %v3532, 1.0
      %v3534 = vrcp.pop %v3533
      %v3535 = vmul.f32 1.0, %v3534
      %3537 = vrot.lane.b32.xlu0 %v3527, 32
      %v3538 = vpop.permute.xlu0 %3537
      %v3540 = vmul.f32 %v3535, %v3538
      %3542 = vrot.lane.b32.xlu0 %v3540, 64
      %v3543 = vpop.permute.xlu0 %3542
      %v3545 = vadd.f32 %v3527, %v3543
      %v3546 = vtanh.pop %v3545
      %v3547 = vsub.f32 1.0, %v3535
      %3549 = vrot.lane.b32.xlu0 %v3546, 96
      %v3550 = vpop.permute.xlu0 %3549
      %v3552 = vmul.f32 %v3547, %v3550
      %v3553 = vmul.f32 %v3535, %v2818
      %v3554 = vadd.f32 %v3552, %v3553
      %v3555 = vld [vmem:[%s69] sm:$0xff]
      %v3556 = vld [vmem:[%s69 + $0x8] sm:$0xff]
      %v3557 = vld [vmem:[%s69 + $0x10] sm:$0xff]
      %v3558 = vld [vmem:[%s69 + $0x18] sm:$0xff]
      %v3559 = vld [vmem:[%s71] sm:$0x1]
      %v3561 = vlaneseq
      %v3562 = vshrl.u32 %v3561, 7
      %v3563 = vsub.s32 0, %v3562
      %v3564 = vrot.slane %v3559, %v3563
      %3567 = vrot.lane.b32.xlu0 %v3554, 96
      %v3568 = vpop.permute.xlu0 %3567
      %v3569 = vsel %vm1359, %v3568, 0
      %3571 = vmatprep.subr.mxu0 0.0
      %3572 = vmatpush1.msra.mxu0 0.0
      %3573 = vmatprep.subr.mxu0 0.0
      %3574 = vmatpush1.msra.mxu0 0.0
      %3575 = vmatprep.subr.mxu0 0.0
      %3576 = vmatpush1.msra.mxu0 0.0
      %3577 = vmatprep.subr.mxu0 0.0
      %3578 = vmatpush1.msra.mxu0 0.0
      %3579 = vmatprep.subr.mxu0 0.0
      %3580 = vmatpush1.msra.mxu0 0.0
      %3581 = vmatprep.subr.mxu0 0.0
      %3582 = vmatpush1.msra.mxu0 0.0
      %3583 = vmatprep.subr.mxu0 0.0
      %3584 = vmatpush1.msra.mxu0 0.0
      %3585 = vmatprep.subr.mxu0 0.0
      %3586 = vmatpush1.msra.mxu0 0.0
      %3587 = vmatprep.subr.mxu0 0.0
      %3588 = vmatpush1.msra.mxu0 0.0
      %3589 = vmatprep.subr.mxu0 0.0
      %3590 = vmatpush1.msra.mxu0 0.0
      %3591 = vmatprep.subr.mxu0 0.0
      %3592 = vmatpush1.msra.mxu0 0.0
      %3593 = vmatprep.subr.mxu0 0.0
      %3594 = vmatpush1.msra.mxu0 0.0
      %3595 = vmatprep.subr.mxu0 0.0
      %3596 = vmatpush1.msra.mxu0 %v3558
      %3597 = vmatprep.subr.mxu0 0.0
      %3598 = vmatpush1.msra.mxu0 %v3557
      %3599 = vmatprep.subr.mxu0 0.0
      %3600 = vmatpush1.msra.mxu0 %v3556
      %3601 = vmatprep.subr.mxu0 0.0
      %3602 = vmatpush1.msra.mxu0 %v3555
      %3603 = vmatprep.subr.mxu0 0.0
      %3604 = vmatpush2.msra.mxu0 0.0
      %3605 = vmatprep.subr.mxu0 0.0
      %3606 = vmatpush2.msra.mxu0 0.0
      %3607 = vmatprep.subr.mxu0 0.0
      %3608 = vmatpush2.msra.mxu0 0.0
      %3609 = vmatprep.subr.mxu0 0.0
      %3610 = vmatpush2.msra.mxu0 0.0
      %3611 = vmatprep.subr.mxu0 0.0
      %3612 = vmatpush2.msra.mxu0 0.0
      %3613 = vmatprep.subr.mxu0 0.0
      %3614 = vmatpush2.msra.mxu0 0.0
      %3615 = vmatprep.subr.mxu0 0.0
      %3616 = vmatpush2.msra.mxu0 0.0
      %3617 = vmatprep.subr.mxu0 0.0
      %3618 = vmatpush2.msra.mxu0 0.0
      %3619 = vmatprep.subr.mxu0 0.0
      %3620 = vmatpush2.msra.mxu0 0.0
      %3621 = vmatprep.subr.mxu0 0.0
      %3622 = vmatpush2.msra.mxu0 0.0
      %3623 = vmatprep.subr.mxu0 0.0
      %3624 = vmatpush2.msra.mxu0 0.0
      %3625 = vmatprep.subr.mxu0 0.0
      %3626 = vmatpush2.msra.mxu0 0.0
      %3627 = vmatprep.subr.mxu0 0.0
      %3628 = vmatpush2.msra.mxu0 0.0
      %3629 = vmatprep.subr.mxu0 0.0
      %3630 = vmatpush2.msra.mxu0 0.0
      %3631 = vmatprep.subr.mxu0 0.0
      %3632 = vmatpush2.msra.mxu0 0.0
      %3633 = vmatprep.subr.mxu0 0.0
      %3634 = vmatpush2.msra.mxu0 0.0
      %3635 = vmatprep.mubr.f32.mxu0 0.0
      %3636 = vmatmul.mubr.f32.gmra.mxu0 %v3569
      %v3637 = vpop.f32.mrf.mxu0
      %v3638 = vadd.f32 %v3564, %v3637
      %v3639 = vpop.f32.mrf.mxu0
      %3640 = vdwg.mxu0
      %v3641 = vmax.f32 %v3638, 0.0
      %v3644 = vunpack.c.l.s4 1966171168
      %v3645 = vunpack.c.0.s8 %v3644
      %v3646 = vlaneseq
      %v3647 = vshrl.u32 %v3646, 7
      %v3648 = vsub.s32 %v3645, %v3647
      %v3649 = vrot.slane %v3641, %v3648
      %v3650 = vcombine.high %v3649, %v3649
      %v3652 = vunpack.c.l.s4 1966171168
      %v3653 = vunpack.c.0.s8 %v3652
      %v3654 = vlaneseq
      %v3655 = vshrl.u32 %v3654, 7
      %v3656 = vsub.s32 %v3653, %v3655
      %v3657 = vrot.slane %v3649, %v3656
      %v3659 = vunpack.c.l.s4 1966171168
      %v3660 = vunpack.c.0.s8 %v3659
      %v3661 = vlaneseq
      %v3662 = vshrl.u32 %v3661, 7
      %v3663 = vsub.s32 %v3660, %v3662
      %v3664 = vrot.slane %v3650, %v3663
      %v3665 = vlaneseq
      %v3666 = vshrl.u32 %v3665, 7
      %v3667 = vsub.s32 0, %v3666
      %v3668 = vrot.slane %v3657, %v3667
      %v3669 = vlaneseq
      %v3670 = vshrl.u32 %v3669, 7
      %v3671 = vsub.s32 0, %v3670
      %v3672 = vrot.slane %v3664, %v3671
      %v3675 = vmul.f32 %v3668, %v1344
      %v3676 = vmul.f32 %v3668, %v1345
      %v3677 = vmul.f32 %v3668, %v1346
      %v3678 = vmul.f32 %v3672, %v1347
      %v3679 = vmul.f32 %v3672, %v1348
      %v3680 = vmul.f32 %v3672, %v1349
      %v3681 = vsel %vm1359, %v3675, 0.0
      %3682 = vadd.xlane.f32.xlu0 %v3681
      %v3683 = vpop.xlane.xlu0 %3682
      %v3684 = vsel %vm1359, %v3676, 0.0
      %3685 = vadd.xlane.f32.xlu0 %v3684
      %v3686 = vpop.xlane.xlu0 %3685
      %v3687 = vsel %vm2951, %v3677, 0.0
      %3688 = vadd.xlane.f32.xlu0 %v3687
      %v3689 = vpop.xlane.xlu0 %3688
      %v3690 = vsel %vm1359, %v3678, 0.0
      %3691 = vadd.xlane.f32.xlu0 %v3690
      %v3692 = vpop.xlane.xlu0 %3691
      %v3693 = vsel %vm1359, %v3679, 0.0
      %3694 = vadd.xlane.f32.xlu0 %v3693
      %v3695 = vpop.xlane.xlu0 %3694
      %v3696 = vsel %vm2951, %v3680, 0.0
      %3697 = vadd.xlane.f32.xlu0 %v3696
      %v3698 = vpop.xlane.xlu0 %3697
      %v3699 = vsel %vm2333, 1, 0
      %vm3700 = vcmp.eq.s32.totalorder %v3699, 1
      %v3701 = vsel %vm3700, %v2330, %v2327
      %v3702 = vsub.f32 1.0, %v3701
      %vm3703 = vcmp.ne.f32.partialorder %v3702, 0.0
      %v3710 = vlaneseq
      %v3711 = vshrl.u32 %v3710, 7
      %v3712 = vsub.s32 %v1502, %v3711
      %v3713 = vrot.slane %v3683, %v3712
      %v3714 = vlaneseq
      %v3715 = vshrl.u32 %v3714, 7
      %v3716 = vsub.s32 %v2976, %v3715
      %v3717 = vrot.slane %v3686, %v3716
      %v3718 = vsel %vm2981, %v3717, %v3713
      %v3719 = vlaneseq
      %v3720 = vshrl.u32 %v3719, 7
      %v3721 = vsub.s32 %v2983, %v3720
      %v3722 = vrot.slane %v3689, %v3721
      %v3723 = vsel %vm2988, %v3722, %v3718
      %v3724 = vlaneseq
      %v3725 = vshrl.u32 %v3724, 7
      %v3726 = vsub.s32 %v1502, %v3725
      %v3727 = vrot.slane %v3692, %v3726
      %v3728 = vlaneseq
      %v3729 = vshrl.u32 %v3728, 7
      %v3730 = vsub.s32 %v2976, %v3729
      %v3731 = vrot.slane %v3695, %v3730
      %v3732 = vsel %vm2981, %v3731, %v3727
      %v3733 = vlaneseq
      %v3734 = vshrl.u32 %v3733, 7
      %v3735 = vsub.s32 %v2983, %v3734
      %v3736 = vrot.slane %v3698, %v3735
      %v3737 = vsel %vm2988, %v3736, %v3732
      %v3738 = vsel %vm1511, %v3737, %v3723
      %v3740 = vsel %vm3703, -99999.0, %v3738
      %s3741 = scalar_lea.vmem %s1306, 2
      %3742 = vst.msk [vmem:[%s3741] sm:$0x3] %vm3007, %v3740
      %3744 = vst.msk [vmem:[#allocation3] sm:$0x3] %vm1692, %v3568
      // Predicated region
      $region169: #{forward.1} parent=163 // pred_check
        %p3745 = pneg %p1307
      $region170: #{forward.1} parent=163 // pred_check_branch
        %3747 = sbr.rel (%p3745) target = $region172
      $region171: #{forward.1} parent=163 // pred_region
        %v3749 = vunpack.c.l.s4 1966171168
        %v3750 = vunpack.c.0.s8 %v3749
        %v3751 = vlaneseq
        %v3752 = vshrl.u32 %v3751, 7
        %v3753 = vsub.s32 %v3750, %v3752
        %v3754 = vrot.slane %v3554, %v3753
        %v3755 = vcombine.high %v3754, %v3754
        %v3757 = vunpack.c.l.s4 1966171168
        %v3758 = vunpack.c.0.s8 %v3757
        %v3759 = vlaneseq
        %v3760 = vshrl.u32 %v3759, 7
        %v3761 = vsub.s32 %v3758, %v3760
        %v3762 = vrot.slane %v3754, %v3761
        %v3764 = vunpack.c.l.s4 1966171168
        %v3765 = vunpack.c.0.s8 %v3764
        %v3766 = vlaneseq
        %v3767 = vshrl.u32 %v3766, 7
        %v3768 = vsub.s32 %v3765, %v3767
        %v3769 = vrot.slane %v3755, %v3768
        %v3770 = vlaneseq
        %v3771 = vshrl.u32 %v3770, 7
        %v3772 = vsub.s32 0, %v3771
        %v3773 = vrot.slane %v3762, %v3772
        %v3774 = vlaneseq
        %v3775 = vshrl.u32 %v3774, 7
        %v3776 = vsub.s32 0, %v3775
        %v3777 = vrot.slane %v3769, %v3776
        %3778 = vrot.lane.b32.xlu0 %v3773, 96
        %v3779 = vpop.permute.xlu0 %3778
        %3780 = vrot.lane.b32.xlu0 %v3777, 96
        %v3781 = vpop.permute.xlu0 %3780
        %vm3784 = vcmask 253952
        %3785 = vst.msk [vmem:[#allocation5 + $0x3] sm:$0x1] %vm3784, %v3779
        %3786 = vst.msk [vmem:[#allocation5 + $0x1b] sm:$0x1] %vm3784, %v3781
      $region172: #{forward.1} parent=163 // pred_fallthru
        _
      %p3787 = scmp.eq.s32.totalorder %s92, 1
      // Predicated region
      $region173: #{forward.1} parent=163 // pred_check
        %p3788 = pneg %p3787
      $region174: #{forward.1} parent=163 // pred_check_branch
        %3790 = sbr.rel (%p3788) target = $region176
      $region175: #{forward.1} parent=163 // pred_region
        %v3792 = vunpack.c.l.s4 1966171168
        %v3793 = vunpack.c.0.s8 %v3792
        %v3794 = vlaneseq
        %v3795 = vshrl.u32 %v3794, 7
        %v3796 = vsub.s32 %v3793, %v3795
        %v3797 = vrot.slane %v3554, %v3796
        %v3798 = vcombine.high %v3797, %v3797
        %v3800 = vunpack.c.l.s4 1966171168
        %v3801 = vunpack.c.0.s8 %v3800
        %v3802 = vlaneseq
        %v3803 = vshrl.u32 %v3802, 7
        %v3804 = vsub.s32 %v3801, %v3803
        %v3805 = vrot.slane %v3797, %v3804
        %v3807 = vunpack.c.l.s4 1966171168
        %v3808 = vunpack.c.0.s8 %v3807
        %v3809 = vlaneseq
        %v3810 = vshrl.u32 %v3809, 7
        %v3811 = vsub.s32 %v3808, %v3810
        %v3812 = vrot.slane %v3798, %v3811
        %v3813 = vlaneseq
        %v3814 = vshrl.u32 %v3813, 7
        %v3815 = vsub.s32 0, %v3814
        %v3816 = vrot.slane %v3805, %v3815
        %v3817 = vlaneseq
        %v3818 = vshrl.u32 %v3817, 7
        %v3819 = vsub.s32 0, %v3818
        %v3820 = vrot.slane %v3812, %v3819
        %3821 = vrot.lane.b32.xlu0 %v3816, 96
        %v3822 = vpop.permute.xlu0 %3821
        %3823 = vrot.lane.b32.xlu0 %v3820, 96
        %v3824 = vpop.permute.xlu0 %3823
        %vm3827 = vcmask 253952
        %3828 = vst.msk [vmem:[#allocation5 + $0x4] sm:$0x1] %vm3827, %v3822
        %3829 = vst.msk [vmem:[#allocation5 + $0x1c] sm:$0x1] %vm3827, %v3824
      $region176: #{forward.1} parent=163 // pred_fallthru
        _
      %p3830 = scmp.eq.s32.totalorder %s92, 2
      // Predicated region
      $region177: #{forward.1} parent=163 // pred_check
        %p3831 = pneg %p3830
      $region178: #{forward.1} parent=163 // pred_check_branch
        %3833 = sbr.rel (%p3831) target = $region180
      $region179: #{forward.1} parent=163 // pred_region
        %v3835 = vunpack.c.l.s4 1966171168
        %v3836 = vunpack.c.0.s8 %v3835
        %v3837 = vlaneseq
        %v3838 = vshrl.u32 %v3837, 7
        %v3839 = vsub.s32 %v3836, %v3838
        %v3840 = vrot.slane %v3554, %v3839
        %v3841 = vcombine.high %v3840, %v3840
        %v3843 = vunpack.c.l.s4 1966171168
        %v3844 = vunpack.c.0.s8 %v3843
        %v3845 = vlaneseq
        %v3846 = vshrl.u32 %v3845, 7
        %v3847 = vsub.s32 %v3844, %v3846
        %v3848 = vrot.slane %v3840, %v3847
        %v3850 = vunpack.c.l.s4 1966171168
        %v3851 = vunpack.c.0.s8 %v3850
        %v3852 = vlaneseq
        %v3853 = vshrl.u32 %v3852, 7
        %v3854 = vsub.s32 %v3851, %v3853
        %v3855 = vrot.slane %v3841, %v3854
        %v3856 = vlaneseq
        %v3857 = vshrl.u32 %v3856, 7
        %v3858 = vsub.s32 0, %v3857
        %v3859 = vrot.slane %v3848, %v3858
        %v3860 = vlaneseq
        %v3861 = vshrl.u32 %v3860, 7
        %v3862 = vsub.s32 0, %v3861
        %v3863 = vrot.slane %v3855, %v3862
        %3864 = vrot.lane.b32.xlu0 %v3859, 96
        %v3865 = vpop.permute.xlu0 %3864
        %3866 = vrot.lane.b32.xlu0 %v3863, 96
        %v3867 = vpop.permute.xlu0 %3866
        %vm3870 = vcmask 253952
        %3871 = vst.msk [vmem:[#allocation5 + $0x5] sm:$0x1] %vm3870, %v3865
        %3872 = vst.msk [vmem:[#allocation5 + $0x1d] sm:$0x1] %vm3870, %v3867
      $region180: #{forward.1} parent=163 // pred_fallthru
        _
      %p3873 = scmp.lt.s32.totalorder %s92, 2
      %s3874 = scalar_select %p3873, %s92, 2
      %p3875 = scmp.lt.s32.totalorder %s91, 0
      %s3876 = scalar_select %p3875, %s91, 0
      %s3877 = sadd.s32 %s3876, %s3874
      %s3878 = smul.addr %s3877, 2
      %s3879 = scalar_lea.vmem %s73, %s3878
      %p3880 = scmp.lt.s32.totalorder %s92, 2
      %s3881 = scalar_select %p3880, %s92, 2
      %p3882 = scmp.lt.s32.totalorder %s91, 0
      %s3883 = scalar_select %p3882, %s91, 0
      %s3884 = smul.addr %s3881, 2
      %s3885 = sadd.s32 %s3883, %s3884
      %s3886 = smul.addr %s3885, 2
      %s3887 = scalar_lea.vmem %s75, %s3886
      // Predicated region
      $region181: #{forward.1} parent=163 // pred_check
        %p3888 = pneg %p915
      $region182: #{forward.1} parent=163 // pred_check_branch
        %3890 = sbr.rel (%p3888) target = $region184
      $region183: #{forward.1} parent=163 // pred_region
        _
      $region184: #{forward.1} parent=163 // pred_fallthru
        _
      // Predicated region
      $region185: #{forward.1} parent=163 // pred_check
        %p3891 = pneg %p943
      $region186: #{forward.1} parent=163 // pred_check_branch
        %3893 = sbr.rel (%p3891) target = $region188
      $region187: #{forward.1} parent=163 // pred_region
        _
      $region188: #{forward.1} parent=163 // pred_fallthru
        _
    $region164: #{forward.1} parent=5 // pred_fallthru
      _
    %p3894 = scmp.le.s32.totalorder 2, %s82
    // Predicated region
    $region189: #{forward.1} parent=5 // pred_check
      %p3895 = pneg %p3894
    $region190: #{forward.1} parent=5 // pred_check_branch
      %3897 = sbr.rel (%p3895) target = $region192
    $region191: #{forward.1} parent=5 // pred_region
      %s3898 = ssub.s32 %s82, 2
      // Predicated region
      $region193: #{forward.1} parent=191 // pred_check
        %p3899 = pneg %p921
      $region194: #{forward.1} parent=191 // pred_check_branch
        %3901 = sbr.rel (%p3899) target = $region196
      $region195: #{forward.1} parent=191 // pred_region
        %p3902 = scmp.lt.s32.totalorder %s94, 2
        %s3903 = scalar_select %p3902, %s94, 2
        %p3904 = scmp.lt.s32.totalorder %s93, 0
        %s3905 = scalar_select %p3904, %s93, 0
        %s3906 = sadd.s32 %s3905, %s3903
        %s3907 = smul.addr %s3906, 2
        %s3908 = scalar_lea.vmem %s73, %s3907
      $region196: #{forward.1} parent=191 // pred_fallthru
        _
      // Predicated region
      $region197: #{forward.1} parent=191 // pred_check
        %p3909 = pneg %p949
      $region198: #{forward.1} parent=191 // pred_check_branch
        %3911 = sbr.rel (%p3909) target = $region200
      $region199: #{forward.1} parent=191 // pred_region
        %p3912 = scmp.lt.s32.totalorder %s94, 2
        %s3913 = scalar_select %p3912, %s94, 2
        %p3914 = scmp.lt.s32.totalorder %s93, 0
        %s3915 = scalar_select %p3914, %s93, 0
        %s3916 = smul.addr %s3913, 2
        %s3917 = sadd.s32 %s3915, %s3916
        %s3918 = smul.addr %s3917, 2
        %s3919 = scalar_lea.vmem %s75, %s3918
      $region200: #{forward.1} parent=191 // pred_fallthru
        _
    $region192: #{forward.1} parent=5 // pred_fallthru
      _
  $region6: #{forward.1} parent=0 // loop_footer
    %s86 = sadd.s32 1, %s82
  $region7: #{forward.1} parent=0 // loop_footer_branch
    %81 = sbr.rel target = $region3
  $region8: #{forward.1} parent=0 // loop_exit
    _

</llo_original>
